<compile_context>
chip_gen: v5e
topology: v5e:2x2
jax: 0.10.0
libtpu: 0.0.40
codegen_flags: <defaults>
</compile_context>

<pallas_src>
from functools import partial

import jax
import jax.numpy as jnp
from jax.experimental import pallas as pl
from jax.experimental.pallas import tpu as pltpu

LANE = 128  # TPU lane width; all matmul output dims are padded to this.


# ------------------------------ small helpers ------------------------------ #
def _pad_last(a, target):
    pad = target - a.shape[-1]
    if pad <= 0:
        return a
    widths = [(0, 0)] * (a.ndim - 1) + [(0, pad)]
    return jnp.pad(a, widths)


def _pad_axis(a, axis, target):
    pad = target - a.shape[axis]
    if pad <= 0:
        return a
    widths = [(0, 0)] * a.ndim
    widths[axis] = (0, pad)
    return jnp.pad(a, widths)


# ------------------------------- Pallas kernel ------------------------------ #
def unimodel_kernel(x_ref, wconv_ref, bconv_ref, pool_ref, w1_ref, b1_ref,
                    w2_ref, b2_ref, out_ref, *, NB, H, W, KH, KW):
    """NB batch elements per grid step: conv3x3+ReLU+GAP -> netB -> netC."""
    HW = H * W
    C = x_ref.shape[-1]
    F_pad = wconv_ref.shape[-1]

    xp = x_ref[...]                                   # [NB, H+KH-1, W+KW-1, C]

    # netF conv: 9 shifted windows, each a [NB*HW, C] @ [C, F_pad] MXU matmul,
    # accumulated in f32.  im2col is never materialized in HBM.
    acc = jnp.zeros((NB * HW, F_pad), jnp.float32)
    for di in range(KH):
        for dj in range(KW):
            win = xp[:, di:di + H, dj:dj + W, :].reshape(NB * HW, C)
            acc = acc + jnp.dot(win, wconv_ref[di * KW + dj],
                                preferred_element_type=jnp.float32)
    conv = jnp.maximum(acc + bconv_ref[...], 0.0)     # [NB*HW, F_pad]

    # Global average pool as a block-diagonal pool matmul: rides the MXU
    # instead of an XLU cross-sublane reduction.
    feat = jnp.dot(pool_ref[...], conv,
                   preferred_element_type=jnp.float32)           # [NB, F_pad]

    # netB: Linear with eval-mode BatchNorm folded into (w1, b1).
    z = jnp.dot(feat, w1_ref[...], preferred_element_type=jnp.float32) + b1_ref[...]
    # netC: classifier.
    logits = jnp.dot(z, w2_ref[...], preferred_element_type=jnp.float32) + b2_ref[...]

    out_ref[...] = logits                             # lane-dense [NB, 128] store


# -------------------------------- JAX wrapper ------------------------------- #
@partial(jax.jit, static_argnames=("n_cls", "nb"))
def unimodel_forward(x_nchw, kparams, n_cls, nb=8):
    """Fused UniModel forward.  x_nchw: [N, C, H, W] float32 -> [N, n_cls]."""
    N, C, H, W = x_nchw.shape
    KH = KW = 3
    HW = H * W

    NB = min(nb, N)                       # images per grid step
    n_tiles = pl.cdiv(N, NB)
    Npad = n_tiles * NB

    # 'SAME' spatial pad + NHWC layout + batch pad, done once (~1.3x input
    # bytes, fused by XLA; no 9x im2col tensor ever hits HBM).
    x_nhwc = jnp.transpose(x_nchw, (0, 2, 3, 1)).astype(jnp.float32)
    xp = jnp.pad(x_nhwc, ((0, Npad - N), (1, 1), (1, 1), (0, 0)))

    # Block-diagonal pooling matrix: row i has 1/HW over columns [i*HW,(i+1)*HW).
    rows = jax.lax.broadcasted_iota(jnp.int32, (NB, NB * HW), 0)
    cols = jax.lax.broadcasted_iota(jnp.int32, (NB, NB * HW), 1)
    pool = jnp.where(cols // HW == rows, 1.0 / HW, 0.0).astype(jnp.float32)

    vmem = pl.BlockSpec(memory_space=pltpu.MemorySpace.VMEM)  # resident operands
    kern = partial(unimodel_kernel, NB=NB, H=H, W=W, KH=KH, KW=KW)

    out_padded = pl.pallas_call(
        kern,
        grid=(n_tiles,),
        in_specs=[
            # Per-tile padded input block; double-buffered by Pallas.
            pl.BlockSpec((NB, H + KH - 1, W + KW - 1, C),
                         lambda n: (n, 0, 0, 0)),
            vmem, vmem, vmem, vmem, vmem, vmem, vmem,
        ],
        out_specs=pl.BlockSpec((NB, LANE), lambda n: (n, 0)),
        out_shape=jax.ShapeDtypeStruct((Npad, LANE), jnp.float32),
        compiler_params=pltpu.CompilerParams(
            dimension_semantics=("parallel",),          # megacore split on v7x
            vmem_limit_bytes=32 * 1024 * 1024,          # safe on v5e/v6e/v7x
        ),
    )(xp, kparams["w_conv"], kparams["b_conv"], pool,
      kparams["w1"], kparams["b1"], kparams["w2"], kparams["b2"])

    return out_padded[:N, :n_cls]


# ---------------------------- parameter creation ---------------------------- #
def init_raw_params(key, cin=4, feat=32, bottleneck=32, n_cls=8, k=3):
    """Torch-layout parameters for the synthetic netF/netB/netC."""
    ks = jax.random.split(key, 9)
    p = {}
    p["w_conv_oihw"] = jax.random.normal(ks[0], (feat, cin, k, k), jnp.float32) * 0.1
    p["b_conv"] = jax.random.normal(ks[1], (feat,), jnp.float32) * 0.1
    p["w_blin"] = jax.random.normal(ks[2], (bottleneck, feat), jnp.float32) * 0.1
    p["b_blin"] = jax.random.normal(ks[3], (bottleneck,), jnp.float32) * 0.1
    p["gamma"] = 1.0 + 0.1 * jax.random.normal(ks[4], (bottleneck,), jnp.float32)
    p["beta"] = 0.1 * jax.random.normal(ks[5], (bottleneck,), jnp.float32)
    p["run_mean"] = 0.05 * jax.random.normal(ks[6], (bottleneck,), jnp.float32)
    p["run_var"] = jnp.abs(1.0 + 0.1 * jax.random.normal(ks[7], (bottleneck,),
                                                         jnp.float32))
    p["w_cls"] = jax.random.normal(ks[8], (n_cls, bottleneck), jnp.float32) * 0.1
    p["b_cls"] = jax.random.normal(jax.random.fold_in(key, 99), (n_cls,),
                                   jnp.float32) * 0.1
    p["eps"] = 1e-5
    return p


def prepare_kernel_params(raw):
    """Pad to 128-lane MXU-friendly shapes and fold eval-mode BN into netB."""
    feat, cin, k, _ = raw["w_conv_oihw"].shape
    bottleneck = raw["w_blin"].shape[0]
    n_cls = raw["w_cls"].shape[0]

    # conv: OIHW -> [k*k, Cin, F] with F zero-padded to 128 lanes.
    w_conv = jnp.transpose(raw["w_conv_oihw"], (2, 3, 1, 0))      # [k, k, Cin, F]
    w_conv = _pad_last(w_conv.reshape(k * k, cin, feat), LANE)    # [k*k, Cin, 128]
    b_conv = _pad_last(raw["b_conv"].reshape(1, feat), LANE)      # [1, 128]

    # netB Linear + BN(eval) fold:  (x @ W1.T + b1) * s + t == x @ (W1.T*s) + (b1*s + t)
    s = raw["gamma"] / jnp.sqrt(raw["run_var"] + raw["eps"])
    t = raw["beta"] - raw["run_mean"] * s
    w1 = raw["w_blin"].T * s[None, :]                             # [F, B]
    b1 = raw["b_blin"] * s + t                                    # [B]
    w1 = _pad_last(_pad_axis(w1, 0, LANE), LANE)                  # [128, 128]
    b1 = _pad_last(b1.reshape(1, bottleneck), LANE)               # [1, 128]

    # netC classifier.
    w2 = _pad_last(_pad_axis(raw["w_cls"].T, 0, LANE), LANE)      # [128, 128]
    b2 = _pad_last(raw["b_cls"].reshape(1, n_cls), LANE)          # [1, 128]

    return dict(w_conv=w_conv, b_conv=b_conv, w1=w1, b1=b1, w2=w2, b2=b2), n_cls


# ------------------------------ pure-JAX reference --------------------------- #
def reference_forward(x_nchw, raw):
    N, C, H, W = x_nchw.shape
    F, _, k, _ = raw["w_conv_oihw"].shape
    xpad = jnp.pad(x_nchw, ((0, 0), (0, 0), (1, 1), (1, 1)))
    conv = jnp.zeros((N, F, H, W), jnp.float32)
    for di in range(k):
        for dj in range(k):
            win = xpad[:, :, di:di + H, dj:dj + W]                # [N, C, H, W]
            conv = conv + jnp.einsum("nchw,fc->nfhw", win,
                                     raw["w_conv_oihw"][:, :, di, dj])
    conv = jnp.maximum(conv + raw["b_conv"].reshape(1, -1, 1, 1), 0.0)
    feat = conv.mean(axis=(2, 3))                                 # [N, F]
    z = feat @ raw["w_blin"].T + raw["b_blin"]
    s = raw["gamma"] / jnp.sqrt(raw["run_var"] + raw["eps"])
    t = raw["beta"] - raw["run_mean"] * s
    z = z * s + t
    return z @ raw["w_cls"].T + raw["b_cls"]


if __name__ == "__main__":
    key = jax.random.PRNGKey(0)
    k_x, k_p = jax.random.split(key)

    # Small shapes consistent with the module: NCHW image input.
    x = jax.random.normal(k_x, (2, 4, 16, 16), jnp.float32)       # [N, C, H, W]
    raw = init_raw_params(k_p, cin=4, feat=32, bottleneck=32, n_cls=8)
    kparams, n_cls = prepare_kernel_params(raw)

    out = jax.block_until_ready(unimodel_forward(x, kparams, n_cls))
    ref = reference_forward(x, raw)

    assert out.shape == (2, 8)
    assert jnp.allclose(out, ref, atol=1e-3, rtol=1e-3), \
        float(jnp.max(jnp.abs(out - ref)))
    print("KERNEL_OK")
</pallas_src>

<mosaic_0001>
module attributes {stable_mosaic.version = 11 : i64} {
  func.func @unimodel_kernel(%arg0: i32, %arg1: memref<2x18x18x4xf32, #tpu.memory_space<vmem>>, %arg2: memref<9x4x128xf32, #tpu.memory_space<vmem>>, %arg3: memref<1x128xf32, #tpu.memory_space<vmem>>, %arg4: memref<2x512xf32, #tpu.memory_space<vmem>>, %arg5: memref<128x128xf32, #tpu.memory_space<vmem>>, %arg6: memref<1x128xf32, #tpu.memory_space<vmem>>, %arg7: memref<128x128xf32, #tpu.memory_space<vmem>>, %arg8: memref<1x128xf32, #tpu.memory_space<vmem>>, %arg9: memref<2x128xf32, #tpu.memory_space<vmem>>) attributes {dimension_semantics = [#tpu.dimension_semantics<parallel>], iteration_bounds = array<i64: 1>, scalar_prefetch = 0 : i64, scratch_operands = 0 : i64, tpu.core_type = #tpu.core_type<tc>, window_params = [{transform_indices = @transform_0, window_bounds = array<i64: 2, 18, 18, 4>}, {pipeline_mode = #tpu.pipeline_mode<synchronous>, transform_indices = @transform_1, window_bounds = array<i64: 9, 4, 128>}, {pipeline_mode = #tpu.pipeline_mode<synchronous>, transform_indices = @transform_2, window_bounds = array<i64: 1, 128>}, {pipeline_mode = #tpu.pipeline_mode<synchronous>, transform_indices = @transform_3, window_bounds = array<i64: 2, 512>}, {pipeline_mode = #tpu.pipeline_mode<synchronous>, transform_indices = @transform_4, window_bounds = array<i64: 128, 128>}, {pipeline_mode = #tpu.pipeline_mode<synchronous>, transform_indices = @transform_5, window_bounds = array<i64: 1, 128>}, {pipeline_mode = #tpu.pipeline_mode<synchronous>, transform_indices = @transform_6, window_bounds = array<i64: 128, 128>}, {pipeline_mode = #tpu.pipeline_mode<synchronous>, transform_indices = @transform_7, window_bounds = array<i64: 1, 128>}, {transform_indices = @transform_8, window_bounds = array<i64: 2, 128>}]} {
    %c0 = arith.constant 0 : index
    %c0_0 = arith.constant 0 : index
    %c0_1 = arith.constant 0 : index
    %c0_2 = arith.constant 0 : index
    %0 = vector.load %arg1[%c0, %c0_0, %c0_1, %c0_2] : memref<2x18x18x4xf32, #tpu.memory_space<vmem>>, vector<2x18x18x4xf32>
    %cst = arith.constant 0.000000e+00 : f32
    %1 = vector.broadcast %cst : f32 to vector<512x128xf32>
    %2 = vector.extract_strided_slice %0 {offsets = [0, 0, 0, 0], sizes = [2, 16, 16, 4], strides = [1, 1, 1, 1]} : vector<2x18x18x4xf32> to vector<2x16x16x4xf32>
    %3 = vector.shape_cast %2 : vector<2x16x16x4xf32> to vector<512x4xf32>
    %c0_3 = arith.constant 0 : index
    %c0_4 = arith.constant 0 : index
    %c0_5 = arith.constant 0 : index
    %4 = vector.load %arg2[%c0_3, %c0_4, %c0_5] : memref<9x4x128xf32, #tpu.memory_space<vmem>>, vector<1x4x128xf32>
    %5 = vector.shape_cast %4 : vector<1x4x128xf32> to vector<4x128xf32>
    %cst_6 = arith.constant dense<0.000000e+00> : vector<512x128xf32>
    %6 = tpu.matmul %3, %5, %cst_6 {dimension_numbers = #tpu.dot_dimension_numbers<[1], [0], [0], [1], [0, 0, 1, 1], [], []>} : vector<512x4xf32>, vector<4x128xf32>, vector<512x128xf32> -> vector<512x128xf32>
    %7 = arith.addf %1, %6 : vector<512x128xf32>
    %8 = vector.extract_strided_slice %0 {offsets = [0, 0, 1, 0], sizes = [2, 16, 16, 4], strides = [1, 1, 1, 1]} : vector<2x18x18x4xf32> to vector<2x16x16x4xf32>
    %9 = vector.shape_cast %8 : vector<2x16x16x4xf32> to vector<512x4xf32>
    %c1 = arith.constant 1 : index
    %c0_7 = arith.constant 0 : index
    %c0_8 = arith.constant 0 : index
    %10 = vector.load %arg2[%c1, %c0_7, %c0_8] : memref<9x4x128xf32, #tpu.memory_space<vmem>>, vector<1x4x128xf32>
    %11 = vector.shape_cast %10 : vector<1x4x128xf32> to vector<4x128xf32>
    %cst_9 = arith.constant dense<0.000000e+00> : vector<512x128xf32>
    %12 = tpu.matmul %9, %11, %cst_9 {dimension_numbers = #tpu.dot_dimension_numbers<[1], [0], [0], [1], [0, 0, 1, 1], [], []>} : vector<512x4xf32>, vector<4x128xf32>, vector<512x128xf32> -> vector<512x128xf32>
    %13 = arith.addf %7, %12 : vector<512x128xf32>
    %14 = vector.extract_strided_slice %0 {offsets = [0, 0, 2, 0], sizes = [2, 16, 16, 4], strides = [1, 1, 1, 1]} : vector<2x18x18x4xf32> to vector<2x16x16x4xf32>
    %15 = vector.shape_cast %14 : vector<2x16x16x4xf32> to vector<512x4xf32>
    %c2 = arith.constant 2 : index
    %c0_10 = arith.constant 0 : index
    %c0_11 = arith.constant 0 : index
    %16 = vector.load %arg2[%c2, %c0_10, %c0_11] : memref<9x4x128xf32, #tpu.memory_space<vmem>>, vector<1x4x128xf32>
    %17 = vector.shape_cast %16 : vector<1x4x128xf32> to vector<4x128xf32>
    %cst_12 = arith.constant dense<0.000000e+00> : vector<512x128xf32>
    %18 = tpu.matmul %15, %17, %cst_12 {dimension_numbers = #tpu.dot_dimension_numbers<[1], [0], [0], [1], [0, 0, 1, 1], [], []>} : vector<512x4xf32>, vector<4x128xf32>, vector<512x128xf32> -> vector<512x128xf32>
    %19 = arith.addf %13, %18 : vector<512x128xf32>
    %20 = vector.extract_strided_slice %0 {offsets = [0, 1, 0, 0], sizes = [2, 16, 16, 4], strides = [1, 1, 1, 1]} : vector<2x18x18x4xf32> to vector<2x16x16x4xf32>
    %21 = vector.shape_cast %20 : vector<2x16x16x4xf32> to vector<512x4xf32>
    %c3 = arith.constant 3 : index
    %c0_13 = arith.constant 0 : index
    %c0_14 = arith.constant 0 : index
    %22 = vector.load %arg2[%c3, %c0_13, %c0_14] : memref<9x4x128xf32, #tpu.memory_space<vmem>>, vector<1x4x128xf32>
    %23 = vector.shape_cast %22 : vector<1x4x128xf32> to vector<4x128xf32>
    %cst_15 = arith.constant dense<0.000000e+00> : vector<512x128xf32>
    %24 = tpu.matmul %21, %23, %cst_15 {dimension_numbers = #tpu.dot_dimension_numbers<[1], [0], [0], [1], [0, 0, 1, 1], [], []>} : vector<512x4xf32>, vector<4x128xf32>, vector<512x128xf32> -> vector<512x128xf32>
    %25 = arith.addf %19, %24 : vector<512x128xf32>
    %26 = vector.extract_strided_slice %0 {offsets = [0, 1, 1, 0], sizes = [2, 16, 16, 4], strides = [1, 1, 1, 1]} : vector<2x18x18x4xf32> to vector<2x16x16x4xf32>
    %27 = vector.shape_cast %26 : vector<2x16x16x4xf32> to vector<512x4xf32>
    %c4 = arith.constant 4 : index
    %c0_16 = arith.constant 0 : index
    %c0_17 = arith.constant 0 : index
    %28 = vector.load %arg2[%c4, %c0_16, %c0_17] : memref<9x4x128xf32, #tpu.memory_space<vmem>>, vector<1x4x128xf32>
    %29 = vector.shape_cast %28 : vector<1x4x128xf32> to vector<4x128xf32>
    %cst_18 = arith.constant dense<0.000000e+00> : vector<512x128xf32>
    %30 = tpu.matmul %27, %29, %cst_18 {dimension_numbers = #tpu.dot_dimension_numbers<[1], [0], [0], [1], [0, 0, 1, 1], [], []>} : vector<512x4xf32>, vector<4x128xf32>, vector<512x128xf32> -> vector<512x128xf32>
    %31 = arith.addf %25, %30 : vector<512x128xf32>
    %32 = vector.extract_strided_slice %0 {offsets = [0, 1, 2, 0], sizes = [2, 16, 16, 4], strides = [1, 1, 1, 1]} : vector<2x18x18x4xf32> to vector<2x16x16x4xf32>
    %33 = vector.shape_cast %32 : vector<2x16x16x4xf32> to vector<512x4xf32>
    %c5 = arith.constant 5 : index
    %c0_19 = arith.constant 0 : index
    %c0_20 = arith.constant 0 : index
    %34 = vector.load %arg2[%c5, %c0_19, %c0_20] : memref<9x4x128xf32, #tpu.memory_space<vmem>>, vector<1x4x128xf32>
    %35 = vector.shape_cast %34 : vector<1x4x128xf32> to vector<4x128xf32>
    %cst_21 = arith.constant dense<0.000000e+00> : vector<512x128xf32>
    %36 = tpu.matmul %33, %35, %cst_21 {dimension_numbers = #tpu.dot_dimension_numbers<[1], [0], [0], [1], [0, 0, 1, 1], [], []>} : vector<512x4xf32>, vector<4x128xf32>, vector<512x128xf32> -> vector<512x128xf32>
    %37 = arith.addf %31, %36 : vector<512x128xf32>
    %38 = vector.extract_strided_slice %0 {offsets = [0, 2, 0, 0], sizes = [2, 16, 16, 4], strides = [1, 1, 1, 1]} : vector<2x18x18x4xf32> to vector<2x16x16x4xf32>
    %39 = vector.shape_cast %38 : vector<2x16x16x4xf32> to vector<512x4xf32>
    %c6 = arith.constant 6 : index
    %c0_22 = arith.constant 0 : index
    %c0_23 = arith.constant 0 : index
    %40 = vector.load %arg2[%c6, %c0_22, %c0_23] : memref<9x4x128xf32, #tpu.memory_space<vmem>>, vector<1x4x128xf32>
    %41 = vector.shape_cast %40 : vector<1x4x128xf32> to vector<4x128xf32>
    %cst_24 = arith.constant dense<0.000000e+00> : vector<512x128xf32>
    %42 = tpu.matmul %39, %41, %cst_24 {dimension_numbers = #tpu.dot_dimension_numbers<[1], [0], [0], [1], [0, 0, 1, 1], [], []>} : vector<512x4xf32>, vector<4x128xf32>, vector<512x128xf32> -> vector<512x128xf32>
    %43 = arith.addf %37, %42 : vector<512x128xf32>
    %44 = vector.extract_strided_slice %0 {offsets = [0, 2, 1, 0], sizes = [2, 16, 16, 4], strides = [1, 1, 1, 1]} : vector<2x18x18x4xf32> to vector<2x16x16x4xf32>
    %45 = vector.shape_cast %44 : vector<2x16x16x4xf32> to vector<512x4xf32>
    %c7 = arith.constant 7 : index
    %c0_25 = arith.constant 0 : index
    %c0_26 = arith.constant 0 : index
    %46 = vector.load %arg2[%c7, %c0_25, %c0_26] : memref<9x4x128xf32, #tpu.memory_space<vmem>>, vector<1x4x128xf32>
    %47 = vector.shape_cast %46 : vector<1x4x128xf32> to vector<4x128xf32>
    %cst_27 = arith.constant dense<0.000000e+00> : vector<512x128xf32>
    %48 = tpu.matmul %45, %47, %cst_27 {dimension_numbers = #tpu.dot_dimension_numbers<[1], [0], [0], [1], [0, 0, 1, 1], [], []>} : vector<512x4xf32>, vector<4x128xf32>, vector<512x128xf32> -> vector<512x128xf32>
    %49 = arith.addf %43, %48 : vector<512x128xf32>
    %50 = vector.extract_strided_slice %0 {offsets = [0, 2, 2, 0], sizes = [2, 16, 16, 4], strides = [1, 1, 1, 1]} : vector<2x18x18x4xf32> to vector<2x16x16x4xf32>
    %51 = vector.shape_cast %50 : vector<2x16x16x4xf32> to vector<512x4xf32>
    %c8 = arith.constant 8 : index
    %c0_28 = arith.constant 0 : index
    %c0_29 = arith.constant 0 : index
    %52 = vector.load %arg2[%c8, %c0_28, %c0_29] : memref<9x4x128xf32, #tpu.memory_space<vmem>>, vector<1x4x128xf32>
    %53 = vector.shape_cast %52 : vector<1x4x128xf32> to vector<4x128xf32>
    %cst_30 = arith.constant dense<0.000000e+00> : vector<512x128xf32>
    %54 = tpu.matmul %51, %53, %cst_30 {dimension_numbers = #tpu.dot_dimension_numbers<[1], [0], [0], [1], [0, 0, 1, 1], [], []>} : vector<512x4xf32>, vector<4x128xf32>, vector<512x128xf32> -> vector<512x128xf32>
    %55 = arith.addf %49, %54 : vector<512x128xf32>
    %c0_31 = arith.constant 0 : index
    %c0_32 = arith.constant 0 : index
    %56 = vector.load %arg3[%c0_31, %c0_32] : memref<1x128xf32, #tpu.memory_space<vmem>>, vector<1x128xf32>
    %57 = vector.broadcast %56 : vector<1x128xf32> to vector<512x128xf32>
    %58 = arith.addf %55, %57 : vector<512x128xf32>
    %cst_33 = arith.constant 0.000000e+00 : f32
    %59 = vector.broadcast %cst_33 : f32 to vector<512x128xf32>
    %60 = arith.maximumf %58, %59 : vector<512x128xf32>
    %c0_34 = arith.constant 0 : index
    %c0_35 = arith.constant 0 : index
    %61 = vector.load %arg4[%c0_34, %c0_35] : memref<2x512xf32, #tpu.memory_space<vmem>>, vector<2x512xf32>
    %cst_36 = arith.constant dense<0.000000e+00> : vector<2x128xf32>
    %62 = tpu.matmul %61, %60, %cst_36 {dimension_numbers = #tpu.dot_dimension_numbers<[1], [0], [0], [1], [0, 0, 1, 1], [], []>} : vector<2x512xf32>, vector<512x128xf32>, vector<2x128xf32> -> vector<2x128xf32>
    %c0_37 = arith.constant 0 : index
    %c0_38 = arith.constant 0 : index
    %63 = vector.load %arg5[%c0_37, %c0_38] : memref<128x128xf32, #tpu.memory_space<vmem>>, vector<128x128xf32>
    %cst_39 = arith.constant dense<0.000000e+00> : vector<2x128xf32>
    %64 = tpu.matmul %62, %63, %cst_39 {dimension_numbers = #tpu.dot_dimension_numbers<[1], [0], [0], [1], [0, 0, 1, 1], [], []>} : vector<2x128xf32>, vector<128x128xf32>, vector<2x128xf32> -> vector<2x128xf32>
    %c0_40 = arith.constant 0 : index
    %c0_41 = arith.constant 0 : index
    %65 = vector.load %arg6[%c0_40, %c0_41] : memref<1x128xf32, #tpu.memory_space<vmem>>, vector<1x128xf32>
    %66 = vector.broadcast %65 : vector<1x128xf32> to vector<2x128xf32>
    %67 = arith.addf %64, %66 : vector<2x128xf32>
    %c0_42 = arith.constant 0 : index
    %c0_43 = arith.constant 0 : index
    %68 = vector.load %arg7[%c0_42, %c0_43] : memref<128x128xf32, #tpu.memory_space<vmem>>, vector<128x128xf32>
    %cst_44 = arith.constant dense<0.000000e+00> : vector<2x128xf32>
    %69 = tpu.matmul %67, %68, %cst_44 {dimension_numbers = #tpu.dot_dimension_numbers<[1], [0], [0], [1], [0, 0, 1, 1], [], []>} : vector<2x128xf32>, vector<128x128xf32>, vector<2x128xf32> -> vector<2x128xf32>
    %c0_45 = arith.constant 0 : index
    %c0_46 = arith.constant 0 : index
    %70 = vector.load %arg8[%c0_45, %c0_46] : memref<1x128xf32, #tpu.memory_space<vmem>>, vector<1x128xf32>
    %71 = vector.broadcast %70 : vector<1x128xf32> to vector<2x128xf32>
    %72 = arith.addf %69, %71 : vector<2x128xf32>
    %c0_47 = arith.constant 0 : index
    %c0_48 = arith.constant 0 : index
    %73 = vector.load %arg9[%c0_47, %c0_48] : memref<2x128xf32, #tpu.memory_space<vmem>>, vector<2x128xf32>
    tpu.vector_store %arg9[%c0_47, %c0_48], %72 {strides = array<i32>} : memref<2x128xf32, #tpu.memory_space<vmem>>, vector<2x128xf32>,
    return
  }
  func.func @transform_0(%arg0: i32) -> (i32, i32, i32, i32) {
    %c0_i32 = arith.constant 0 : i32
    %c0_i32_0 = arith.constant 0 : i32
    %c0_i32_1 = arith.constant 0 : i32
    %c0_i32_2 = arith.constant 0 : i32
    return %arg0, %c0_i32, %c0_i32_0, %c0_i32_1 : i32, i32, i32, i32
  }
  func.func @transform_1(%arg0: i32) -> (i32, i32, i32) {
    %c0_i32 = arith.constant 0 : i32
    %c0_i32_0 = arith.constant 0 : i32
    %c0_i32_1 = arith.constant 0 : i32
    %c0_i32_2 = arith.constant 0 : i32
    return %c0_i32, %c0_i32_0, %c0_i32_1 : i32, i32, i32
  }
  func.func @transform_2(%arg0: i32) -> (i32, i32) {
    %c0_i32 = arith.constant 0 : i32
    %c0_i32_0 = arith.constant 0 : i32
    %c0_i32_1 = arith.constant 0 : i32
    return %c0_i32, %c0_i32_0 : i32, i32
  }
  func.func @transform_3(%arg0: i32) -> (i32, i32) {
    %c0_i32 = arith.constant 0 : i32
    %c0_i32_0 = arith.constant 0 : i32
    %c0_i32_1 = arith.constant 0 : i32
    return %c0_i32, %c0_i32_0 : i32, i32
  }
  func.func @transform_4(%arg0: i32) -> (i32, i32) {
    %c0_i32 = arith.constant 0 : i32
    %c0_i32_0 = arith.constant 0 : i32
    %c0_i32_1 = arith.constant 0 : i32
    return %c0_i32, %c0_i32_0 : i32, i32
  }
  func.func @transform_5(%arg0: i32) -> (i32, i32) {
    %c0_i32 = arith.constant 0 : i32
    %c0_i32_0 = arith.constant 0 : i32
    %c0_i32_1 = arith.constant 0 : i32
    return %c0_i32, %c0_i32_0 : i32, i32
  }
  func.func @transform_6(%arg0: i32) -> (i32, i32) {
    %c0_i32 = arith.constant 0 : i32
    %c0_i32_0 = arith.constant 0 : i32
    %c0_i32_1 = arith.constant 0 : i32
    return %c0_i32, %c0_i32_0 : i32, i32
  }
  func.func @transform_7(%arg0: i32) -> (i32, i32) {
    %c0_i32 = arith.constant 0 : i32
    %c0_i32_0 = arith.constant 0 : i32
    %c0_i32_1 = arith.constant 0 : i32
    return %c0_i32, %c0_i32_0 : i32, i32
  }
  func.func @transform_8(%arg0: i32) -> (i32, i32) {
    %c0_i32 = arith.constant 0 : i32
    %c0_i32_0 = arith.constant 0 : i32
    return %arg0, %c0_i32 : i32, i32
  }
}

</mosaic_0001>

<llo_original>
// kernel: unimodel_forward.1
$region0: #{unimodel_forward.1}
  #allocation0 [shape = 'u32[]', space=smem, size = 0x4, offset = 0x4, fixed_abs, tag = 'smem constant byte address 0x4 - core index']
  #allocation1 [shape = 'u32[72,128]{1,0:T(1,128)}', space=vmem, size = 0x9000, scoped, tag = 'internal scratch']
  %s0 = inlined_call_operand.vmem [shape: f32[2,18,18,4], index: 0, kind: input, shape index: {}]
  %s1 = inlined_call_operand.vmem [shape: f32[9,4,128], index: 1, kind: input, shape index: {}]
  %s2 = inlined_call_operand.vmem [shape: f32[1,128], index: 2, kind: input, shape index: {}]
  %s3 = inlined_call_operand.vmem [shape: f32[2,512], index: 3, kind: input, shape index: {}]
  %s4 = inlined_call_operand.vmem [shape: f32[128,128], index: 4, kind: input, shape index: {}]
  %s5 = inlined_call_operand.vmem [shape: f32[1,128], index: 5, kind: input, shape index: {}]
  %s6 = inlined_call_operand.vmem [shape: f32[128,128], index: 6, kind: input, shape index: {}]
  %s7 = inlined_call_operand.vmem [shape: f32[1,128], index: 7, kind: input, shape index: {}]
  %s8 = inlined_call_operand.hbm [shape: f32[2,128], index: 8, kind: output, shape index: {}]
  %s9 = sld [smem:[#allocation0]]
  $region42: #{unimodel_forward.1} parent=0
    _
  %s11 = ssub.s32 1, %s9
  %s12 = scalar_select 0, %s11, %s9
  $region1: #{unimodel_forward.1} parent=0
    #allocation2 [shape = 'u8[1024]{0}', space=vmem, size = 0x400, scoped, tag = 'output window, operand 0, single buffered']
    #allocation3 [shape = 's32[1]{0}', space=sflag, size = 0x4, scoped, tag = 'scoped memory for unimodel_forward.1']
    %13 = vsyncpa [#allocation3], 0
    // Predicated region
    $region2: #{unimodel_forward.1} parent=1 // pred_check
      _
    $region3: #{unimodel_forward.1} parent=1 // pred_check_branch
      %15 = sbr.rel (0) target = $region5
    $region4: #{unimodel_forward.1} parent=1 // pred_region
      _
    $region5: #{unimodel_forward.1} parent=1 // pred_fallthru
      _
    // Predicated region
    $region6: #{unimodel_forward.1} parent=1 // pred_check
      _
    $region7: #{unimodel_forward.1} parent=1 // pred_check_branch
      %17 = sbr.rel (0) target = $region9
    $region8: #{unimodel_forward.1} parent=1 // pred_region
      _
    $region9: #{unimodel_forward.1} parent=1 // pred_fallthru
      _
    // Predicated region
    $region10: #{unimodel_forward.1} parent=1 // pred_check
      _
    $region11: #{unimodel_forward.1} parent=1 // pred_check_branch
      %19 = sbr.rel (0) target = $region13
    $region12: #{unimodel_forward.1} parent=1 // pred_region
      _
    $region13: #{unimodel_forward.1} parent=1 // pred_fallthru
      _
    // Predicated region
    $region14: #{unimodel_forward.1} parent=1 // pred_check
      _
    $region15: #{unimodel_forward.1} parent=1 // pred_check_branch
      %21 = sbr.rel (0) target = $region17
    $region16: #{unimodel_forward.1} parent=1 // pred_region
      _
    $region17: #{unimodel_forward.1} parent=1 // pred_fallthru
      _
    // Predicated region
    $region18: #{unimodel_forward.1} parent=1 // pred_check
      _
    $region19: #{unimodel_forward.1} parent=1 // pred_check_branch
      %23 = sbr.rel (0) target = $region21
    $region20: #{unimodel_forward.1} parent=1 // pred_region
      _
    $region21: #{unimodel_forward.1} parent=1 // pred_fallthru
      _
    // Predicated region
    $region22: #{unimodel_forward.1} parent=1 // pred_check
      _
    $region23: #{unimodel_forward.1} parent=1 // pred_check_branch
      %25 = sbr.rel (0) target = $region25
    $region24: #{unimodel_forward.1} parent=1 // pred_region
      _
    $region25: #{unimodel_forward.1} parent=1 // pred_fallthru
      _
    // Predicated region
    $region26: #{unimodel_forward.1} parent=1 // pred_check
      _
    $region27: #{unimodel_forward.1} parent=1 // pred_check_branch
      %27 = sbr.rel (0) target = $region29
    $region28: #{unimodel_forward.1} parent=1 // pred_region
      _
    $region29: #{unimodel_forward.1} parent=1 // pred_fallthru
      _
    // Predicated region
    $region30: #{unimodel_forward.1} parent=1 // pred_check
      _
    $region31: #{unimodel_forward.1} parent=1 // pred_check_branch
      %29 = sbr.rel (0) target = $region33
    $region32: #{unimodel_forward.1} parent=1 // pred_region
      _
    $region33: #{unimodel_forward.1} parent=1 // pred_fallthru
      _
    %v30 = vld [vmem:[%s0] sm:$0xff]
    %v31 = vld [vmem:[%s0 + $0x8] sm:$0xff]
    %v32 = vld [vmem:[%s0 + $0x10] sm:$0x3]
    %v33 = vld [vmem:[%s0 + $0x18] sm:$0xff]
    %v34 = vld [vmem:[%s0 + $0x20] sm:$0xff]
    %v35 = vld [vmem:[%s0 + $0x28] sm:$0x3]
    %v36 = vld [vmem:[%s0 + $0x30] sm:$0xff]
    %v37 = vld [vmem:[%s0 + $0x38] sm:$0xff]
    %v38 = vld [vmem:[%s0 + $0x40] sm:$0x3]
    %v39 = vld [vmem:[%s0 + $0x48] sm:$0xff]
    %v40 = vld [vmem:[%s0 + $0x50] sm:$0xff]
    %v41 = vld [vmem:[%s0 + $0x58] sm:$0x3]
    %v42 = vld [vmem:[%s0 + $0x60] sm:$0xff]
    %v43 = vld [vmem:[%s0 + $0x68] sm:$0xff]
    %v44 = vld [vmem:[%s0 + $0x70] sm:$0x3]
    %v45 = vld [vmem:[%s0 + $0x78] sm:$0xff]
    %v46 = vld [vmem:[%s0 + $0x80] sm:$0xff]
    %v47 = vld [vmem:[%s0 + $0x88] sm:$0x3]
    %v48 = vld [vmem:[%s0 + $0x90] sm:$0xff]
    %v49 = vld [vmem:[%s0 + $0x98] sm:$0xff]
    %v50 = vld [vmem:[%s0 + $0xa0] sm:$0x3]
    %v51 = vld [vmem:[%s0 + $0xa8] sm:$0xff]
    %v52 = vld [vmem:[%s0 + $0xb0] sm:$0xff]
    %v53 = vld [vmem:[%s0 + $0xb8] sm:$0x3]
    %v54 = vld [vmem:[%s0 + $0xc0] sm:$0xff]
    %v55 = vld [vmem:[%s0 + $0xc8] sm:$0xff]
    %v56 = vld [vmem:[%s0 + $0xd0] sm:$0x3]
    %v57 = vld [vmem:[%s0 + $0xd8] sm:$0xff]
    %v58 = vld [vmem:[%s0 + $0xe0] sm:$0xff]
    %v59 = vld [vmem:[%s0 + $0xe8] sm:$0x3]
    %v60 = vld [vmem:[%s0 + $0xf0] sm:$0xff]
    %v61 = vld [vmem:[%s0 + $0xf8] sm:$0xff]
    %v62 = vld [vmem:[%s0 + $0x100] sm:$0x3]
    %v63 = vld [vmem:[%s0 + $0x108] sm:$0xff]
    %v64 = vld [vmem:[%s0 + $0x110] sm:$0xff]
    %v65 = vld [vmem:[%s0 + $0x118] sm:$0x3]
    %v66 = vld [vmem:[%s0 + $0x120] sm:$0xff]
    %v67 = vld [vmem:[%s0 + $0x128] sm:$0xff]
    %v68 = vld [vmem:[%s0 + $0x130] sm:$0x3]
    %v69 = vld [vmem:[%s0 + $0x138] sm:$0xff]
    %v70 = vld [vmem:[%s0 + $0x140] sm:$0xff]
    %v71 = vld [vmem:[%s0 + $0x148] sm:$0x3]
    %v72 = vld [vmem:[%s0 + $0x150] sm:$0xff]
    %v73 = vld [vmem:[%s0 + $0x158] sm:$0xff]
    %v74 = vld [vmem:[%s0 + $0x160] sm:$0x3]
    %v75 = vld [vmem:[%s0 + $0x168] sm:$0xff]
    %v76 = vld [vmem:[%s0 + $0x170] sm:$0xff]
    %v77 = vld [vmem:[%s0 + $0x178] sm:$0x3]
    %v78 = vld [vmem:[%s0 + $0x180] sm:$0xff]
    %v79 = vld [vmem:[%s0 + $0x188] sm:$0xff]
    %v80 = vld [vmem:[%s0 + $0x190] sm:$0x3]
    %v81 = vld [vmem:[%s0 + $0x198] sm:$0xff]
    %v82 = vld [vmem:[%s0 + $0x1a0] sm:$0xff]
    %v83 = vld [vmem:[%s0 + $0x1a8] sm:$0x3]
    %v84 = vld [vmem:[%s0 + $0x1b0] sm:$0xff]
    %v85 = vld [vmem:[%s0 + $0x1b8] sm:$0xff]
    %v86 = vld [vmem:[%s0 + $0x1c0] sm:$0x3]
    %v87 = vld [vmem:[%s0 + $0x1c8] sm:$0xff]
    %v88 = vld [vmem:[%s0 + $0x1d0] sm:$0xff]
    %v89 = vld [vmem:[%s0 + $0x1d8] sm:$0x3]
    %v90 = vld [vmem:[%s0 + $0x1e0] sm:$0xff]
    %v91 = vld [vmem:[%s0 + $0x1e8] sm:$0xff]
    %v92 = vld [vmem:[%s0 + $0x1f0] sm:$0x3]
    %v93 = vld [vmem:[%s0 + $0x1f8] sm:$0xff]
    %v94 = vld [vmem:[%s0 + $0x200] sm:$0xff]
    %v95 = vld [vmem:[%s0 + $0x208] sm:$0x3]
    %v96 = vld [vmem:[%s0 + $0x210] sm:$0xff]
    %v97 = vld [vmem:[%s0 + $0x218] sm:$0xff]
    %v98 = vld [vmem:[%s0 + $0x220] sm:$0x3]
    %v99 = vld [vmem:[%s0 + $0x228] sm:$0xff]
    %v100 = vld [vmem:[%s0 + $0x230] sm:$0xff]
    %v101 = vld [vmem:[%s0 + $0x238] sm:$0x3]
    %v102 = vld [vmem:[%s0 + $0x240] sm:$0xff]
    %v103 = vld [vmem:[%s0 + $0x248] sm:$0xff]
    %v104 = vld [vmem:[%s0 + $0x250] sm:$0x3]
    %v105 = vld [vmem:[%s0 + $0x258] sm:$0xff]
    %v106 = vld [vmem:[%s0 + $0x260] sm:$0xff]
    %v107 = vld [vmem:[%s0 + $0x268] sm:$0x3]
    %v108 = vld [vmem:[%s0 + $0x270] sm:$0xff]
    %v109 = vld [vmem:[%s0 + $0x278] sm:$0xff]
    %v110 = vld [vmem:[%s0 + $0x280] sm:$0x3]
    %v111 = vld [vmem:[%s0 + $0x288] sm:$0xff]
    %v112 = vld [vmem:[%s0 + $0x290] sm:$0xff]
    %v113 = vld [vmem:[%s0 + $0x298] sm:$0x3]
    %v114 = vld [vmem:[%s0 + $0x2a0] sm:$0xff]
    %v115 = vld [vmem:[%s0 + $0x2a8] sm:$0xff]
    %v116 = vld [vmem:[%s0 + $0x2b0] sm:$0x3]
    %v117 = vld [vmem:[%s0 + $0x2b8] sm:$0xff]
    %v118 = vld [vmem:[%s0 + $0x2c0] sm:$0xff]
    %v119 = vld [vmem:[%s0 + $0x2c8] sm:$0x3]
    %v120 = vld [vmem:[%s0 + $0x2d0] sm:$0xff]
    %v121 = vld [vmem:[%s0 + $0x2d8] sm:$0xff]
    %v122 = vld [vmem:[%s0 + $0x2e0] sm:$0x3]
    %v123 = vld [vmem:[%s0 + $0x2e8] sm:$0xff]
    %v124 = vld [vmem:[%s0 + $0x2f0] sm:$0xff]
    %v125 = vld [vmem:[%s0 + $0x2f8] sm:$0x3]
    %v126 = vld [vmem:[%s0 + $0x300] sm:$0xff]
    %v127 = vld [vmem:[%s0 + $0x308] sm:$0xff]
    %v128 = vld [vmem:[%s0 + $0x310] sm:$0x3]
    %v129 = vld [vmem:[%s0 + $0x318] sm:$0xff]
    %v130 = vld [vmem:[%s0 + $0x320] sm:$0xff]
    %v131 = vld [vmem:[%s0 + $0x328] sm:$0x3]
    %v132 = vld [vmem:[%s0 + $0x330] sm:$0xff]
    %v133 = vld [vmem:[%s0 + $0x338] sm:$0xff]
    %v134 = vld [vmem:[%s0 + $0x340] sm:$0x3]
    %v135 = vld [vmem:[%s0 + $0x348] sm:$0xff]
    %v136 = vld [vmem:[%s0 + $0x350] sm:$0xff]
    %v137 = vld [vmem:[%s0 + $0x358] sm:$0x3]
    %v138 = vld [vmem:[%s1] sm:$0xf]
    %vm235 = vcmask 1046528
    %v236 = vrot.slane %v30, 1
    %v237 = vrot.slane %v31, 1
    %v238 = vsel %vm235, %v236, %v237
    %v239 = vrot.slane %v32, 1
    %v240 = vsel %vm235, %v237, %v239
    %v241 = vrot.slane %v33, 1
    %v242 = vrot.slane %v34, 1
    %v243 = vsel %vm235, %v241, %v242
    %v244 = vrot.slane %v35, 1
    %v245 = vsel %vm235, %v242, %v244
    %v246 = vrot.slane %v36, 1
    %v247 = vrot.slane %v37, 1
    %v248 = vsel %vm235, %v246, %v247
    %v249 = vrot.slane %v38, 1
    %v250 = vsel %vm235, %v247, %v249
    %v251 = vrot.slane %v39, 1
    %v252 = vrot.slane %v40, 1
    %v253 = vsel %vm235, %v251, %v252
    %v254 = vrot.slane %v41, 1
    %v255 = vsel %vm235, %v252, %v254
    %v256 = vrot.slane %v42, 1
    %v257 = vrot.slane %v43, 1
    %v258 = vsel %vm235, %v256, %v257
    %v259 = vrot.slane %v44, 1
    %v260 = vsel %vm235, %v257, %v259
    %v261 = vrot.slane %v45, 1
    %v262 = vrot.slane %v46, 1
    %v263 = vsel %vm235, %v261, %v262
    %v264 = vrot.slane %v47, 1
    %v265 = vsel %vm235, %v262, %v264
    %v266 = vrot.slane %v48, 1
    %v267 = vrot.slane %v49, 1
    %v268 = vsel %vm235, %v266, %v267
    %v269 = vrot.slane %v50, 1
    %v270 = vsel %vm235, %v267, %v269
    %v271 = vrot.slane %v51, 1
    %v272 = vrot.slane %v52, 1
    %v273 = vsel %vm235, %v271, %v272
    %v274 = vrot.slane %v53, 1
    %v275 = vsel %vm235, %v272, %v274
    %v276 = vrot.slane %v54, 1
    %v277 = vrot.slane %v55, 1
    %v278 = vsel %vm235, %v276, %v277
    %v279 = vrot.slane %v56, 1
    %v280 = vsel %vm235, %v277, %v279
    %v281 = vrot.slane %v57, 1
    %v282 = vrot.slane %v58, 1
    %v283 = vsel %vm235, %v281, %v282
    %v284 = vrot.slane %v59, 1
    %v285 = vsel %vm235, %v282, %v284
    %v286 = vrot.slane %v60, 1
    %v287 = vrot.slane %v61, 1
    %v288 = vsel %vm235, %v286, %v287
    %v289 = vrot.slane %v62, 1
    %v290 = vsel %vm235, %v287, %v289
    %v291 = vrot.slane %v63, 1
    %v292 = vrot.slane %v64, 1
    %v293 = vsel %vm235, %v291, %v292
    %v294 = vrot.slane %v65, 1
    %v295 = vsel %vm235, %v292, %v294
    %v296 = vrot.slane %v66, 1
    %v297 = vrot.slane %v67, 1
    %v298 = vsel %vm235, %v296, %v297
    %v299 = vrot.slane %v68, 1
    %v300 = vsel %vm235, %v297, %v299
    %v301 = vrot.slane %v69, 1
    %v302 = vrot.slane %v70, 1
    %v303 = vsel %vm235, %v301, %v302
    %v304 = vrot.slane %v71, 1
    %v305 = vsel %vm235, %v302, %v304
    %v306 = vrot.slane %v72, 1
    %v307 = vrot.slane %v73, 1
    %v308 = vsel %vm235, %v306, %v307
    %v309 = vrot.slane %v74, 1
    %v310 = vsel %vm235, %v307, %v309
    %v311 = vrot.slane %v75, 1
    %v312 = vrot.slane %v76, 1
    %v313 = vsel %vm235, %v311, %v312
    %v314 = vrot.slane %v77, 1
    %v315 = vsel %vm235, %v312, %v314
    %v316 = vrot.slane %v84, 1
    %v317 = vrot.slane %v85, 1
    %v318 = vsel %vm235, %v316, %v317
    %v319 = vrot.slane %v86, 1
    %v320 = vsel %vm235, %v317, %v319
    %v321 = vrot.slane %v87, 1
    %v322 = vrot.slane %v88, 1
    %v323 = vsel %vm235, %v321, %v322
    %v324 = vrot.slane %v89, 1
    %v325 = vsel %vm235, %v322, %v324
    %v326 = vrot.slane %v90, 1
    %v327 = vrot.slane %v91, 1
    %v328 = vsel %vm235, %v326, %v327
    %v329 = vrot.slane %v92, 1
    %v330 = vsel %vm235, %v327, %v329
    %v331 = vrot.slane %v93, 1
    %v332 = vrot.slane %v94, 1
    %v333 = vsel %vm235, %v331, %v332
    %v334 = vrot.slane %v95, 1
    %v335 = vsel %vm235, %v332, %v334
    %v336 = vrot.slane %v96, 1
    %v337 = vrot.slane %v97, 1
    %v338 = vsel %vm235, %v336, %v337
    %v339 = vrot.slane %v98, 1
    %v340 = vsel %vm235, %v337, %v339
    %v341 = vrot.slane %v99, 1
    %v342 = vrot.slane %v100, 1
    %v343 = vsel %vm235, %v341, %v342
    %v344 = vrot.slane %v101, 1
    %v345 = vsel %vm235, %v342, %v344
    %v346 = vrot.slane %v102, 1
    %v347 = vrot.slane %v103, 1
    %v348 = vsel %vm235, %v346, %v347
    %v349 = vrot.slane %v104, 1
    %v350 = vsel %vm235, %v347, %v349
    %v351 = vrot.slane %v105, 1
    %v352 = vrot.slane %v106, 1
    %v353 = vsel %vm235, %v351, %v352
    %v354 = vrot.slane %v107, 1
    %v355 = vsel %vm235, %v352, %v354
    %v356 = vrot.slane %v108, 1
    %v357 = vrot.slane %v109, 1
    %v358 = vsel %vm235, %v356, %v357
    %v359 = vrot.slane %v110, 1
    %v360 = vsel %vm235, %v357, %v359
    %v361 = vrot.slane %v111, 1
    %v362 = vrot.slane %v112, 1
    %v363 = vsel %vm235, %v361, %v362
    %v364 = vrot.slane %v113, 1
    %v365 = vsel %vm235, %v362, %v364
    %v366 = vrot.slane %v114, 1
    %v367 = vrot.slane %v115, 1
    %v368 = vsel %vm235, %v366, %v367
    %v369 = vrot.slane %v116, 1
    %v370 = vsel %vm235, %v367, %v369
    %v371 = vrot.slane %v117, 1
    %v372 = vrot.slane %v118, 1
    %v373 = vsel %vm235, %v371, %v372
    %v374 = vrot.slane %v119, 1
    %v375 = vsel %vm235, %v372, %v374
    %v376 = vrot.slane %v120, 1
    %v377 = vrot.slane %v121, 1
    %v378 = vsel %vm235, %v376, %v377
    %v379 = vrot.slane %v122, 1
    %v380 = vsel %vm235, %v377, %v379
    %v381 = vrot.slane %v123, 1
    %v382 = vrot.slane %v124, 1
    %v383 = vsel %vm235, %v381, %v382
    %v384 = vrot.slane %v125, 1
    %v385 = vsel %vm235, %v382, %v384
    %v386 = vrot.slane %v126, 1
    %v387 = vrot.slane %v127, 1
    %v388 = vsel %vm235, %v386, %v387
    %v389 = vrot.slane %v128, 1
    %v390 = vsel %vm235, %v387, %v389
    %v391 = vrot.slane %v129, 1
    %v392 = vrot.slane %v130, 1
    %v393 = vsel %vm235, %v391, %v392
    %v394 = vrot.slane %v131, 1
    %v395 = vsel %vm235, %v392, %v394
    %s396 = scalar_lea.vmem %s1, 4
    %v397 = vld [vmem:[%s396] sm:$0xf]
    %vm398 = vcmask 31744
    %v399 = vsel %vm398, %v238, 0
    %v401 = vsel %vm398, %v240, 0
    %v403 = vsel %vm398, %v243, 0
    %v405 = vsel %vm398, %v245, 0
    %v407 = vsel %vm398, %v248, 0
    %v409 = vsel %vm398, %v250, 0
    %v411 = vsel %vm398, %v253, 0
    %v413 = vsel %vm398, %v255, 0
    %v415 = vsel %vm398, %v258, 0
    %v417 = vsel %vm398, %v260, 0
    %v419 = vsel %vm398, %v263, 0
    %v421 = vsel %vm398, %v265, 0
    %v423 = vsel %vm398, %v268, 0
    %v425 = vsel %vm398, %v270, 0
    %v427 = vsel %vm398, %v273, 0
    %v429 = vsel %vm398, %v275, 0
    %v431 = vsel %vm398, %v278, 0
    %v433 = vsel %vm398, %v280, 0
    %v435 = vsel %vm398, %v283, 0
    %v437 = vsel %vm398, %v285, 0
    %v439 = vsel %vm398, %v288, 0
    %v441 = vsel %vm398, %v290, 0
    %v443 = vsel %vm398, %v293, 0
    %v445 = vsel %vm398, %v295, 0
    %v447 = vsel %vm398, %v298, 0
    %v449 = vsel %vm398, %v300, 0
    %v451 = vsel %vm398, %v303, 0
    %v453 = vsel %vm398, %v305, 0
    %v455 = vsel %vm398, %v308, 0
    %v457 = vsel %vm398, %v310, 0
    %v459 = vsel %vm398, %v313, 0
    %v461 = vsel %vm398, %v315, 0
    %v463 = vsel %vm398, %v318, 0
    %v465 = vsel %vm398, %v320, 0
    %v467 = vsel %vm398, %v323, 0
    %v469 = vsel %vm398, %v325, 0
    %v471 = vsel %vm398, %v328, 0
    %v473 = vsel %vm398, %v330, 0
    %v475 = vsel %vm398, %v333, 0
    %v477 = vsel %vm398, %v335, 0
    %v479 = vsel %vm398, %v338, 0
    %v481 = vsel %vm398, %v340, 0
    %v483 = vsel %vm398, %v343, 0
    %v485 = vsel %vm398, %v345, 0
    %v487 = vsel %vm398, %v348, 0
    %v489 = vsel %vm398, %v350, 0
    %v491 = vsel %vm398, %v353, 0
    %v493 = vsel %vm398, %v355, 0
    %v495 = vsel %vm398, %v358, 0
    %v497 = vsel %vm398, %v360, 0
    %v499 = vsel %vm398, %v363, 0
    %v501 = vsel %vm398, %v365, 0
    %v503 = vsel %vm398, %v368, 0
    %v505 = vsel %vm398, %v370, 0
    %v507 = vsel %vm398, %v373, 0
    %v509 = vsel %vm398, %v375, 0
    %v511 = vsel %vm398, %v378, 0
    %v513 = vsel %vm398, %v380, 0
    %v515 = vsel %vm398, %v383, 0
    %v517 = vsel %vm398, %v385, 0
    %v519 = vsel %vm398, %v388, 0
    %v521 = vsel %vm398, %v390, 0
    %v523 = vsel %vm398, %v393, 0
    %v525 = vsel %vm398, %v395, 0
    %vm527 = vcmask 1043456
    %v529 = vsel %vm527, %v397, 0
    %531 = vmatpush.msra.mxu0 0.0
    %532 = vmatpush.msra.mxu0 0.0
    %533 = vmatpush.msra.mxu0 0.0
    %534 = vmatpush.msra.mxu0 0.0
    %535 = vmatpush.msra.mxu0 0.0
    %536 = vmatpush.msra.mxu0 0.0
    %537 = vmatpush.msra.mxu0 0.0
    %538 = vmatpush.msra.mxu0 0.0
    %539 = vmatpush.msra.mxu0 0.0
    %540 = vmatpush.msra.mxu0 0.0
    %541 = vmatpush.msra.mxu0 0.0
    %542 = vmatpush.msra.mxu0 0.0
    %543 = vmatpush.msra.mxu0 0.0
    %544 = vmatpush.msra.mxu0 0.0
    %545 = vmatpush.msra.mxu0 0.0
    %546 = vmatpush.msra.mxu0 %v529
    %547 = vmatmul.f32.gmra.mxu0 %v399
    %v548 = vpop.f32.mrf.mxu0
    %v549 = vadd.f32 0.0, %v548
    %550 = vmatmul.f32.gmra.mxu0 %v401
    %v551 = vpop.f32.mrf.mxu0
    %v552 = vadd.f32 0.0, %v551
    %553 = vmatmul.f32.gmra.mxu0 %v403
    %v554 = vpop.f32.mrf.mxu0
    %v555 = vadd.f32 0.0, %v554
    %556 = vmatmul.f32.gmra.mxu0 %v405
    %v557 = vpop.f32.mrf.mxu0
    %v558 = vadd.f32 0.0, %v557
    %559 = vmatmul.f32.gmra.mxu0 %v407
    %v560 = vpop.f32.mrf.mxu0
    %v561 = vadd.f32 0.0, %v560
    %562 = vmatmul.f32.gmra.mxu0 %v409
    %v563 = vpop.f32.mrf.mxu0
    %v564 = vadd.f32 0.0, %v563
    %565 = vmatmul.f32.gmra.mxu0 %v411
    %v566 = vpop.f32.mrf.mxu0
    %v567 = vadd.f32 0.0, %v566
    %568 = vmatmul.f32.gmra.mxu0 %v413
    %v569 = vpop.f32.mrf.mxu0
    %v570 = vadd.f32 0.0, %v569
    %571 = vmatmul.f32.gmra.mxu0 %v415
    %v572 = vpop.f32.mrf.mxu0
    %v573 = vadd.f32 0.0, %v572
    %574 = vmatmul.f32.gmra.mxu0 %v417
    %v575 = vpop.f32.mrf.mxu0
    %v576 = vadd.f32 0.0, %v575
    %577 = vmatmul.f32.gmra.mxu0 %v419
    %v578 = vpop.f32.mrf.mxu0
    %v579 = vadd.f32 0.0, %v578
    %580 = vmatmul.f32.gmra.mxu0 %v421
    %v581 = vpop.f32.mrf.mxu0
    %v582 = vadd.f32 0.0, %v581
    %583 = vmatmul.f32.gmra.mxu0 %v423
    %v584 = vpop.f32.mrf.mxu0
    %v585 = vadd.f32 0.0, %v584
    %586 = vmatmul.f32.gmra.mxu0 %v425
    %v587 = vpop.f32.mrf.mxu0
    %v588 = vadd.f32 0.0, %v587
    %589 = vmatmul.f32.gmra.mxu0 %v427
    %v590 = vpop.f32.mrf.mxu0
    %v591 = vadd.f32 0.0, %v590
    %592 = vmatmul.f32.gmra.mxu0 %v429
    %v593 = vpop.f32.mrf.mxu0
    %v594 = vadd.f32 0.0, %v593
    %595 = vmatmul.f32.gmra.mxu0 %v431
    %v596 = vpop.f32.mrf.mxu0
    %v597 = vadd.f32 0.0, %v596
    %598 = vmatmul.f32.gmra.mxu0 %v433
    %v599 = vpop.f32.mrf.mxu0
    %v600 = vadd.f32 0.0, %v599
    %601 = vmatmul.f32.gmra.mxu0 %v435
    %v602 = vpop.f32.mrf.mxu0
    %v603 = vadd.f32 0.0, %v602
    %604 = vmatmul.f32.gmra.mxu0 %v437
    %v605 = vpop.f32.mrf.mxu0
    %v606 = vadd.f32 0.0, %v605
    %607 = vmatmul.f32.gmra.mxu0 %v439
    %v608 = vpop.f32.mrf.mxu0
    %v609 = vadd.f32 0.0, %v608
    %610 = vmatmul.f32.gmra.mxu0 %v441
    %v611 = vpop.f32.mrf.mxu0
    %v612 = vadd.f32 0.0, %v611
    %613 = vmatmul.f32.gmra.mxu0 %v443
    %v614 = vpop.f32.mrf.mxu0
    %v615 = vadd.f32 0.0, %v614
    %616 = vmatmul.f32.gmra.mxu0 %v445
    %v617 = vpop.f32.mrf.mxu0
    %v618 = vadd.f32 0.0, %v617
    %619 = vmatmul.f32.gmra.mxu0 %v447
    %v620 = vpop.f32.mrf.mxu0
    %v621 = vadd.f32 0.0, %v620
    %622 = vmatmul.f32.gmra.mxu0 %v449
    %v623 = vpop.f32.mrf.mxu0
    %v624 = vadd.f32 0.0, %v623
    %625 = vmatmul.f32.gmra.mxu0 %v451
    %v626 = vpop.f32.mrf.mxu0
    %v627 = vadd.f32 0.0, %v626
    %628 = vmatmul.f32.gmra.mxu0 %v453
    %v629 = vpop.f32.mrf.mxu0
    %v630 = vadd.f32 0.0, %v629
    %631 = vmatmul.f32.gmra.mxu0 %v455
    %v632 = vpop.f32.mrf.mxu0
    %v633 = vadd.f32 0.0, %v632
    %634 = vmatmul.f32.gmra.mxu0 %v457
    %v635 = vpop.f32.mrf.mxu0
    %v636 = vadd.f32 0.0, %v635
    %637 = vmatmul.f32.gmra.mxu0 %v459
    %v638 = vpop.f32.mrf.mxu0
    %v639 = vadd.f32 0.0, %v638
    %640 = vmatmul.f32.gmra.mxu0 %v461
    %v641 = vpop.f32.mrf.mxu0
    %v642 = vadd.f32 0.0, %v641
    %643 = vmatmul.f32.gmra.mxu0 %v463
    %v644 = vpop.f32.mrf.mxu0
    %v645 = vadd.f32 0.0, %v644
    %646 = vmatmul.f32.gmra.mxu0 %v465
    %v647 = vpop.f32.mrf.mxu0
    %v648 = vadd.f32 0.0, %v647
    %649 = vmatmul.f32.gmra.mxu0 %v467
    %v650 = vpop.f32.mrf.mxu0
    %v651 = vadd.f32 0.0, %v650
    %652 = vmatmul.f32.gmra.mxu0 %v469
    %v653 = vpop.f32.mrf.mxu0
    %v654 = vadd.f32 0.0, %v653
    %655 = vmatmul.f32.gmra.mxu0 %v471
    %v656 = vpop.f32.mrf.mxu0
    %v657 = vadd.f32 0.0, %v656
    %658 = vmatmul.f32.gmra.mxu0 %v473
    %v659 = vpop.f32.mrf.mxu0
    %v660 = vadd.f32 0.0, %v659
    %661 = vmatmul.f32.gmra.mxu0 %v475
    %v662 = vpop.f32.mrf.mxu0
    %v663 = vadd.f32 0.0, %v662
    %664 = vmatmul.f32.gmra.mxu0 %v477
    %v665 = vpop.f32.mrf.mxu0
    %v666 = vadd.f32 0.0, %v665
    %667 = vmatmul.f32.gmra.mxu0 %v479
    %v668 = vpop.f32.mrf.mxu0
    %v669 = vadd.f32 0.0, %v668
    %670 = vmatmul.f32.gmra.mxu0 %v481
    %v671 = vpop.f32.mrf.mxu0
    %v672 = vadd.f32 0.0, %v671
    %673 = vmatmul.f32.gmra.mxu0 %v483
    %v674 = vpop.f32.mrf.mxu0
    %v675 = vadd.f32 0.0, %v674
    %676 = vmatmul.f32.gmra.mxu0 %v485
    %v677 = vpop.f32.mrf.mxu0
    %v678 = vadd.f32 0.0, %v677
    %679 = vmatmul.f32.gmra.mxu0 %v487
    %v680 = vpop.f32.mrf.mxu0
    %v681 = vadd.f32 0.0, %v680
    %682 = vmatmul.f32.gmra.mxu0 %v489
    %v683 = vpop.f32.mrf.mxu0
    %v684 = vadd.f32 0.0, %v683
    %685 = vmatmul.f32.gmra.mxu0 %v491
    %v686 = vpop.f32.mrf.mxu0
    %v687 = vadd.f32 0.0, %v686
    %688 = vmatmul.f32.gmra.mxu0 %v493
    %v689 = vpop.f32.mrf.mxu0
    %v690 = vadd.f32 0.0, %v689
    %691 = vmatmul.f32.gmra.mxu0 %v495
    %v692 = vpop.f32.mrf.mxu0
    %v693 = vadd.f32 0.0, %v692
    %694 = vmatmul.f32.gmra.mxu0 %v497
    %v695 = vpop.f32.mrf.mxu0
    %v696 = vadd.f32 0.0, %v695
    %697 = vmatmul.f32.gmra.mxu0 %v499
    %v698 = vpop.f32.mrf.mxu0
    %v699 = vadd.f32 0.0, %v698
    %700 = vmatmul.f32.gmra.mxu0 %v501
    %v701 = vpop.f32.mrf.mxu0
    %v702 = vadd.f32 0.0, %v701
    %703 = vmatmul.f32.gmra.mxu0 %v503
    %v704 = vpop.f32.mrf.mxu0
    %v705 = vadd.f32 0.0, %v704
    %706 = vmatmul.f32.gmra.mxu0 %v505
    %v707 = vpop.f32.mrf.mxu0
    %v708 = vadd.f32 0.0, %v707
    %709 = vmatmul.f32.gmra.mxu0 %v507
    %v710 = vpop.f32.mrf.mxu0
    %v711 = vadd.f32 0.0, %v710
    %712 = vmatmul.f32.gmra.mxu0 %v509
    %v713 = vpop.f32.mrf.mxu0
    %v714 = vadd.f32 0.0, %v713
    %715 = vmatmul.f32.gmra.mxu0 %v511
    %v716 = vpop.f32.mrf.mxu0
    %v717 = vadd.f32 0.0, %v716
    %718 = vmatmul.f32.gmra.mxu0 %v513
    %v719 = vpop.f32.mrf.mxu0
    %v720 = vadd.f32 0.0, %v719
    %721 = vmatmul.f32.gmra.mxu0 %v515
    %v722 = vpop.f32.mrf.mxu0
    %v723 = vadd.f32 0.0, %v722
    %724 = vmatmul.f32.gmra.mxu0 %v517
    %v725 = vpop.f32.mrf.mxu0
    %v726 = vadd.f32 0.0, %v725
    %727 = vmatmul.f32.gmra.mxu0 %v519
    %v728 = vpop.f32.mrf.mxu0
    %v729 = vadd.f32 0.0, %v728
    %730 = vmatmul.f32.gmra.mxu0 %v521
    %v731 = vpop.f32.mrf.mxu0
    %v732 = vadd.f32 0.0, %v731
    %733 = vmatmul.f32.gmra.mxu0 %v523
    %v734 = vpop.f32.mrf.mxu0
    %v735 = vadd.f32 0.0, %v734
    %736 = vmatmul.f32.gmra.mxu0 %v525
    %v737 = vpop.f32.mrf.mxu0
    %v738 = vadd.f32 0.0, %v737
    %739 = vdwg.mxu0
    %v740 = vsel %vm398, %v30, 0
    %v742 = vsel %vm398, %v31, 0
    %v744 = vsel %vm398, %v33, 0
    %v746 = vsel %vm398, %v34, 0
    %v748 = vsel %vm398, %v36, 0
    %v750 = vsel %vm398, %v37, 0
    %v752 = vsel %vm398, %v39, 0
    %v754 = vsel %vm398, %v40, 0
    %v756 = vsel %vm398, %v42, 0
    %v758 = vsel %vm398, %v43, 0
    %v760 = vsel %vm398, %v45, 0
    %v762 = vsel %vm398, %v46, 0
    %v764 = vsel %vm398, %v48, 0
    %v766 = vsel %vm398, %v49, 0
    %v768 = vsel %vm398, %v51, 0
    %v770 = vsel %vm398, %v52, 0
    %v772 = vsel %vm398, %v54, 0
    %v774 = vsel %vm398, %v55, 0
    %v776 = vsel %vm398, %v57, 0
    %v778 = vsel %vm398, %v58, 0
    %v780 = vsel %vm398, %v60, 0
    %v782 = vsel %vm398, %v61, 0
    %v784 = vsel %vm398, %v63, 0
    %v786 = vsel %vm398, %v64, 0
    %v788 = vsel %vm398, %v66, 0
    %v790 = vsel %vm398, %v67, 0
    %v792 = vsel %vm398, %v69, 0
    %v794 = vsel %vm398, %v70, 0
    %v796 = vsel %vm398, %v72, 0
    %v798 = vsel %vm398, %v73, 0
    %v800 = vsel %vm398, %v75, 0
    %v802 = vsel %vm398, %v76, 0
    %v804 = vsel %vm398, %v84, 0
    %v806 = vsel %vm398, %v85, 0
    %v808 = vsel %vm398, %v87, 0
    %v810 = vsel %vm398, %v88, 0
    %v812 = vsel %vm398, %v90, 0
    %v814 = vsel %vm398, %v91, 0
    %v816 = vsel %vm398, %v93, 0
    %v818 = vsel %vm398, %v94, 0
    %v820 = vsel %vm398, %v96, 0
    %v822 = vsel %vm398, %v97, 0
    %v824 = vsel %vm398, %v99, 0
    %v826 = vsel %vm398, %v100, 0
    %v828 = vsel %vm398, %v102, 0
    %v830 = vsel %vm398, %v103, 0
    %v832 = vsel %vm398, %v105, 0
    %v834 = vsel %vm398, %v106, 0
    %v836 = vsel %vm398, %v108, 0
    %v838 = vsel %vm398, %v109, 0
    %v840 = vsel %vm398, %v111, 0
    %v842 = vsel %vm398, %v112, 0
    %v844 = vsel %vm398, %v114, 0
    %v846 = vsel %vm398, %v115, 0
    %v848 = vsel %vm398, %v117, 0
    %v850 = vsel %vm398, %v118, 0
    %v852 = vsel %vm398, %v120, 0
    %v854 = vsel %vm398, %v121, 0
    %v856 = vsel %vm398, %v123, 0
    %v858 = vsel %vm398, %v124, 0
    %v860 = vsel %vm398, %v126, 0
    %v862 = vsel %vm398, %v127, 0
    %v864 = vsel %vm398, %v129, 0
    %v866 = vsel %vm398, %v130, 0
    %v869 = vsel %vm527, %v138, 0
    %871 = vmatpush.msra.mxu0 0.0
    %872 = vmatpush.msra.mxu0 0.0
    %873 = vmatpush.msra.mxu0 0.0
    %874 = vmatpush.msra.mxu0 0.0
    %875 = vmatpush.msra.mxu0 0.0
    %876 = vmatpush.msra.mxu0 0.0
    %877 = vmatpush.msra.mxu0 0.0
    %878 = vmatpush.msra.mxu0 0.0
    %879 = vmatpush.msra.mxu0 0.0
    %880 = vmatpush.msra.mxu0 0.0
    %881 = vmatpush.msra.mxu0 0.0
    %882 = vmatpush.msra.mxu0 0.0
    %883 = vmatpush.msra.mxu0 0.0
    %884 = vmatpush.msra.mxu0 0.0
    %885 = vmatpush.msra.mxu0 0.0
    %886 = vmatpush.msra.mxu0 %v869
    %887 = vmatmul.f32.gmra.mxu0 %v740
    %v888 = vpop.f32.mrf.mxu0
    %v889 = vadd.f32 %v549, %v888
    %890 = vmatmul.f32.gmra.mxu0 %v742
    %v891 = vpop.f32.mrf.mxu0
    %v892 = vadd.f32 %v552, %v891
    %893 = vmatmul.f32.gmra.mxu0 %v744
    %v894 = vpop.f32.mrf.mxu0
    %v895 = vadd.f32 %v555, %v894
    %896 = vmatmul.f32.gmra.mxu0 %v746
    %v897 = vpop.f32.mrf.mxu0
    %v898 = vadd.f32 %v558, %v897
    %899 = vmatmul.f32.gmra.mxu0 %v748
    %v900 = vpop.f32.mrf.mxu0
    %v901 = vadd.f32 %v561, %v900
    %902 = vmatmul.f32.gmra.mxu0 %v750
    %v903 = vpop.f32.mrf.mxu0
    %v904 = vadd.f32 %v564, %v903
    %905 = vmatmul.f32.gmra.mxu0 %v752
    %v906 = vpop.f32.mrf.mxu0
    %v907 = vadd.f32 %v567, %v906
    %908 = vmatmul.f32.gmra.mxu0 %v754
    %v909 = vpop.f32.mrf.mxu0
    %v910 = vadd.f32 %v570, %v909
    %911 = vmatmul.f32.gmra.mxu0 %v756
    %v912 = vpop.f32.mrf.mxu0
    %v913 = vadd.f32 %v573, %v912
    %914 = vmatmul.f32.gmra.mxu0 %v758
    %v915 = vpop.f32.mrf.mxu0
    %v916 = vadd.f32 %v576, %v915
    %917 = vmatmul.f32.gmra.mxu0 %v760
    %v918 = vpop.f32.mrf.mxu0
    %v919 = vadd.f32 %v579, %v918
    %920 = vmatmul.f32.gmra.mxu0 %v762
    %v921 = vpop.f32.mrf.mxu0
    %v922 = vadd.f32 %v582, %v921
    %923 = vmatmul.f32.gmra.mxu0 %v764
    %v924 = vpop.f32.mrf.mxu0
    %v925 = vadd.f32 %v585, %v924
    %926 = vmatmul.f32.gmra.mxu0 %v766
    %v927 = vpop.f32.mrf.mxu0
    %v928 = vadd.f32 %v588, %v927
    %929 = vmatmul.f32.gmra.mxu0 %v768
    %v930 = vpop.f32.mrf.mxu0
    %v931 = vadd.f32 %v591, %v930
    %932 = vmatmul.f32.gmra.mxu0 %v770
    %v933 = vpop.f32.mrf.mxu0
    %v934 = vadd.f32 %v594, %v933
    %935 = vmatmul.f32.gmra.mxu0 %v772
    %v936 = vpop.f32.mrf.mxu0
    %v937 = vadd.f32 %v597, %v936
    %938 = vmatmul.f32.gmra.mxu0 %v774
    %v939 = vpop.f32.mrf.mxu0
    %v940 = vadd.f32 %v600, %v939
    %941 = vmatmul.f32.gmra.mxu0 %v776
    %v942 = vpop.f32.mrf.mxu0
    %v943 = vadd.f32 %v603, %v942
    %944 = vmatmul.f32.gmra.mxu0 %v778
    %v945 = vpop.f32.mrf.mxu0
    %v946 = vadd.f32 %v606, %v945
    %947 = vmatmul.f32.gmra.mxu0 %v780
    %v948 = vpop.f32.mrf.mxu0
    %v949 = vadd.f32 %v609, %v948
    %950 = vmatmul.f32.gmra.mxu0 %v782
    %v951 = vpop.f32.mrf.mxu0
    %v952 = vadd.f32 %v612, %v951
    %953 = vmatmul.f32.gmra.mxu0 %v784
    %v954 = vpop.f32.mrf.mxu0
    %v955 = vadd.f32 %v615, %v954
    %956 = vmatmul.f32.gmra.mxu0 %v786
    %v957 = vpop.f32.mrf.mxu0
    %v958 = vadd.f32 %v618, %v957
    %959 = vmatmul.f32.gmra.mxu0 %v788
    %v960 = vpop.f32.mrf.mxu0
    %v961 = vadd.f32 %v621, %v960
    %962 = vmatmul.f32.gmra.mxu0 %v790
    %v963 = vpop.f32.mrf.mxu0
    %v964 = vadd.f32 %v624, %v963
    %965 = vmatmul.f32.gmra.mxu0 %v792
    %v966 = vpop.f32.mrf.mxu0
    %v967 = vadd.f32 %v627, %v966
    %968 = vmatmul.f32.gmra.mxu0 %v794
    %v969 = vpop.f32.mrf.mxu0
    %v970 = vadd.f32 %v630, %v969
    %971 = vmatmul.f32.gmra.mxu0 %v796
    %v972 = vpop.f32.mrf.mxu0
    %v973 = vadd.f32 %v633, %v972
    %974 = vmatmul.f32.gmra.mxu0 %v798
    %v975 = vpop.f32.mrf.mxu0
    %v976 = vadd.f32 %v636, %v975
    %977 = vmatmul.f32.gmra.mxu0 %v800
    %v978 = vpop.f32.mrf.mxu0
    %v979 = vadd.f32 %v639, %v978
    %980 = vmatmul.f32.gmra.mxu0 %v802
    %v981 = vpop.f32.mrf.mxu0
    %v982 = vadd.f32 %v642, %v981
    %983 = vmatmul.f32.gmra.mxu0 %v804
    %v984 = vpop.f32.mrf.mxu0
    %v985 = vadd.f32 %v645, %v984
    %986 = vmatmul.f32.gmra.mxu0 %v806
    %v987 = vpop.f32.mrf.mxu0
    %v988 = vadd.f32 %v648, %v987
    %989 = vmatmul.f32.gmra.mxu0 %v808
    %v990 = vpop.f32.mrf.mxu0
    %v991 = vadd.f32 %v651, %v990
    %992 = vmatmul.f32.gmra.mxu0 %v810
    %v993 = vpop.f32.mrf.mxu0
    %v994 = vadd.f32 %v654, %v993
    %995 = vmatmul.f32.gmra.mxu0 %v812
    %v996 = vpop.f32.mrf.mxu0
    %v997 = vadd.f32 %v657, %v996
    %998 = vmatmul.f32.gmra.mxu0 %v814
    %v999 = vpop.f32.mrf.mxu0
    %v1000 = vadd.f32 %v660, %v999
    %1001 = vmatmul.f32.gmra.mxu0 %v816
    %v1002 = vpop.f32.mrf.mxu0
    %v1003 = vadd.f32 %v663, %v1002
    %1004 = vmatmul.f32.gmra.mxu0 %v818
    %v1005 = vpop.f32.mrf.mxu0
    %v1006 = vadd.f32 %v666, %v1005
    %1007 = vmatmul.f32.gmra.mxu0 %v820
    %v1008 = vpop.f32.mrf.mxu0
    %v1009 = vadd.f32 %v669, %v1008
    %1010 = vmatmul.f32.gmra.mxu0 %v822
    %v1011 = vpop.f32.mrf.mxu0
    %v1012 = vadd.f32 %v672, %v1011
    %1013 = vmatmul.f32.gmra.mxu0 %v824
    %v1014 = vpop.f32.mrf.mxu0
    %v1015 = vadd.f32 %v675, %v1014
    %1016 = vmatmul.f32.gmra.mxu0 %v826
    %v1017 = vpop.f32.mrf.mxu0
    %v1018 = vadd.f32 %v678, %v1017
    %1019 = vmatmul.f32.gmra.mxu0 %v828
    %v1020 = vpop.f32.mrf.mxu0
    %v1021 = vadd.f32 %v681, %v1020
    %1022 = vmatmul.f32.gmra.mxu0 %v830
    %v1023 = vpop.f32.mrf.mxu0
    %v1024 = vadd.f32 %v684, %v1023
    %1025 = vmatmul.f32.gmra.mxu0 %v832
    %v1026 = vpop.f32.mrf.mxu0
    %v1027 = vadd.f32 %v687, %v1026
    %1028 = vmatmul.f32.gmra.mxu0 %v834
    %v1029 = vpop.f32.mrf.mxu0
    %v1030 = vadd.f32 %v690, %v1029
    %1031 = vmatmul.f32.gmra.mxu0 %v836
    %v1032 = vpop.f32.mrf.mxu0
    %v1033 = vadd.f32 %v693, %v1032
    %1034 = vmatmul.f32.gmra.mxu0 %v838
    %v1035 = vpop.f32.mrf.mxu0
    %v1036 = vadd.f32 %v696, %v1035
    %1037 = vmatmul.f32.gmra.mxu0 %v840
    %v1038 = vpop.f32.mrf.mxu0
    %v1039 = vadd.f32 %v699, %v1038
    %1040 = vmatmul.f32.gmra.mxu0 %v842
    %v1041 = vpop.f32.mrf.mxu0
    %v1042 = vadd.f32 %v702, %v1041
    %1043 = vmatmul.f32.gmra.mxu0 %v844
    %v1044 = vpop.f32.mrf.mxu0
    %v1045 = vadd.f32 %v705, %v1044
    %1046 = vmatmul.f32.gmra.mxu0 %v846
    %v1047 = vpop.f32.mrf.mxu0
    %v1048 = vadd.f32 %v708, %v1047
    %1049 = vmatmul.f32.gmra.mxu0 %v848
    %v1050 = vpop.f32.mrf.mxu0
    %v1051 = vadd.f32 %v711, %v1050
    %1052 = vmatmul.f32.gmra.mxu0 %v850
    %v1053 = vpop.f32.mrf.mxu0
    %v1054 = vadd.f32 %v714, %v1053
    %1055 = vmatmul.f32.gmra.mxu0 %v852
    %v1056 = vpop.f32.mrf.mxu0
    %v1057 = vadd.f32 %v717, %v1056
    %1058 = vmatmul.f32.gmra.mxu0 %v854
    %v1059 = vpop.f32.mrf.mxu0
    %v1060 = vadd.f32 %v720, %v1059
    %1061 = vmatmul.f32.gmra.mxu0 %v856
    %v1062 = vpop.f32.mrf.mxu0
    %v1063 = vadd.f32 %v723, %v1062
    %1064 = vmatmul.f32.gmra.mxu0 %v858
    %v1065 = vpop.f32.mrf.mxu0
    %v1066 = vadd.f32 %v726, %v1065
    %1067 = vmatmul.f32.gmra.mxu0 %v860
    %v1068 = vpop.f32.mrf.mxu0
    %v1069 = vadd.f32 %v729, %v1068
    %1070 = vmatmul.f32.gmra.mxu0 %v862
    %v1071 = vpop.f32.mrf.mxu0
    %v1072 = vadd.f32 %v732, %v1071
    %1073 = vmatmul.f32.gmra.mxu0 %v864
    %v1074 = vpop.f32.mrf.mxu0
    %v1075 = vadd.f32 %v735, %v1074
    %1076 = vmatmul.f32.gmra.mxu0 %v866
    %v1077 = vpop.f32.mrf.mxu0
    %v1078 = vadd.f32 %v738, %v1077
    %1079 = vdwg.mxu0
    %vm1080 = vcmask 1045504
    %v1081 = vrot.slane %v30, 2
    %v1082 = vrot.slane %v31, 2
    %v1083 = vsel %vm1080, %v1081, %v1082
    %v1084 = vrot.slane %v32, 2
    %v1085 = vsel %vm1080, %v1082, %v1084
    %v1086 = vrot.slane %v33, 2
    %v1087 = vrot.slane %v34, 2
    %v1088 = vsel %vm1080, %v1086, %v1087
    %v1089 = vrot.slane %v35, 2
    %v1090 = vsel %vm1080, %v1087, %v1089
    %v1091 = vrot.slane %v36, 2
    %v1092 = vrot.slane %v37, 2
    %v1093 = vsel %vm1080, %v1091, %v1092
    %v1094 = vrot.slane %v38, 2
    %v1095 = vsel %vm1080, %v1092, %v1094
    %v1096 = vrot.slane %v39, 2
    %v1097 = vrot.slane %v40, 2
    %v1098 = vsel %vm1080, %v1096, %v1097
    %v1099 = vrot.slane %v41, 2
    %v1100 = vsel %vm1080, %v1097, %v1099
    %v1101 = vrot.slane %v42, 2
    %v1102 = vrot.slane %v43, 2
    %v1103 = vsel %vm1080, %v1101, %v1102
    %v1104 = vrot.slane %v44, 2
    %v1105 = vsel %vm1080, %v1102, %v1104
    %v1106 = vrot.slane %v45, 2
    %v1107 = vrot.slane %v46, 2
    %v1108 = vsel %vm1080, %v1106, %v1107
    %v1109 = vrot.slane %v47, 2
    %v1110 = vsel %vm1080, %v1107, %v1109
    %v1111 = vrot.slane %v48, 2
    %v1112 = vrot.slane %v49, 2
    %v1113 = vsel %vm1080, %v1111, %v1112
    %v1114 = vrot.slane %v50, 2
    %v1115 = vsel %vm1080, %v1112, %v1114
    %v1116 = vrot.slane %v51, 2
    %v1117 = vrot.slane %v52, 2
    %v1118 = vsel %vm1080, %v1116, %v1117
    %v1119 = vrot.slane %v53, 2
    %v1120 = vsel %vm1080, %v1117, %v1119
    %v1121 = vrot.slane %v54, 2
    %v1122 = vrot.slane %v55, 2
    %v1123 = vsel %vm1080, %v1121, %v1122
    %v1124 = vrot.slane %v56, 2
    %v1125 = vsel %vm1080, %v1122, %v1124
    %v1126 = vrot.slane %v57, 2
    %v1127 = vrot.slane %v58, 2
    %v1128 = vsel %vm1080, %v1126, %v1127
    %v1129 = vrot.slane %v59, 2
    %v1130 = vsel %vm1080, %v1127, %v1129
    %v1131 = vrot.slane %v60, 2
    %v1132 = vrot.slane %v61, 2
    %v1133 = vsel %vm1080, %v1131, %v1132
    %v1134 = vrot.slane %v62, 2
    %v1135 = vsel %vm1080, %v1132, %v1134
    %v1136 = vrot.slane %v63, 2
    %v1137 = vrot.slane %v64, 2
    %v1138 = vsel %vm1080, %v1136, %v1137
    %v1139 = vrot.slane %v65, 2
    %v1140 = vsel %vm1080, %v1137, %v1139
    %v1141 = vrot.slane %v66, 2
    %v1142 = vrot.slane %v67, 2
    %v1143 = vsel %vm1080, %v1141, %v1142
    %v1144 = vrot.slane %v68, 2
    %v1145 = vsel %vm1080, %v1142, %v1144
    %v1146 = vrot.slane %v69, 2
    %v1147 = vrot.slane %v70, 2
    %v1148 = vsel %vm1080, %v1146, %v1147
    %v1149 = vrot.slane %v71, 2
    %v1150 = vsel %vm1080, %v1147, %v1149
    %v1151 = vrot.slane %v72, 2
    %v1152 = vrot.slane %v73, 2
    %v1153 = vsel %vm1080, %v1151, %v1152
    %v1154 = vrot.slane %v74, 2
    %v1155 = vsel %vm1080, %v1152, %v1154
    %v1156 = vrot.slane %v75, 2
    %v1157 = vrot.slane %v76, 2
    %v1158 = vsel %vm1080, %v1156, %v1157
    %v1159 = vrot.slane %v77, 2
    %v1160 = vsel %vm1080, %v1157, %v1159
    %v1161 = vrot.slane %v84, 2
    %v1162 = vrot.slane %v85, 2
    %v1163 = vsel %vm1080, %v1161, %v1162
    %v1164 = vrot.slane %v86, 2
    %v1165 = vsel %vm1080, %v1162, %v1164
    %v1166 = vrot.slane %v87, 2
    %v1167 = vrot.slane %v88, 2
    %v1168 = vsel %vm1080, %v1166, %v1167
    %v1169 = vrot.slane %v89, 2
    %v1170 = vsel %vm1080, %v1167, %v1169
    %v1171 = vrot.slane %v90, 2
    %v1172 = vrot.slane %v91, 2
    %v1173 = vsel %vm1080, %v1171, %v1172
    %v1174 = vrot.slane %v92, 2
    %v1175 = vsel %vm1080, %v1172, %v1174
    %v1176 = vrot.slane %v93, 2
    %v1177 = vrot.slane %v94, 2
    %v1178 = vsel %vm1080, %v1176, %v1177
    %v1179 = vrot.slane %v95, 2
    %v1180 = vsel %vm1080, %v1177, %v1179
    %v1181 = vrot.slane %v96, 2
    %v1182 = vrot.slane %v97, 2
    %v1183 = vsel %vm1080, %v1181, %v1182
    %v1184 = vrot.slane %v98, 2
    %v1185 = vsel %vm1080, %v1182, %v1184
    %v1186 = vrot.slane %v99, 2
    %v1187 = vrot.slane %v100, 2
    %v1188 = vsel %vm1080, %v1186, %v1187
    %v1189 = vrot.slane %v101, 2
    %v1190 = vsel %vm1080, %v1187, %v1189
    %v1191 = vrot.slane %v102, 2
    %v1192 = vrot.slane %v103, 2
    %v1193 = vsel %vm1080, %v1191, %v1192
    %v1194 = vrot.slane %v104, 2
    %v1195 = vsel %vm1080, %v1192, %v1194
    %v1196 = vrot.slane %v105, 2
    %v1197 = vrot.slane %v106, 2
    %v1198 = vsel %vm1080, %v1196, %v1197
    %v1199 = vrot.slane %v107, 2
    %v1200 = vsel %vm1080, %v1197, %v1199
    %v1201 = vrot.slane %v108, 2
    %v1202 = vrot.slane %v109, 2
    %v1203 = vsel %vm1080, %v1201, %v1202
    %v1204 = vrot.slane %v110, 2
    %v1205 = vsel %vm1080, %v1202, %v1204
    %v1206 = vrot.slane %v111, 2
    %v1207 = vrot.slane %v112, 2
    %v1208 = vsel %vm1080, %v1206, %v1207
    %v1209 = vrot.slane %v113, 2
    %v1210 = vsel %vm1080, %v1207, %v1209
    %v1211 = vrot.slane %v114, 2
    %v1212 = vrot.slane %v115, 2
    %v1213 = vsel %vm1080, %v1211, %v1212
    %v1214 = vrot.slane %v116, 2
    %v1215 = vsel %vm1080, %v1212, %v1214
    %v1216 = vrot.slane %v117, 2
    %v1217 = vrot.slane %v118, 2
    %v1218 = vsel %vm1080, %v1216, %v1217
    %v1219 = vrot.slane %v119, 2
    %v1220 = vsel %vm1080, %v1217, %v1219
    %v1221 = vrot.slane %v120, 2
    %v1222 = vrot.slane %v121, 2
    %v1223 = vsel %vm1080, %v1221, %v1222
    %v1224 = vrot.slane %v122, 2
    %v1225 = vsel %vm1080, %v1222, %v1224
    %v1226 = vrot.slane %v123, 2
    %v1227 = vrot.slane %v124, 2
    %v1228 = vsel %vm1080, %v1226, %v1227
    %v1229 = vrot.slane %v125, 2
    %v1230 = vsel %vm1080, %v1227, %v1229
    %v1231 = vrot.slane %v126, 2
    %v1232 = vrot.slane %v127, 2
    %v1233 = vsel %vm1080, %v1231, %v1232
    %v1234 = vrot.slane %v128, 2
    %v1235 = vsel %vm1080, %v1232, %v1234
    %v1236 = vrot.slane %v129, 2
    %v1237 = vrot.slane %v130, 2
    %v1238 = vsel %vm1080, %v1236, %v1237
    %v1239 = vrot.slane %v131, 2
    %v1240 = vsel %vm1080, %v1237, %v1239
    %s1241 = scalar_lea.vmem %s1, 8
    %v1242 = vld [vmem:[%s1241] sm:$0xf]
    %v1243 = vsel %vm398, %v1083, 0
    %v1245 = vsel %vm398, %v1085, 0
    %v1247 = vsel %vm398, %v1088, 0
    %v1249 = vsel %vm398, %v1090, 0
    %v1251 = vsel %vm398, %v1093, 0
    %v1253 = vsel %vm398, %v1095, 0
    %v1255 = vsel %vm398, %v1098, 0
    %v1257 = vsel %vm398, %v1100, 0
    %v1259 = vsel %vm398, %v1103, 0
    %v1261 = vsel %vm398, %v1105, 0
    %v1263 = vsel %vm398, %v1108, 0
    %v1265 = vsel %vm398, %v1110, 0
    %v1267 = vsel %vm398, %v1113, 0
    %v1269 = vsel %vm398, %v1115, 0
    %v1271 = vsel %vm398, %v1118, 0
    %v1273 = vsel %vm398, %v1120, 0
    %v1275 = vsel %vm398, %v1123, 0
    %v1277 = vsel %vm398, %v1125, 0
    %v1279 = vsel %vm398, %v1128, 0
    %v1281 = vsel %vm398, %v1130, 0
    %v1283 = vsel %vm398, %v1133, 0
    %v1285 = vsel %vm398, %v1135, 0
    %v1287 = vsel %vm398, %v1138, 0
    %v1289 = vsel %vm398, %v1140, 0
    %v1291 = vsel %vm398, %v1143, 0
    %v1293 = vsel %vm398, %v1145, 0
    %v1295 = vsel %vm398, %v1148, 0
    %v1297 = vsel %vm398, %v1150, 0
    %v1299 = vsel %vm398, %v1153, 0
    %v1301 = vsel %vm398, %v1155, 0
    %v1303 = vsel %vm398, %v1158, 0
    %v1305 = vsel %vm398, %v1160, 0
    %v1307 = vsel %vm398, %v1163, 0
    %v1309 = vsel %vm398, %v1165, 0
    %v1311 = vsel %vm398, %v1168, 0
    %v1313 = vsel %vm398, %v1170, 0
    %v1315 = vsel %vm398, %v1173, 0
    %v1317 = vsel %vm398, %v1175, 0
    %v1319 = vsel %vm398, %v1178, 0
    %v1321 = vsel %vm398, %v1180, 0
    %v1323 = vsel %vm398, %v1183, 0
    %v1325 = vsel %vm398, %v1185, 0
    %v1327 = vsel %vm398, %v1188, 0
    %v1329 = vsel %vm398, %v1190, 0
    %v1331 = vsel %vm398, %v1193, 0
    %v1333 = vsel %vm398, %v1195, 0
    %v1335 = vsel %vm398, %v1198, 0
    %v1337 = vsel %vm398, %v1200, 0
    %v1339 = vsel %vm398, %v1203, 0
    %v1341 = vsel %vm398, %v1205, 0
    %v1343 = vsel %vm398, %v1208, 0
    %v1345 = vsel %vm398, %v1210, 0
    %v1347 = vsel %vm398, %v1213, 0
    %v1349 = vsel %vm398, %v1215, 0
    %v1351 = vsel %vm398, %v1218, 0
    %v1353 = vsel %vm398, %v1220, 0
    %v1355 = vsel %vm398, %v1223, 0
    %v1357 = vsel %vm398, %v1225, 0
    %v1359 = vsel %vm398, %v1228, 0
    %v1361 = vsel %vm398, %v1230, 0
    %v1363 = vsel %vm398, %v1233, 0
    %v1365 = vsel %vm398, %v1235, 0
    %v1367 = vsel %vm398, %v1238, 0
    %v1369 = vsel %vm398, %v1240, 0
    %v1372 = vsel %vm527, %v1242, 0
    %1374 = vmatpush.msra.mxu0 0.0
    %1375 = vmatpush.msra.mxu0 0.0
    %1376 = vmatpush.msra.mxu0 0.0
    %1377 = vmatpush.msra.mxu0 0.0
    %1378 = vmatpush.msra.mxu0 0.0
    %1379 = vmatpush.msra.mxu0 0.0
    %1380 = vmatpush.msra.mxu0 0.0
    %1381 = vmatpush.msra.mxu0 0.0
    %1382 = vmatpush.msra.mxu0 0.0
    %1383 = vmatpush.msra.mxu0 0.0
    %1384 = vmatpush.msra.mxu0 0.0
    %1385 = vmatpush.msra.mxu0 0.0
    %1386 = vmatpush.msra.mxu0 0.0
    %1387 = vmatpush.msra.mxu0 0.0
    %1388 = vmatpush.msra.mxu0 0.0
    %1389 = vmatpush.msra.mxu0 %v1372
    %1390 = vmatmul.f32.gmra.mxu0 %v1243
    %v1391 = vpop.f32.mrf.mxu0
    %v1392 = vadd.f32 0.0, %v1391
    %1393 = vmatmul.f32.gmra.mxu0 %v1245
    %v1394 = vpop.f32.mrf.mxu0
    %v1395 = vadd.f32 0.0, %v1394
    %1396 = vmatmul.f32.gmra.mxu0 %v1247
    %v1397 = vpop.f32.mrf.mxu0
    %v1398 = vadd.f32 0.0, %v1397
    %1399 = vmatmul.f32.gmra.mxu0 %v1249
    %v1400 = vpop.f32.mrf.mxu0
    %v1401 = vadd.f32 0.0, %v1400
    %1402 = vmatmul.f32.gmra.mxu0 %v1251
    %v1403 = vpop.f32.mrf.mxu0
    %v1404 = vadd.f32 0.0, %v1403
    %1405 = vmatmul.f32.gmra.mxu0 %v1253
    %v1406 = vpop.f32.mrf.mxu0
    %v1407 = vadd.f32 0.0, %v1406
    %1408 = vmatmul.f32.gmra.mxu0 %v1255
    %v1409 = vpop.f32.mrf.mxu0
    %v1410 = vadd.f32 0.0, %v1409
    %1411 = vmatmul.f32.gmra.mxu0 %v1257
    %v1412 = vpop.f32.mrf.mxu0
    %v1413 = vadd.f32 0.0, %v1412
    %1414 = vmatmul.f32.gmra.mxu0 %v1259
    %v1415 = vpop.f32.mrf.mxu0
    %v1416 = vadd.f32 0.0, %v1415
    %1417 = vmatmul.f32.gmra.mxu0 %v1261
    %v1418 = vpop.f32.mrf.mxu0
    %v1419 = vadd.f32 0.0, %v1418
    %1420 = vmatmul.f32.gmra.mxu0 %v1263
    %v1421 = vpop.f32.mrf.mxu0
    %v1422 = vadd.f32 0.0, %v1421
    %1423 = vmatmul.f32.gmra.mxu0 %v1265
    %v1424 = vpop.f32.mrf.mxu0
    %v1425 = vadd.f32 0.0, %v1424
    %1426 = vmatmul.f32.gmra.mxu0 %v1267
    %v1427 = vpop.f32.mrf.mxu0
    %v1428 = vadd.f32 0.0, %v1427
    %1429 = vmatmul.f32.gmra.mxu0 %v1269
    %v1430 = vpop.f32.mrf.mxu0
    %v1431 = vadd.f32 0.0, %v1430
    %1432 = vmatmul.f32.gmra.mxu0 %v1271
    %v1433 = vpop.f32.mrf.mxu0
    %v1434 = vadd.f32 0.0, %v1433
    %1435 = vmatmul.f32.gmra.mxu0 %v1273
    %v1436 = vpop.f32.mrf.mxu0
    %v1437 = vadd.f32 0.0, %v1436
    %1438 = vmatmul.f32.gmra.mxu0 %v1275
    %v1439 = vpop.f32.mrf.mxu0
    %v1440 = vadd.f32 0.0, %v1439
    %1441 = vmatmul.f32.gmra.mxu0 %v1277
    %v1442 = vpop.f32.mrf.mxu0
    %v1443 = vadd.f32 0.0, %v1442
    %1444 = vmatmul.f32.gmra.mxu0 %v1279
    %v1445 = vpop.f32.mrf.mxu0
    %v1446 = vadd.f32 0.0, %v1445
    %1447 = vmatmul.f32.gmra.mxu0 %v1281
    %v1448 = vpop.f32.mrf.mxu0
    %v1449 = vadd.f32 0.0, %v1448
    %1450 = vmatmul.f32.gmra.mxu0 %v1283
    %v1451 = vpop.f32.mrf.mxu0
    %v1452 = vadd.f32 0.0, %v1451
    %1453 = vmatmul.f32.gmra.mxu0 %v1285
    %v1454 = vpop.f32.mrf.mxu0
    %v1455 = vadd.f32 0.0, %v1454
    %1456 = vmatmul.f32.gmra.mxu0 %v1287
    %v1457 = vpop.f32.mrf.mxu0
    %v1458 = vadd.f32 0.0, %v1457
    %1459 = vmatmul.f32.gmra.mxu0 %v1289
    %v1460 = vpop.f32.mrf.mxu0
    %v1461 = vadd.f32 0.0, %v1460
    %1462 = vmatmul.f32.gmra.mxu0 %v1291
    %v1463 = vpop.f32.mrf.mxu0
    %v1464 = vadd.f32 0.0, %v1463
    %1465 = vmatmul.f32.gmra.mxu0 %v1293
    %v1466 = vpop.f32.mrf.mxu0
    %v1467 = vadd.f32 0.0, %v1466
    %1468 = vmatmul.f32.gmra.mxu0 %v1295
    %v1469 = vpop.f32.mrf.mxu0
    %v1470 = vadd.f32 0.0, %v1469
    %1471 = vmatmul.f32.gmra.mxu0 %v1297
    %v1472 = vpop.f32.mrf.mxu0
    %v1473 = vadd.f32 0.0, %v1472
    %1474 = vmatmul.f32.gmra.mxu0 %v1299
    %v1475 = vpop.f32.mrf.mxu0
    %v1476 = vadd.f32 0.0, %v1475
    %1477 = vmatmul.f32.gmra.mxu0 %v1301
    %v1478 = vpop.f32.mrf.mxu0
    %v1479 = vadd.f32 0.0, %v1478
    %1480 = vmatmul.f32.gmra.mxu0 %v1303
    %v1481 = vpop.f32.mrf.mxu0
    %v1482 = vadd.f32 0.0, %v1481
    %1483 = vmatmul.f32.gmra.mxu0 %v1305
    %v1484 = vpop.f32.mrf.mxu0
    %v1485 = vadd.f32 0.0, %v1484
    %1486 = vmatmul.f32.gmra.mxu0 %v1307
    %v1487 = vpop.f32.mrf.mxu0
    %v1488 = vadd.f32 0.0, %v1487
    %1489 = vmatmul.f32.gmra.mxu0 %v1309
    %v1490 = vpop.f32.mrf.mxu0
    %v1491 = vadd.f32 0.0, %v1490
    %1492 = vmatmul.f32.gmra.mxu0 %v1311
    %v1493 = vpop.f32.mrf.mxu0
    %v1494 = vadd.f32 0.0, %v1493
    %1495 = vmatmul.f32.gmra.mxu0 %v1313
    %v1496 = vpop.f32.mrf.mxu0
    %v1497 = vadd.f32 0.0, %v1496
    %1498 = vmatmul.f32.gmra.mxu0 %v1315
    %v1499 = vpop.f32.mrf.mxu0
    %v1500 = vadd.f32 0.0, %v1499
    %1501 = vmatmul.f32.gmra.mxu0 %v1317
    %v1502 = vpop.f32.mrf.mxu0
    %v1503 = vadd.f32 0.0, %v1502
    %1504 = vmatmul.f32.gmra.mxu0 %v1319
    %v1505 = vpop.f32.mrf.mxu0
    %v1506 = vadd.f32 0.0, %v1505
    %1507 = vmatmul.f32.gmra.mxu0 %v1321
    %v1508 = vpop.f32.mrf.mxu0
    %v1509 = vadd.f32 0.0, %v1508
    %1510 = vmatmul.f32.gmra.mxu0 %v1323
    %v1511 = vpop.f32.mrf.mxu0
    %v1512 = vadd.f32 0.0, %v1511
    %1513 = vmatmul.f32.gmra.mxu0 %v1325
    %v1514 = vpop.f32.mrf.mxu0
    %v1515 = vadd.f32 0.0, %v1514
    %1516 = vmatmul.f32.gmra.mxu0 %v1327
    %v1517 = vpop.f32.mrf.mxu0
    %v1518 = vadd.f32 0.0, %v1517
    %1519 = vmatmul.f32.gmra.mxu0 %v1329
    %v1520 = vpop.f32.mrf.mxu0
    %v1521 = vadd.f32 0.0, %v1520
    %1522 = vmatmul.f32.gmra.mxu0 %v1331
    %v1523 = vpop.f32.mrf.mxu0
    %v1524 = vadd.f32 0.0, %v1523
    %1525 = vmatmul.f32.gmra.mxu0 %v1333
    %v1526 = vpop.f32.mrf.mxu0
    %v1527 = vadd.f32 0.0, %v1526
    %1528 = vmatmul.f32.gmra.mxu0 %v1335
    %v1529 = vpop.f32.mrf.mxu0
    %v1530 = vadd.f32 0.0, %v1529
    %1531 = vmatmul.f32.gmra.mxu0 %v1337
    %v1532 = vpop.f32.mrf.mxu0
    %v1533 = vadd.f32 0.0, %v1532
    %1534 = vmatmul.f32.gmra.mxu0 %v1339
    %v1535 = vpop.f32.mrf.mxu0
    %v1536 = vadd.f32 0.0, %v1535
    %1537 = vmatmul.f32.gmra.mxu0 %v1341
    %v1538 = vpop.f32.mrf.mxu0
    %v1539 = vadd.f32 0.0, %v1538
    %1540 = vmatmul.f32.gmra.mxu0 %v1343
    %v1541 = vpop.f32.mrf.mxu0
    %v1542 = vadd.f32 0.0, %v1541
    %1543 = vmatmul.f32.gmra.mxu0 %v1345
    %v1544 = vpop.f32.mrf.mxu0
    %v1545 = vadd.f32 0.0, %v1544
    %1546 = vmatmul.f32.gmra.mxu0 %v1347
    %v1547 = vpop.f32.mrf.mxu0
    %v1548 = vadd.f32 0.0, %v1547
    %1549 = vmatmul.f32.gmra.mxu0 %v1349
    %v1550 = vpop.f32.mrf.mxu0
    %v1551 = vadd.f32 0.0, %v1550
    %1552 = vmatmul.f32.gmra.mxu0 %v1351
    %v1553 = vpop.f32.mrf.mxu0
    %v1554 = vadd.f32 0.0, %v1553
    %1555 = vmatmul.f32.gmra.mxu0 %v1353
    %v1556 = vpop.f32.mrf.mxu0
    %v1557 = vadd.f32 0.0, %v1556
    %1558 = vmatmul.f32.gmra.mxu0 %v1355
    %v1559 = vpop.f32.mrf.mxu0
    %v1560 = vadd.f32 0.0, %v1559
    %1561 = vmatmul.f32.gmra.mxu0 %v1357
    %v1562 = vpop.f32.mrf.mxu0
    %v1563 = vadd.f32 0.0, %v1562
    %1564 = vmatmul.f32.gmra.mxu0 %v1359
    %v1565 = vpop.f32.mrf.mxu0
    %v1566 = vadd.f32 0.0, %v1565
    %1567 = vmatmul.f32.gmra.mxu0 %v1361
    %v1568 = vpop.f32.mrf.mxu0
    %v1569 = vadd.f32 0.0, %v1568
    %1570 = vmatmul.f32.gmra.mxu0 %v1363
    %v1571 = vpop.f32.mrf.mxu0
    %v1572 = vadd.f32 0.0, %v1571
    %1573 = vmatmul.f32.gmra.mxu0 %v1365
    %v1574 = vpop.f32.mrf.mxu0
    %v1575 = vadd.f32 0.0, %v1574
    %1576 = vmatmul.f32.gmra.mxu0 %v1367
    %v1577 = vpop.f32.mrf.mxu0
    %v1578 = vadd.f32 0.0, %v1577
    %1579 = vmatmul.f32.gmra.mxu0 %v1369
    %v1580 = vpop.f32.mrf.mxu0
    %v1581 = vadd.f32 0.0, %v1580
    %1582 = vdwg.mxu0
    %v1583 = vadd.f32 %v889, %v1392
    %v1584 = vadd.f32 %v892, %v1395
    %v1585 = vadd.f32 %v895, %v1398
    %v1586 = vadd.f32 %v898, %v1401
    %v1587 = vadd.f32 %v901, %v1404
    %v1588 = vadd.f32 %v904, %v1407
    %v1589 = vadd.f32 %v907, %v1410
    %v1590 = vadd.f32 %v910, %v1413
    %v1591 = vadd.f32 %v913, %v1416
    %v1592 = vadd.f32 %v916, %v1419
    %v1593 = vadd.f32 %v919, %v1422
    %v1594 = vadd.f32 %v922, %v1425
    %v1595 = vadd.f32 %v925, %v1428
    %v1596 = vadd.f32 %v928, %v1431
    %v1597 = vadd.f32 %v931, %v1434
    %v1598 = vadd.f32 %v934, %v1437
    %v1599 = vadd.f32 %v937, %v1440
    %v1600 = vadd.f32 %v940, %v1443
    %v1601 = vadd.f32 %v943, %v1446
    %v1602 = vadd.f32 %v946, %v1449
    %v1603 = vadd.f32 %v949, %v1452
    %v1604 = vadd.f32 %v952, %v1455
    %v1605 = vadd.f32 %v955, %v1458
    %v1606 = vadd.f32 %v958, %v1461
    %v1607 = vadd.f32 %v961, %v1464
    %v1608 = vadd.f32 %v964, %v1467
    %v1609 = vadd.f32 %v967, %v1470
    %v1610 = vadd.f32 %v970, %v1473
    %v1611 = vadd.f32 %v973, %v1476
    %v1612 = vadd.f32 %v976, %v1479
    %v1613 = vadd.f32 %v979, %v1482
    %v1614 = vadd.f32 %v982, %v1485
    %v1615 = vadd.f32 %v985, %v1488
    %v1616 = vadd.f32 %v988, %v1491
    %v1617 = vadd.f32 %v991, %v1494
    %v1618 = vadd.f32 %v994, %v1497
    %v1619 = vadd.f32 %v997, %v1500
    %v1620 = vadd.f32 %v1000, %v1503
    %v1621 = vadd.f32 %v1003, %v1506
    %v1622 = vadd.f32 %v1006, %v1509
    %v1623 = vadd.f32 %v1009, %v1512
    %v1624 = vadd.f32 %v1012, %v1515
    %v1625 = vadd.f32 %v1015, %v1518
    %v1626 = vadd.f32 %v1018, %v1521
    %v1627 = vadd.f32 %v1021, %v1524
    %v1628 = vadd.f32 %v1024, %v1527
    %v1629 = vadd.f32 %v1027, %v1530
    %v1630 = vadd.f32 %v1030, %v1533
    %v1631 = vadd.f32 %v1033, %v1536
    %v1632 = vadd.f32 %v1036, %v1539
    %v1633 = vadd.f32 %v1039, %v1542
    %v1634 = vadd.f32 %v1042, %v1545
    %v1635 = vadd.f32 %v1045, %v1548
    %v1636 = vadd.f32 %v1048, %v1551
    %v1637 = vadd.f32 %v1051, %v1554
    %v1638 = vadd.f32 %v1054, %v1557
    %v1639 = vadd.f32 %v1057, %v1560
    %v1640 = vadd.f32 %v1060, %v1563
    %v1641 = vadd.f32 %v1063, %v1566
    %v1642 = vadd.f32 %v1066, %v1569
    %v1643 = vadd.f32 %v1069, %v1572
    %v1644 = vadd.f32 %v1072, %v1575
    %v1645 = vadd.f32 %v1075, %v1578
    %v1646 = vadd.f32 %v1078, %v1581
    %s1647 = scalar_lea.vmem %s1, 12
    %v1648 = vld [vmem:[%s1647] sm:$0xf]
    %v1650 = vsel %vm398, %v78, 0
    %v1653 = vsel %vm398, %v79, 0
    %v1656 = vsel %vm398, %v132, 0
    %v1659 = vsel %vm398, %v133, 0
    %v1662 = vsel %vm527, %v1648, 0
    %1664 = vmatpush.msra.mxu0 0.0
    %1665 = vmatpush.msra.mxu0 0.0
    %1666 = vmatpush.msra.mxu0 0.0
    %1667 = vmatpush.msra.mxu0 0.0
    %1668 = vmatpush.msra.mxu0 0.0
    %1669 = vmatpush.msra.mxu0 0.0
    %1670 = vmatpush.msra.mxu0 0.0
    %1671 = vmatpush.msra.mxu0 0.0
    %1672 = vmatpush.msra.mxu0 0.0
    %1673 = vmatpush.msra.mxu0 0.0
    %1674 = vmatpush.msra.mxu0 0.0
    %1675 = vmatpush.msra.mxu0 0.0
    %1676 = vmatpush.msra.mxu0 0.0
    %1677 = vmatpush.msra.mxu0 0.0
    %1678 = vmatpush.msra.mxu0 0.0
    %1679 = vmatpush.msra.mxu0 %v1662
    %1680 = vmatmul.f32.gmra.mxu0 %v744
    %v1681 = vpop.f32.mrf.mxu0
    %v1682 = vadd.f32 0.0, %v1681
    %1683 = vmatmul.f32.gmra.mxu0 %v746
    %v1684 = vpop.f32.mrf.mxu0
    %v1685 = vadd.f32 0.0, %v1684
    %1686 = vmatmul.f32.gmra.mxu0 %v748
    %v1687 = vpop.f32.mrf.mxu0
    %v1688 = vadd.f32 0.0, %v1687
    %1689 = vmatmul.f32.gmra.mxu0 %v750
    %v1690 = vpop.f32.mrf.mxu0
    %v1691 = vadd.f32 0.0, %v1690
    %1692 = vmatmul.f32.gmra.mxu0 %v752
    %v1693 = vpop.f32.mrf.mxu0
    %v1694 = vadd.f32 0.0, %v1693
    %1695 = vmatmul.f32.gmra.mxu0 %v754
    %v1696 = vpop.f32.mrf.mxu0
    %v1697 = vadd.f32 0.0, %v1696
    %1698 = vmatmul.f32.gmra.mxu0 %v756
    %v1699 = vpop.f32.mrf.mxu0
    %v1700 = vadd.f32 0.0, %v1699
    %1701 = vmatmul.f32.gmra.mxu0 %v758
    %v1702 = vpop.f32.mrf.mxu0
    %v1703 = vadd.f32 0.0, %v1702
    %1704 = vmatmul.f32.gmra.mxu0 %v760
    %v1705 = vpop.f32.mrf.mxu0
    %v1706 = vadd.f32 0.0, %v1705
    %1707 = vmatmul.f32.gmra.mxu0 %v762
    %v1708 = vpop.f32.mrf.mxu0
    %v1709 = vadd.f32 0.0, %v1708
    %1710 = vmatmul.f32.gmra.mxu0 %v764
    %v1711 = vpop.f32.mrf.mxu0
    %v1712 = vadd.f32 0.0, %v1711
    %1713 = vmatmul.f32.gmra.mxu0 %v766
    %v1714 = vpop.f32.mrf.mxu0
    %v1715 = vadd.f32 0.0, %v1714
    %1716 = vmatmul.f32.gmra.mxu0 %v768
    %v1717 = vpop.f32.mrf.mxu0
    %v1718 = vadd.f32 0.0, %v1717
    %1719 = vmatmul.f32.gmra.mxu0 %v770
    %v1720 = vpop.f32.mrf.mxu0
    %v1721 = vadd.f32 0.0, %v1720
    %1722 = vmatmul.f32.gmra.mxu0 %v772
    %v1723 = vpop.f32.mrf.mxu0
    %v1724 = vadd.f32 0.0, %v1723
    %1725 = vmatmul.f32.gmra.mxu0 %v774
    %v1726 = vpop.f32.mrf.mxu0
    %v1727 = vadd.f32 0.0, %v1726
    %1728 = vmatmul.f32.gmra.mxu0 %v776
    %v1729 = vpop.f32.mrf.mxu0
    %v1730 = vadd.f32 0.0, %v1729
    %1731 = vmatmul.f32.gmra.mxu0 %v778
    %v1732 = vpop.f32.mrf.mxu0
    %v1733 = vadd.f32 0.0, %v1732
    %1734 = vmatmul.f32.gmra.mxu0 %v780
    %v1735 = vpop.f32.mrf.mxu0
    %v1736 = vadd.f32 0.0, %v1735
    %1737 = vmatmul.f32.gmra.mxu0 %v782
    %v1738 = vpop.f32.mrf.mxu0
    %v1739 = vadd.f32 0.0, %v1738
    %1740 = vmatmul.f32.gmra.mxu0 %v784
    %v1741 = vpop.f32.mrf.mxu0
    %v1742 = vadd.f32 0.0, %v1741
    %1743 = vmatmul.f32.gmra.mxu0 %v786
    %v1744 = vpop.f32.mrf.mxu0
    %v1745 = vadd.f32 0.0, %v1744
    %1746 = vmatmul.f32.gmra.mxu0 %v788
    %v1747 = vpop.f32.mrf.mxu0
    %v1748 = vadd.f32 0.0, %v1747
    %1749 = vmatmul.f32.gmra.mxu0 %v790
    %v1750 = vpop.f32.mrf.mxu0
    %v1751 = vadd.f32 0.0, %v1750
    %1752 = vmatmul.f32.gmra.mxu0 %v792
    %v1753 = vpop.f32.mrf.mxu0
    %v1754 = vadd.f32 0.0, %v1753
    %1755 = vmatmul.f32.gmra.mxu0 %v794
    %v1756 = vpop.f32.mrf.mxu0
    %v1757 = vadd.f32 0.0, %v1756
    %1758 = vmatmul.f32.gmra.mxu0 %v796
    %v1759 = vpop.f32.mrf.mxu0
    %v1760 = vadd.f32 0.0, %v1759
    %1761 = vmatmul.f32.gmra.mxu0 %v798
    %v1762 = vpop.f32.mrf.mxu0
    %v1763 = vadd.f32 0.0, %v1762
    %1764 = vmatmul.f32.gmra.mxu0 %v800
    %v1765 = vpop.f32.mrf.mxu0
    %v1766 = vadd.f32 0.0, %v1765
    %1767 = vmatmul.f32.gmra.mxu0 %v802
    %v1768 = vpop.f32.mrf.mxu0
    %v1769 = vadd.f32 0.0, %v1768
    %1770 = vmatmul.f32.gmra.mxu0 %v1650
    %v1771 = vpop.f32.mrf.mxu0
    %v1772 = vadd.f32 0.0, %v1771
    %1773 = vmatmul.f32.gmra.mxu0 %v1653
    %v1774 = vpop.f32.mrf.mxu0
    %v1775 = vadd.f32 0.0, %v1774
    %1776 = vmatmul.f32.gmra.mxu0 %v808
    %v1777 = vpop.f32.mrf.mxu0
    %v1778 = vadd.f32 0.0, %v1777
    %1779 = vmatmul.f32.gmra.mxu0 %v810
    %v1780 = vpop.f32.mrf.mxu0
    %v1781 = vadd.f32 0.0, %v1780
    %1782 = vmatmul.f32.gmra.mxu0 %v812
    %v1783 = vpop.f32.mrf.mxu0
    %v1784 = vadd.f32 0.0, %v1783
    %1785 = vmatmul.f32.gmra.mxu0 %v814
    %v1786 = vpop.f32.mrf.mxu0
    %v1787 = vadd.f32 0.0, %v1786
    %1788 = vmatmul.f32.gmra.mxu0 %v816
    %v1789 = vpop.f32.mrf.mxu0
    %v1790 = vadd.f32 0.0, %v1789
    %1791 = vmatmul.f32.gmra.mxu0 %v818
    %v1792 = vpop.f32.mrf.mxu0
    %v1793 = vadd.f32 0.0, %v1792
    %1794 = vmatmul.f32.gmra.mxu0 %v820
    %v1795 = vpop.f32.mrf.mxu0
    %v1796 = vadd.f32 0.0, %v1795
    %1797 = vmatmul.f32.gmra.mxu0 %v822
    %v1798 = vpop.f32.mrf.mxu0
    %v1799 = vadd.f32 0.0, %v1798
    %1800 = vmatmul.f32.gmra.mxu0 %v824
    %v1801 = vpop.f32.mrf.mxu0
    %v1802 = vadd.f32 0.0, %v1801
    %1803 = vmatmul.f32.gmra.mxu0 %v826
    %v1804 = vpop.f32.mrf.mxu0
    %v1805 = vadd.f32 0.0, %v1804
    %1806 = vmatmul.f32.gmra.mxu0 %v828
    %v1807 = vpop.f32.mrf.mxu0
    %v1808 = vadd.f32 0.0, %v1807
    %1809 = vmatmul.f32.gmra.mxu0 %v830
    %v1810 = vpop.f32.mrf.mxu0
    %v1811 = vadd.f32 0.0, %v1810
    %1812 = vmatmul.f32.gmra.mxu0 %v832
    %v1813 = vpop.f32.mrf.mxu0
    %v1814 = vadd.f32 0.0, %v1813
    %1815 = vmatmul.f32.gmra.mxu0 %v834
    %v1816 = vpop.f32.mrf.mxu0
    %v1817 = vadd.f32 0.0, %v1816
    %1818 = vmatmul.f32.gmra.mxu0 %v836
    %v1819 = vpop.f32.mrf.mxu0
    %v1820 = vadd.f32 0.0, %v1819
    %1821 = vmatmul.f32.gmra.mxu0 %v838
    %v1822 = vpop.f32.mrf.mxu0
    %v1823 = vadd.f32 0.0, %v1822
    %1824 = vmatmul.f32.gmra.mxu0 %v840
    %v1825 = vpop.f32.mrf.mxu0
    %v1826 = vadd.f32 0.0, %v1825
    %1827 = vmatmul.f32.gmra.mxu0 %v842
    %v1828 = vpop.f32.mrf.mxu0
    %v1829 = vadd.f32 0.0, %v1828
    %1830 = vmatmul.f32.gmra.mxu0 %v844
    %v1831 = vpop.f32.mrf.mxu0
    %v1832 = vadd.f32 0.0, %v1831
    %1833 = vmatmul.f32.gmra.mxu0 %v846
    %v1834 = vpop.f32.mrf.mxu0
    %v1835 = vadd.f32 0.0, %v1834
    %1836 = vmatmul.f32.gmra.mxu0 %v848
    %v1837 = vpop.f32.mrf.mxu0
    %v1838 = vadd.f32 0.0, %v1837
    %1839 = vmatmul.f32.gmra.mxu0 %v850
    %v1840 = vpop.f32.mrf.mxu0
    %v1841 = vadd.f32 0.0, %v1840
    %1842 = vmatmul.f32.gmra.mxu0 %v852
    %v1843 = vpop.f32.mrf.mxu0
    %v1844 = vadd.f32 0.0, %v1843
    %1845 = vmatmul.f32.gmra.mxu0 %v854
    %v1846 = vpop.f32.mrf.mxu0
    %v1847 = vadd.f32 0.0, %v1846
    %1848 = vmatmul.f32.gmra.mxu0 %v856
    %v1849 = vpop.f32.mrf.mxu0
    %v1850 = vadd.f32 0.0, %v1849
    %1851 = vmatmul.f32.gmra.mxu0 %v858
    %v1852 = vpop.f32.mrf.mxu0
    %v1853 = vadd.f32 0.0, %v1852
    %1854 = vmatmul.f32.gmra.mxu0 %v860
    %v1855 = vpop.f32.mrf.mxu0
    %v1856 = vadd.f32 0.0, %v1855
    %1857 = vmatmul.f32.gmra.mxu0 %v862
    %v1858 = vpop.f32.mrf.mxu0
    %v1859 = vadd.f32 0.0, %v1858
    %1860 = vmatmul.f32.gmra.mxu0 %v864
    %v1861 = vpop.f32.mrf.mxu0
    %v1862 = vadd.f32 0.0, %v1861
    %1863 = vmatmul.f32.gmra.mxu0 %v866
    %v1864 = vpop.f32.mrf.mxu0
    %v1865 = vadd.f32 0.0, %v1864
    %1866 = vmatmul.f32.gmra.mxu0 %v1656
    %v1867 = vpop.f32.mrf.mxu0
    %v1868 = vadd.f32 0.0, %v1867
    %1869 = vmatmul.f32.gmra.mxu0 %v1659
    %v1870 = vpop.f32.mrf.mxu0
    %v1871 = vadd.f32 0.0, %v1870
    %1872 = vdwg.mxu0
    %v1873 = vadd.f32 %v1583, %v1682
    %v1874 = vadd.f32 %v1584, %v1685
    %v1875 = vadd.f32 %v1585, %v1688
    %v1876 = vadd.f32 %v1586, %v1691
    %v1877 = vadd.f32 %v1587, %v1694
    %v1878 = vadd.f32 %v1588, %v1697
    %v1879 = vadd.f32 %v1589, %v1700
    %v1880 = vadd.f32 %v1590, %v1703
    %v1881 = vadd.f32 %v1591, %v1706
    %v1882 = vadd.f32 %v1592, %v1709
    %v1883 = vadd.f32 %v1593, %v1712
    %v1884 = vadd.f32 %v1594, %v1715
    %v1885 = vadd.f32 %v1595, %v1718
    %v1886 = vadd.f32 %v1596, %v1721
    %v1887 = vadd.f32 %v1597, %v1724
    %v1888 = vadd.f32 %v1598, %v1727
    %v1889 = vadd.f32 %v1599, %v1730
    %v1890 = vadd.f32 %v1600, %v1733
    %v1891 = vadd.f32 %v1601, %v1736
    %v1892 = vadd.f32 %v1602, %v1739
    %v1893 = vadd.f32 %v1603, %v1742
    %v1894 = vadd.f32 %v1604, %v1745
    %v1895 = vadd.f32 %v1605, %v1748
    %v1896 = vadd.f32 %v1606, %v1751
    %v1897 = vadd.f32 %v1607, %v1754
    %v1898 = vadd.f32 %v1608, %v1757
    %v1899 = vadd.f32 %v1609, %v1760
    %v1900 = vadd.f32 %v1610, %v1763
    %v1901 = vadd.f32 %v1611, %v1766
    %v1902 = vadd.f32 %v1612, %v1769
    %v1903 = vadd.f32 %v1613, %v1772
    %v1904 = vadd.f32 %v1614, %v1775
    %v1905 = vadd.f32 %v1615, %v1778
    %v1906 = vadd.f32 %v1616, %v1781
    %v1907 = vadd.f32 %v1617, %v1784
    %v1908 = vadd.f32 %v1618, %v1787
    %v1909 = vadd.f32 %v1619, %v1790
    %v1910 = vadd.f32 %v1620, %v1793
    %v1911 = vadd.f32 %v1621, %v1796
    %v1912 = vadd.f32 %v1622, %v1799
    %v1913 = vadd.f32 %v1623, %v1802
    %v1914 = vadd.f32 %v1624, %v1805
    %v1915 = vadd.f32 %v1625, %v1808
    %v1916 = vadd.f32 %v1626, %v1811
    %v1917 = vadd.f32 %v1627, %v1814
    %v1918 = vadd.f32 %v1628, %v1817
    %v1919 = vadd.f32 %v1629, %v1820
    %v1920 = vadd.f32 %v1630, %v1823
    %v1921 = vadd.f32 %v1631, %v1826
    %v1922 = vadd.f32 %v1632, %v1829
    %v1923 = vadd.f32 %v1633, %v1832
    %v1924 = vadd.f32 %v1634, %v1835
    %v1925 = vadd.f32 %v1635, %v1838
    %v1926 = vadd.f32 %v1636, %v1841
    %v1927 = vadd.f32 %v1637, %v1844
    %v1928 = vadd.f32 %v1638, %v1847
    %v1929 = vadd.f32 %v1639, %v1850
    %v1930 = vadd.f32 %v1640, %v1853
    %v1931 = vadd.f32 %v1641, %v1856
    %v1932 = vadd.f32 %v1642, %v1859
    %v1933 = vadd.f32 %v1643, %v1862
    %v1934 = vadd.f32 %v1644, %v1865
    %v1935 = vadd.f32 %v1645, %v1868
    %v1936 = vadd.f32 %v1646, %v1871
    %v1939 = vrot.slane %v78, 1
    %v1940 = vrot.slane %v79, 1
    %v1941 = vsel %vm235, %v1939, %v1940
    %v1942 = vrot.slane %v80, 1
    %v1943 = vsel %vm235, %v1940, %v1942
    %v1944 = vrot.slane %v132, 1
    %v1945 = vrot.slane %v133, 1
    %v1946 = vsel %vm235, %v1944, %v1945
    %v1947 = vrot.slane %v134, 1
    %v1948 = vsel %vm235, %v1945, %v1947
    %s1949 = scalar_lea.vmem %s1, 16
    %v1950 = vld [vmem:[%s1949] sm:$0xf]
    %v1951 = vsel %vm398, %v1941, 0
    %v1953 = vsel %vm398, %v1943, 0
    %v1955 = vsel %vm398, %v1946, 0
    %v1957 = vsel %vm398, %v1948, 0
    %v1960 = vsel %vm527, %v1950, 0
    %1962 = vmatpush.msra.mxu0 0.0
    %1963 = vmatpush.msra.mxu0 0.0
    %1964 = vmatpush.msra.mxu0 0.0
    %1965 = vmatpush.msra.mxu0 0.0
    %1966 = vmatpush.msra.mxu0 0.0
    %1967 = vmatpush.msra.mxu0 0.0
    %1968 = vmatpush.msra.mxu0 0.0
    %1969 = vmatpush.msra.mxu0 0.0
    %1970 = vmatpush.msra.mxu0 0.0
    %1971 = vmatpush.msra.mxu0 0.0
    %1972 = vmatpush.msra.mxu0 0.0
    %1973 = vmatpush.msra.mxu0 0.0
    %1974 = vmatpush.msra.mxu0 0.0
    %1975 = vmatpush.msra.mxu0 0.0
    %1976 = vmatpush.msra.mxu0 0.0
    %1977 = vmatpush.msra.mxu0 %v1960
    %1978 = vmatmul.f32.gmra.mxu0 %v403
    %v1979 = vpop.f32.mrf.mxu0
    %v1980 = vadd.f32 0.0, %v1979
    %1981 = vmatmul.f32.gmra.mxu0 %v405
    %v1982 = vpop.f32.mrf.mxu0
    %v1983 = vadd.f32 0.0, %v1982
    %1984 = vmatmul.f32.gmra.mxu0 %v407
    %v1985 = vpop.f32.mrf.mxu0
    %v1986 = vadd.f32 0.0, %v1985
    %1987 = vmatmul.f32.gmra.mxu0 %v409
    %v1988 = vpop.f32.mrf.mxu0
    %v1989 = vadd.f32 0.0, %v1988
    %1990 = vmatmul.f32.gmra.mxu0 %v411
    %v1991 = vpop.f32.mrf.mxu0
    %v1992 = vadd.f32 0.0, %v1991
    %1993 = vmatmul.f32.gmra.mxu0 %v413
    %v1994 = vpop.f32.mrf.mxu0
    %v1995 = vadd.f32 0.0, %v1994
    %1996 = vmatmul.f32.gmra.mxu0 %v415
    %v1997 = vpop.f32.mrf.mxu0
    %v1998 = vadd.f32 0.0, %v1997
    %1999 = vmatmul.f32.gmra.mxu0 %v417
    %v2000 = vpop.f32.mrf.mxu0
    %v2001 = vadd.f32 0.0, %v2000
    %2002 = vmatmul.f32.gmra.mxu0 %v419
    %v2003 = vpop.f32.mrf.mxu0
    %v2004 = vadd.f32 0.0, %v2003
    %2005 = vmatmul.f32.gmra.mxu0 %v421
    %v2006 = vpop.f32.mrf.mxu0
    %v2007 = vadd.f32 0.0, %v2006
    %2008 = vmatmul.f32.gmra.mxu0 %v423
    %v2009 = vpop.f32.mrf.mxu0
    %v2010 = vadd.f32 0.0, %v2009
    %2011 = vmatmul.f32.gmra.mxu0 %v425
    %v2012 = vpop.f32.mrf.mxu0
    %v2013 = vadd.f32 0.0, %v2012
    %2014 = vmatmul.f32.gmra.mxu0 %v427
    %v2015 = vpop.f32.mrf.mxu0
    %v2016 = vadd.f32 0.0, %v2015
    %2017 = vmatmul.f32.gmra.mxu0 %v429
    %v2018 = vpop.f32.mrf.mxu0
    %v2019 = vadd.f32 0.0, %v2018
    %2020 = vmatmul.f32.gmra.mxu0 %v431
    %v2021 = vpop.f32.mrf.mxu0
    %v2022 = vadd.f32 0.0, %v2021
    %2023 = vmatmul.f32.gmra.mxu0 %v433
    %v2024 = vpop.f32.mrf.mxu0
    %v2025 = vadd.f32 0.0, %v2024
    %2026 = vmatmul.f32.gmra.mxu0 %v435
    %v2027 = vpop.f32.mrf.mxu0
    %v2028 = vadd.f32 0.0, %v2027
    %2029 = vmatmul.f32.gmra.mxu0 %v437
    %v2030 = vpop.f32.mrf.mxu0
    %v2031 = vadd.f32 0.0, %v2030
    %2032 = vmatmul.f32.gmra.mxu0 %v439
    %v2033 = vpop.f32.mrf.mxu0
    %v2034 = vadd.f32 0.0, %v2033
    %2035 = vmatmul.f32.gmra.mxu0 %v441
    %v2036 = vpop.f32.mrf.mxu0
    %v2037 = vadd.f32 0.0, %v2036
    %2038 = vmatmul.f32.gmra.mxu0 %v443
    %v2039 = vpop.f32.mrf.mxu0
    %v2040 = vadd.f32 0.0, %v2039
    %2041 = vmatmul.f32.gmra.mxu0 %v445
    %v2042 = vpop.f32.mrf.mxu0
    %v2043 = vadd.f32 0.0, %v2042
    %2044 = vmatmul.f32.gmra.mxu0 %v447
    %v2045 = vpop.f32.mrf.mxu0
    %v2046 = vadd.f32 0.0, %v2045
    %2047 = vmatmul.f32.gmra.mxu0 %v449
    %v2048 = vpop.f32.mrf.mxu0
    %v2049 = vadd.f32 0.0, %v2048
    %2050 = vmatmul.f32.gmra.mxu0 %v451
    %v2051 = vpop.f32.mrf.mxu0
    %v2052 = vadd.f32 0.0, %v2051
    %2053 = vmatmul.f32.gmra.mxu0 %v453
    %v2054 = vpop.f32.mrf.mxu0
    %v2055 = vadd.f32 0.0, %v2054
    %2056 = vmatmul.f32.gmra.mxu0 %v455
    %v2057 = vpop.f32.mrf.mxu0
    %v2058 = vadd.f32 0.0, %v2057
    %2059 = vmatmul.f32.gmra.mxu0 %v457
    %v2060 = vpop.f32.mrf.mxu0
    %v2061 = vadd.f32 0.0, %v2060
    %2062 = vmatmul.f32.gmra.mxu0 %v459
    %v2063 = vpop.f32.mrf.mxu0
    %v2064 = vadd.f32 0.0, %v2063
    %2065 = vmatmul.f32.gmra.mxu0 %v461
    %v2066 = vpop.f32.mrf.mxu0
    %v2067 = vadd.f32 0.0, %v2066
    %2068 = vmatmul.f32.gmra.mxu0 %v1951
    %v2069 = vpop.f32.mrf.mxu0
    %v2070 = vadd.f32 0.0, %v2069
    %2071 = vmatmul.f32.gmra.mxu0 %v1953
    %v2072 = vpop.f32.mrf.mxu0
    %v2073 = vadd.f32 0.0, %v2072
    %2074 = vmatmul.f32.gmra.mxu0 %v467
    %v2075 = vpop.f32.mrf.mxu0
    %v2076 = vadd.f32 0.0, %v2075
    %2077 = vmatmul.f32.gmra.mxu0 %v469
    %v2078 = vpop.f32.mrf.mxu0
    %v2079 = vadd.f32 0.0, %v2078
    %2080 = vmatmul.f32.gmra.mxu0 %v471
    %v2081 = vpop.f32.mrf.mxu0
    %v2082 = vadd.f32 0.0, %v2081
    %2083 = vmatmul.f32.gmra.mxu0 %v473
    %v2084 = vpop.f32.mrf.mxu0
    %v2085 = vadd.f32 0.0, %v2084
    %2086 = vmatmul.f32.gmra.mxu0 %v475
    %v2087 = vpop.f32.mrf.mxu0
    %v2088 = vadd.f32 0.0, %v2087
    %2089 = vmatmul.f32.gmra.mxu0 %v477
    %v2090 = vpop.f32.mrf.mxu0
    %v2091 = vadd.f32 0.0, %v2090
    %2092 = vmatmul.f32.gmra.mxu0 %v479
    %v2093 = vpop.f32.mrf.mxu0
    %v2094 = vadd.f32 0.0, %v2093
    %2095 = vmatmul.f32.gmra.mxu0 %v481
    %v2096 = vpop.f32.mrf.mxu0
    %v2097 = vadd.f32 0.0, %v2096
    %2098 = vmatmul.f32.gmra.mxu0 %v483
    %v2099 = vpop.f32.mrf.mxu0
    %v2100 = vadd.f32 0.0, %v2099
    %2101 = vmatmul.f32.gmra.mxu0 %v485
    %v2102 = vpop.f32.mrf.mxu0
    %v2103 = vadd.f32 0.0, %v2102
    %2104 = vmatmul.f32.gmra.mxu0 %v487
    %v2105 = vpop.f32.mrf.mxu0
    %v2106 = vadd.f32 0.0, %v2105
    %2107 = vmatmul.f32.gmra.mxu0 %v489
    %v2108 = vpop.f32.mrf.mxu0
    %v2109 = vadd.f32 0.0, %v2108
    %2110 = vmatmul.f32.gmra.mxu0 %v491
    %v2111 = vpop.f32.mrf.mxu0
    %v2112 = vadd.f32 0.0, %v2111
    %2113 = vmatmul.f32.gmra.mxu0 %v493
    %v2114 = vpop.f32.mrf.mxu0
    %v2115 = vadd.f32 0.0, %v2114
    %2116 = vmatmul.f32.gmra.mxu0 %v495
    %v2117 = vpop.f32.mrf.mxu0
    %v2118 = vadd.f32 0.0, %v2117
    %2119 = vmatmul.f32.gmra.mxu0 %v497
    %v2120 = vpop.f32.mrf.mxu0
    %v2121 = vadd.f32 0.0, %v2120
    %2122 = vmatmul.f32.gmra.mxu0 %v499
    %v2123 = vpop.f32.mrf.mxu0
    %v2124 = vadd.f32 0.0, %v2123
    %2125 = vmatmul.f32.gmra.mxu0 %v501
    %v2126 = vpop.f32.mrf.mxu0
    %v2127 = vadd.f32 0.0, %v2126
    %2128 = vmatmul.f32.gmra.mxu0 %v503
    %v2129 = vpop.f32.mrf.mxu0
    %v2130 = vadd.f32 0.0, %v2129
    %2131 = vmatmul.f32.gmra.mxu0 %v505
    %v2132 = vpop.f32.mrf.mxu0
    %v2133 = vadd.f32 0.0, %v2132
    %2134 = vmatmul.f32.gmra.mxu0 %v507
    %v2135 = vpop.f32.mrf.mxu0
    %v2136 = vadd.f32 0.0, %v2135
    %2137 = vmatmul.f32.gmra.mxu0 %v509
    %v2138 = vpop.f32.mrf.mxu0
    %v2139 = vadd.f32 0.0, %v2138
    %2140 = vmatmul.f32.gmra.mxu0 %v511
    %v2141 = vpop.f32.mrf.mxu0
    %v2142 = vadd.f32 0.0, %v2141
    %2143 = vmatmul.f32.gmra.mxu0 %v513
    %v2144 = vpop.f32.mrf.mxu0
    %v2145 = vadd.f32 0.0, %v2144
    %2146 = vmatmul.f32.gmra.mxu0 %v515
    %v2147 = vpop.f32.mrf.mxu0
    %v2148 = vadd.f32 0.0, %v2147
    %2149 = vmatmul.f32.gmra.mxu0 %v517
    %v2150 = vpop.f32.mrf.mxu0
    %v2151 = vadd.f32 0.0, %v2150
    %2152 = vmatmul.f32.gmra.mxu0 %v519
    %v2153 = vpop.f32.mrf.mxu0
    %v2154 = vadd.f32 0.0, %v2153
    %2155 = vmatmul.f32.gmra.mxu0 %v521
    %v2156 = vpop.f32.mrf.mxu0
    %v2157 = vadd.f32 0.0, %v2156
    %2158 = vmatmul.f32.gmra.mxu0 %v523
    %v2159 = vpop.f32.mrf.mxu0
    %v2160 = vadd.f32 0.0, %v2159
    %2161 = vmatmul.f32.gmra.mxu0 %v525
    %v2162 = vpop.f32.mrf.mxu0
    %v2163 = vadd.f32 0.0, %v2162
    %2164 = vmatmul.f32.gmra.mxu0 %v1955
    %v2165 = vpop.f32.mrf.mxu0
    %v2166 = vadd.f32 0.0, %v2165
    %2167 = vmatmul.f32.gmra.mxu0 %v1957
    %v2168 = vpop.f32.mrf.mxu0
    %v2169 = vadd.f32 0.0, %v2168
    %2170 = vdwg.mxu0
    %v2171 = vadd.f32 %v1873, %v1980
    %v2172 = vadd.f32 %v1874, %v1983
    %v2173 = vadd.f32 %v1875, %v1986
    %v2174 = vadd.f32 %v1876, %v1989
    %v2175 = vadd.f32 %v1877, %v1992
    %v2176 = vadd.f32 %v1878, %v1995
    %v2177 = vadd.f32 %v1879, %v1998
    %v2178 = vadd.f32 %v1880, %v2001
    %v2179 = vadd.f32 %v1881, %v2004
    %v2180 = vadd.f32 %v1882, %v2007
    %v2181 = vadd.f32 %v1883, %v2010
    %v2182 = vadd.f32 %v1884, %v2013
    %v2183 = vadd.f32 %v1885, %v2016
    %v2184 = vadd.f32 %v1886, %v2019
    %v2185 = vadd.f32 %v1887, %v2022
    %v2186 = vadd.f32 %v1888, %v2025
    %v2187 = vadd.f32 %v1889, %v2028
    %v2188 = vadd.f32 %v1890, %v2031
    %v2189 = vadd.f32 %v1891, %v2034
    %v2190 = vadd.f32 %v1892, %v2037
    %v2191 = vadd.f32 %v1893, %v2040
    %v2192 = vadd.f32 %v1894, %v2043
    %v2193 = vadd.f32 %v1895, %v2046
    %v2194 = vadd.f32 %v1896, %v2049
    %v2195 = vadd.f32 %v1897, %v2052
    %v2196 = vadd.f32 %v1898, %v2055
    %v2197 = vadd.f32 %v1899, %v2058
    %v2198 = vadd.f32 %v1900, %v2061
    %v2199 = vadd.f32 %v1901, %v2064
    %v2200 = vadd.f32 %v1902, %v2067
    %v2201 = vadd.f32 %v1903, %v2070
    %v2202 = vadd.f32 %v1904, %v2073
    %v2203 = vadd.f32 %v1905, %v2076
    %v2204 = vadd.f32 %v1906, %v2079
    %v2205 = vadd.f32 %v1907, %v2082
    %v2206 = vadd.f32 %v1908, %v2085
    %v2207 = vadd.f32 %v1909, %v2088
    %v2208 = vadd.f32 %v1910, %v2091
    %v2209 = vadd.f32 %v1911, %v2094
    %v2210 = vadd.f32 %v1912, %v2097
    %v2211 = vadd.f32 %v1913, %v2100
    %v2212 = vadd.f32 %v1914, %v2103
    %v2213 = vadd.f32 %v1915, %v2106
    %v2214 = vadd.f32 %v1916, %v2109
    %v2215 = vadd.f32 %v1917, %v2112
    %v2216 = vadd.f32 %v1918, %v2115
    %v2217 = vadd.f32 %v1919, %v2118
    %v2218 = vadd.f32 %v1920, %v2121
    %v2219 = vadd.f32 %v1921, %v2124
    %v2220 = vadd.f32 %v1922, %v2127
    %v2221 = vadd.f32 %v1923, %v2130
    %v2222 = vadd.f32 %v1924, %v2133
    %v2223 = vadd.f32 %v1925, %v2136
    %v2224 = vadd.f32 %v1926, %v2139
    %v2225 = vadd.f32 %v1927, %v2142
    %v2226 = vadd.f32 %v1928, %v2145
    %v2227 = vadd.f32 %v1929, %v2148
    %v2228 = vadd.f32 %v1930, %v2151
    %v2229 = vadd.f32 %v1931, %v2154
    %v2230 = vadd.f32 %v1932, %v2157
    %v2231 = vadd.f32 %v1933, %v2160
    %v2232 = vadd.f32 %v1934, %v2163
    %v2233 = vadd.f32 %v1935, %v2166
    %v2234 = vadd.f32 %v1936, %v2169
    %v2235 = vrot.slane %v78, 2
    %v2236 = vrot.slane %v79, 2
    %v2237 = vsel %vm1080, %v2235, %v2236
    %v2238 = vrot.slane %v80, 2
    %v2239 = vsel %vm1080, %v2236, %v2238
    %v2240 = vrot.slane %v132, 2
    %v2241 = vrot.slane %v133, 2
    %v2242 = vsel %vm1080, %v2240, %v2241
    %v2243 = vrot.slane %v134, 2
    %v2244 = vsel %vm1080, %v2241, %v2243
    %s2245 = scalar_lea.vmem %s1, 20
    %v2246 = vld [vmem:[%s2245] sm:$0xf]
    %v2247 = vsel %vm398, %v2237, 0
    %v2249 = vsel %vm398, %v2239, 0
    %v2251 = vsel %vm398, %v2242, 0
    %v2253 = vsel %vm398, %v2244, 0
    %v2256 = vsel %vm527, %v2246, 0
    %2258 = vmatpush.msra.mxu0 0.0
    %2259 = vmatpush.msra.mxu0 0.0
    %2260 = vmatpush.msra.mxu0 0.0
    %2261 = vmatpush.msra.mxu0 0.0
    %2262 = vmatpush.msra.mxu0 0.0
    %2263 = vmatpush.msra.mxu0 0.0
    %2264 = vmatpush.msra.mxu0 0.0
    %2265 = vmatpush.msra.mxu0 0.0
    %2266 = vmatpush.msra.mxu0 0.0
    %2267 = vmatpush.msra.mxu0 0.0
    %2268 = vmatpush.msra.mxu0 0.0
    %2269 = vmatpush.msra.mxu0 0.0
    %2270 = vmatpush.msra.mxu0 0.0
    %2271 = vmatpush.msra.mxu0 0.0
    %2272 = vmatpush.msra.mxu0 0.0
    %2273 = vmatpush.msra.mxu0 %v2256
    %2274 = vmatmul.f32.gmra.mxu0 %v1247
    %v2275 = vpop.f32.mrf.mxu0
    %v2276 = vadd.f32 0.0, %v2275
    %2277 = vmatmul.f32.gmra.mxu0 %v1249
    %v2278 = vpop.f32.mrf.mxu0
    %v2279 = vadd.f32 0.0, %v2278
    %2280 = vmatmul.f32.gmra.mxu0 %v1251
    %v2281 = vpop.f32.mrf.mxu0
    %v2282 = vadd.f32 0.0, %v2281
    %2283 = vmatmul.f32.gmra.mxu0 %v1253
    %v2284 = vpop.f32.mrf.mxu0
    %v2285 = vadd.f32 0.0, %v2284
    %2286 = vmatmul.f32.gmra.mxu0 %v1255
    %v2287 = vpop.f32.mrf.mxu0
    %v2288 = vadd.f32 0.0, %v2287
    %2289 = vmatmul.f32.gmra.mxu0 %v1257
    %v2290 = vpop.f32.mrf.mxu0
    %v2291 = vadd.f32 0.0, %v2290
    %2292 = vmatmul.f32.gmra.mxu0 %v1259
    %v2293 = vpop.f32.mrf.mxu0
    %v2294 = vadd.f32 0.0, %v2293
    %2295 = vmatmul.f32.gmra.mxu0 %v1261
    %v2296 = vpop.f32.mrf.mxu0
    %v2297 = vadd.f32 0.0, %v2296
    %2298 = vmatmul.f32.gmra.mxu0 %v1263
    %v2299 = vpop.f32.mrf.mxu0
    %v2300 = vadd.f32 0.0, %v2299
    %2301 = vmatmul.f32.gmra.mxu0 %v1265
    %v2302 = vpop.f32.mrf.mxu0
    %v2303 = vadd.f32 0.0, %v2302
    %2304 = vmatmul.f32.gmra.mxu0 %v1267
    %v2305 = vpop.f32.mrf.mxu0
    %v2306 = vadd.f32 0.0, %v2305
    %2307 = vmatmul.f32.gmra.mxu0 %v1269
    %v2308 = vpop.f32.mrf.mxu0
    %v2309 = vadd.f32 0.0, %v2308
    %2310 = vmatmul.f32.gmra.mxu0 %v1271
    %v2311 = vpop.f32.mrf.mxu0
    %v2312 = vadd.f32 0.0, %v2311
    %2313 = vmatmul.f32.gmra.mxu0 %v1273
    %v2314 = vpop.f32.mrf.mxu0
    %v2315 = vadd.f32 0.0, %v2314
    %2316 = vmatmul.f32.gmra.mxu0 %v1275
    %v2317 = vpop.f32.mrf.mxu0
    %v2318 = vadd.f32 0.0, %v2317
    %2319 = vmatmul.f32.gmra.mxu0 %v1277
    %v2320 = vpop.f32.mrf.mxu0
    %v2321 = vadd.f32 0.0, %v2320
    %2322 = vmatmul.f32.gmra.mxu0 %v1279
    %v2323 = vpop.f32.mrf.mxu0
    %v2324 = vadd.f32 0.0, %v2323
    %2325 = vmatmul.f32.gmra.mxu0 %v1281
    %v2326 = vpop.f32.mrf.mxu0
    %v2327 = vadd.f32 0.0, %v2326
    %2328 = vmatmul.f32.gmra.mxu0 %v1283
    %v2329 = vpop.f32.mrf.mxu0
    %v2330 = vadd.f32 0.0, %v2329
    %2331 = vmatmul.f32.gmra.mxu0 %v1285
    %v2332 = vpop.f32.mrf.mxu0
    %v2333 = vadd.f32 0.0, %v2332
    %2334 = vmatmul.f32.gmra.mxu0 %v1287
    %v2335 = vpop.f32.mrf.mxu0
    %v2336 = vadd.f32 0.0, %v2335
    %2337 = vmatmul.f32.gmra.mxu0 %v1289
    %v2338 = vpop.f32.mrf.mxu0
    %v2339 = vadd.f32 0.0, %v2338
    %2340 = vmatmul.f32.gmra.mxu0 %v1291
    %v2341 = vpop.f32.mrf.mxu0
    %v2342 = vadd.f32 0.0, %v2341
    %2343 = vmatmul.f32.gmra.mxu0 %v1293
    %v2344 = vpop.f32.mrf.mxu0
    %v2345 = vadd.f32 0.0, %v2344
    %2346 = vmatmul.f32.gmra.mxu0 %v1295
    %v2347 = vpop.f32.mrf.mxu0
    %v2348 = vadd.f32 0.0, %v2347
    %2349 = vmatmul.f32.gmra.mxu0 %v1297
    %v2350 = vpop.f32.mrf.mxu0
    %v2351 = vadd.f32 0.0, %v2350
    %2352 = vmatmul.f32.gmra.mxu0 %v1299
    %v2353 = vpop.f32.mrf.mxu0
    %v2354 = vadd.f32 0.0, %v2353
    %2355 = vmatmul.f32.gmra.mxu0 %v1301
    %v2356 = vpop.f32.mrf.mxu0
    %v2357 = vadd.f32 0.0, %v2356
    %2358 = vmatmul.f32.gmra.mxu0 %v1303
    %v2359 = vpop.f32.mrf.mxu0
    %v2360 = vadd.f32 0.0, %v2359
    %2361 = vmatmul.f32.gmra.mxu0 %v1305
    %v2362 = vpop.f32.mrf.mxu0
    %v2363 = vadd.f32 0.0, %v2362
    %2364 = vmatmul.f32.gmra.mxu0 %v2247
    %v2365 = vpop.f32.mrf.mxu0
    %v2366 = vadd.f32 0.0, %v2365
    %2367 = vmatmul.f32.gmra.mxu0 %v2249
    %v2368 = vpop.f32.mrf.mxu0
    %v2369 = vadd.f32 0.0, %v2368
    %2370 = vmatmul.f32.gmra.mxu0 %v1311
    %v2371 = vpop.f32.mrf.mxu0
    %v2372 = vadd.f32 0.0, %v2371
    %2373 = vmatmul.f32.gmra.mxu0 %v1313
    %v2374 = vpop.f32.mrf.mxu0
    %v2375 = vadd.f32 0.0, %v2374
    %2376 = vmatmul.f32.gmra.mxu0 %v1315
    %v2377 = vpop.f32.mrf.mxu0
    %v2378 = vadd.f32 0.0, %v2377
    %2379 = vmatmul.f32.gmra.mxu0 %v1317
    %v2380 = vpop.f32.mrf.mxu0
    %v2381 = vadd.f32 0.0, %v2380
    %2382 = vmatmul.f32.gmra.mxu0 %v1319
    %v2383 = vpop.f32.mrf.mxu0
    %v2384 = vadd.f32 0.0, %v2383
    %2385 = vmatmul.f32.gmra.mxu0 %v1321
    %v2386 = vpop.f32.mrf.mxu0
    %v2387 = vadd.f32 0.0, %v2386
    %2388 = vmatmul.f32.gmra.mxu0 %v1323
    %v2389 = vpop.f32.mrf.mxu0
    %v2390 = vadd.f32 0.0, %v2389
    %2391 = vmatmul.f32.gmra.mxu0 %v1325
    %v2392 = vpop.f32.mrf.mxu0
    %v2393 = vadd.f32 0.0, %v2392
    %2394 = vmatmul.f32.gmra.mxu0 %v1327
    %v2395 = vpop.f32.mrf.mxu0
    %v2396 = vadd.f32 0.0, %v2395
    %2397 = vmatmul.f32.gmra.mxu0 %v1329
    %v2398 = vpop.f32.mrf.mxu0
    %v2399 = vadd.f32 0.0, %v2398
    %2400 = vmatmul.f32.gmra.mxu0 %v1331
    %v2401 = vpop.f32.mrf.mxu0
    %v2402 = vadd.f32 0.0, %v2401
    %2403 = vmatmul.f32.gmra.mxu0 %v1333
    %v2404 = vpop.f32.mrf.mxu0
    %v2405 = vadd.f32 0.0, %v2404
    %2406 = vmatmul.f32.gmra.mxu0 %v1335
    %v2407 = vpop.f32.mrf.mxu0
    %v2408 = vadd.f32 0.0, %v2407
    %2409 = vmatmul.f32.gmra.mxu0 %v1337
    %v2410 = vpop.f32.mrf.mxu0
    %v2411 = vadd.f32 0.0, %v2410
    %2412 = vmatmul.f32.gmra.mxu0 %v1339
    %v2413 = vpop.f32.mrf.mxu0
    %v2414 = vadd.f32 0.0, %v2413
    %2415 = vmatmul.f32.gmra.mxu0 %v1341
    %v2416 = vpop.f32.mrf.mxu0
    %v2417 = vadd.f32 0.0, %v2416
    %2418 = vmatmul.f32.gmra.mxu0 %v1343
    %v2419 = vpop.f32.mrf.mxu0
    %v2420 = vadd.f32 0.0, %v2419
    %2421 = vmatmul.f32.gmra.mxu0 %v1345
    %v2422 = vpop.f32.mrf.mxu0
    %v2423 = vadd.f32 0.0, %v2422
    %2424 = vmatmul.f32.gmra.mxu0 %v1347
    %v2425 = vpop.f32.mrf.mxu0
    %v2426 = vadd.f32 0.0, %v2425
    %2427 = vmatmul.f32.gmra.mxu0 %v1349
    %v2428 = vpop.f32.mrf.mxu0
    %v2429 = vadd.f32 0.0, %v2428
    %2430 = vmatmul.f32.gmra.mxu0 %v1351
    %v2431 = vpop.f32.mrf.mxu0
    %v2432 = vadd.f32 0.0, %v2431
    %2433 = vmatmul.f32.gmra.mxu0 %v1353
    %v2434 = vpop.f32.mrf.mxu0
    %v2435 = vadd.f32 0.0, %v2434
    %2436 = vmatmul.f32.gmra.mxu0 %v1355
    %v2437 = vpop.f32.mrf.mxu0
    %v2438 = vadd.f32 0.0, %v2437
    %2439 = vmatmul.f32.gmra.mxu0 %v1357
    %v2440 = vpop.f32.mrf.mxu0
    %v2441 = vadd.f32 0.0, %v2440
    %2442 = vmatmul.f32.gmra.mxu0 %v1359
    %v2443 = vpop.f32.mrf.mxu0
    %v2444 = vadd.f32 0.0, %v2443
    %2445 = vmatmul.f32.gmra.mxu0 %v1361
    %v2446 = vpop.f32.mrf.mxu0
    %v2447 = vadd.f32 0.0, %v2446
    %2448 = vmatmul.f32.gmra.mxu0 %v1363
    %v2449 = vpop.f32.mrf.mxu0
    %v2450 = vadd.f32 0.0, %v2449
    %2451 = vmatmul.f32.gmra.mxu0 %v1365
    %v2452 = vpop.f32.mrf.mxu0
    %v2453 = vadd.f32 0.0, %v2452
    %2454 = vmatmul.f32.gmra.mxu0 %v1367
    %v2455 = vpop.f32.mrf.mxu0
    %v2456 = vadd.f32 0.0, %v2455
    %2457 = vmatmul.f32.gmra.mxu0 %v1369
    %v2458 = vpop.f32.mrf.mxu0
    %v2459 = vadd.f32 0.0, %v2458
    %2460 = vmatmul.f32.gmra.mxu0 %v2251
    %v2461 = vpop.f32.mrf.mxu0
    %v2462 = vadd.f32 0.0, %v2461
    %2463 = vmatmul.f32.gmra.mxu0 %v2253
    %v2464 = vpop.f32.mrf.mxu0
    %v2465 = vadd.f32 0.0, %v2464
    %2466 = vdwg.mxu0
    %v2467 = vadd.f32 %v2171, %v2276
    %v2468 = vadd.f32 %v2172, %v2279
    %v2469 = vadd.f32 %v2173, %v2282
    %v2470 = vadd.f32 %v2174, %v2285
    %v2471 = vadd.f32 %v2175, %v2288
    %v2472 = vadd.f32 %v2176, %v2291
    %v2473 = vadd.f32 %v2177, %v2294
    %v2474 = vadd.f32 %v2178, %v2297
    %v2475 = vadd.f32 %v2179, %v2300
    %v2476 = vadd.f32 %v2180, %v2303
    %v2477 = vadd.f32 %v2181, %v2306
    %v2478 = vadd.f32 %v2182, %v2309
    %v2479 = vadd.f32 %v2183, %v2312
    %v2480 = vadd.f32 %v2184, %v2315
    %v2481 = vadd.f32 %v2185, %v2318
    %v2482 = vadd.f32 %v2186, %v2321
    %v2483 = vadd.f32 %v2187, %v2324
    %v2484 = vadd.f32 %v2188, %v2327
    %v2485 = vadd.f32 %v2189, %v2330
    %v2486 = vadd.f32 %v2190, %v2333
    %v2487 = vadd.f32 %v2191, %v2336
    %v2488 = vadd.f32 %v2192, %v2339
    %v2489 = vadd.f32 %v2193, %v2342
    %v2490 = vadd.f32 %v2194, %v2345
    %v2491 = vadd.f32 %v2195, %v2348
    %v2492 = vadd.f32 %v2196, %v2351
    %v2493 = vadd.f32 %v2197, %v2354
    %v2494 = vadd.f32 %v2198, %v2357
    %v2495 = vadd.f32 %v2199, %v2360
    %v2496 = vadd.f32 %v2200, %v2363
    %v2497 = vadd.f32 %v2201, %v2366
    %v2498 = vadd.f32 %v2202, %v2369
    %v2499 = vadd.f32 %v2203, %v2372
    %v2500 = vadd.f32 %v2204, %v2375
    %v2501 = vadd.f32 %v2205, %v2378
    %v2502 = vadd.f32 %v2206, %v2381
    %v2503 = vadd.f32 %v2207, %v2384
    %v2504 = vadd.f32 %v2208, %v2387
    %v2505 = vadd.f32 %v2209, %v2390
    %v2506 = vadd.f32 %v2210, %v2393
    %v2507 = vadd.f32 %v2211, %v2396
    %v2508 = vadd.f32 %v2212, %v2399
    %v2509 = vadd.f32 %v2213, %v2402
    %v2510 = vadd.f32 %v2214, %v2405
    %v2511 = vadd.f32 %v2215, %v2408
    %v2512 = vadd.f32 %v2216, %v2411
    %v2513 = vadd.f32 %v2217, %v2414
    %v2514 = vadd.f32 %v2218, %v2417
    %v2515 = vadd.f32 %v2219, %v2420
    %v2516 = vadd.f32 %v2220, %v2423
    %v2517 = vadd.f32 %v2221, %v2426
    %v2518 = vadd.f32 %v2222, %v2429
    %v2519 = vadd.f32 %v2223, %v2432
    %v2520 = vadd.f32 %v2224, %v2435
    %v2521 = vadd.f32 %v2225, %v2438
    %v2522 = vadd.f32 %v2226, %v2441
    %v2523 = vadd.f32 %v2227, %v2444
    %v2524 = vadd.f32 %v2228, %v2447
    %v2525 = vadd.f32 %v2229, %v2450
    %v2526 = vadd.f32 %v2230, %v2453
    %v2527 = vadd.f32 %v2231, %v2456
    %v2528 = vadd.f32 %v2232, %v2459
    %v2529 = vadd.f32 %v2233, %v2462
    %v2530 = vadd.f32 %v2234, %v2465
    %s2531 = scalar_lea.vmem %s1, 24
    %v2532 = vld [vmem:[%s2531] sm:$0xf]
    %v2534 = vsel %vm398, %v81, 0
    %v2537 = vsel %vm398, %v82, 0
    %v2540 = vsel %vm398, %v135, 0
    %v2543 = vsel %vm398, %v136, 0
    %v2546 = vsel %vm527, %v2532, 0
    %2548 = vmatpush.msra.mxu0 0.0
    %2549 = vmatpush.msra.mxu0 0.0
    %2550 = vmatpush.msra.mxu0 0.0
    %2551 = vmatpush.msra.mxu0 0.0
    %2552 = vmatpush.msra.mxu0 0.0
    %2553 = vmatpush.msra.mxu0 0.0
    %2554 = vmatpush.msra.mxu0 0.0
    %2555 = vmatpush.msra.mxu0 0.0
    %2556 = vmatpush.msra.mxu0 0.0
    %2557 = vmatpush.msra.mxu0 0.0
    %2558 = vmatpush.msra.mxu0 0.0
    %2559 = vmatpush.msra.mxu0 0.0
    %2560 = vmatpush.msra.mxu0 0.0
    %2561 = vmatpush.msra.mxu0 0.0
    %2562 = vmatpush.msra.mxu0 0.0
    %2563 = vmatpush.msra.mxu0 %v2546
    %2564 = vmatmul.f32.gmra.mxu0 %v748
    %v2565 = vpop.f32.mrf.mxu0
    %v2566 = vadd.f32 0.0, %v2565
    %2567 = vmatmul.f32.gmra.mxu0 %v750
    %v2568 = vpop.f32.mrf.mxu0
    %v2569 = vadd.f32 0.0, %v2568
    %2570 = vmatmul.f32.gmra.mxu0 %v752
    %v2571 = vpop.f32.mrf.mxu0
    %v2572 = vadd.f32 0.0, %v2571
    %2573 = vmatmul.f32.gmra.mxu0 %v754
    %v2574 = vpop.f32.mrf.mxu0
    %v2575 = vadd.f32 0.0, %v2574
    %2576 = vmatmul.f32.gmra.mxu0 %v756
    %v2577 = vpop.f32.mrf.mxu0
    %v2578 = vadd.f32 0.0, %v2577
    %2579 = vmatmul.f32.gmra.mxu0 %v758
    %v2580 = vpop.f32.mrf.mxu0
    %v2581 = vadd.f32 0.0, %v2580
    %2582 = vmatmul.f32.gmra.mxu0 %v760
    %v2583 = vpop.f32.mrf.mxu0
    %v2584 = vadd.f32 0.0, %v2583
    %2585 = vmatmul.f32.gmra.mxu0 %v762
    %v2586 = vpop.f32.mrf.mxu0
    %v2587 = vadd.f32 0.0, %v2586
    %2588 = vmatmul.f32.gmra.mxu0 %v764
    %v2589 = vpop.f32.mrf.mxu0
    %v2590 = vadd.f32 0.0, %v2589
    %2591 = vmatmul.f32.gmra.mxu0 %v766
    %v2592 = vpop.f32.mrf.mxu0
    %v2593 = vadd.f32 0.0, %v2592
    %2594 = vmatmul.f32.gmra.mxu0 %v768
    %v2595 = vpop.f32.mrf.mxu0
    %v2596 = vadd.f32 0.0, %v2595
    %2597 = vmatmul.f32.gmra.mxu0 %v770
    %v2598 = vpop.f32.mrf.mxu0
    %v2599 = vadd.f32 0.0, %v2598
    %2600 = vmatmul.f32.gmra.mxu0 %v772
    %v2601 = vpop.f32.mrf.mxu0
    %v2602 = vadd.f32 0.0, %v2601
    %2603 = vmatmul.f32.gmra.mxu0 %v774
    %v2604 = vpop.f32.mrf.mxu0
    %v2605 = vadd.f32 0.0, %v2604
    %2606 = vmatmul.f32.gmra.mxu0 %v776
    %v2607 = vpop.f32.mrf.mxu0
    %v2608 = vadd.f32 0.0, %v2607
    %2609 = vmatmul.f32.gmra.mxu0 %v778
    %v2610 = vpop.f32.mrf.mxu0
    %v2611 = vadd.f32 0.0, %v2610
    %2612 = vmatmul.f32.gmra.mxu0 %v780
    %v2613 = vpop.f32.mrf.mxu0
    %v2614 = vadd.f32 0.0, %v2613
    %2615 = vmatmul.f32.gmra.mxu0 %v782
    %v2616 = vpop.f32.mrf.mxu0
    %v2617 = vadd.f32 0.0, %v2616
    %2618 = vmatmul.f32.gmra.mxu0 %v784
    %v2619 = vpop.f32.mrf.mxu0
    %v2620 = vadd.f32 0.0, %v2619
    %2621 = vmatmul.f32.gmra.mxu0 %v786
    %v2622 = vpop.f32.mrf.mxu0
    %v2623 = vadd.f32 0.0, %v2622
    %2624 = vmatmul.f32.gmra.mxu0 %v788
    %v2625 = vpop.f32.mrf.mxu0
    %v2626 = vadd.f32 0.0, %v2625
    %2627 = vmatmul.f32.gmra.mxu0 %v790
    %v2628 = vpop.f32.mrf.mxu0
    %v2629 = vadd.f32 0.0, %v2628
    %2630 = vmatmul.f32.gmra.mxu0 %v792
    %v2631 = vpop.f32.mrf.mxu0
    %v2632 = vadd.f32 0.0, %v2631
    %2633 = vmatmul.f32.gmra.mxu0 %v794
    %v2634 = vpop.f32.mrf.mxu0
    %v2635 = vadd.f32 0.0, %v2634
    %2636 = vmatmul.f32.gmra.mxu0 %v796
    %v2637 = vpop.f32.mrf.mxu0
    %v2638 = vadd.f32 0.0, %v2637
    %2639 = vmatmul.f32.gmra.mxu0 %v798
    %v2640 = vpop.f32.mrf.mxu0
    %v2641 = vadd.f32 0.0, %v2640
    %2642 = vmatmul.f32.gmra.mxu0 %v800
    %v2643 = vpop.f32.mrf.mxu0
    %v2644 = vadd.f32 0.0, %v2643
    %2645 = vmatmul.f32.gmra.mxu0 %v802
    %v2646 = vpop.f32.mrf.mxu0
    %v2647 = vadd.f32 0.0, %v2646
    %2648 = vmatmul.f32.gmra.mxu0 %v1650
    %v2649 = vpop.f32.mrf.mxu0
    %v2650 = vadd.f32 0.0, %v2649
    %2651 = vmatmul.f32.gmra.mxu0 %v1653
    %v2652 = vpop.f32.mrf.mxu0
    %v2653 = vadd.f32 0.0, %v2652
    %2654 = vmatmul.f32.gmra.mxu0 %v2534
    %v2655 = vpop.f32.mrf.mxu0
    %v2656 = vadd.f32 0.0, %v2655
    %2657 = vmatmul.f32.gmra.mxu0 %v2537
    %v2658 = vpop.f32.mrf.mxu0
    %v2659 = vadd.f32 0.0, %v2658
    %2660 = vmatmul.f32.gmra.mxu0 %v812
    %v2661 = vpop.f32.mrf.mxu0
    %v2662 = vadd.f32 0.0, %v2661
    %2663 = vmatmul.f32.gmra.mxu0 %v814
    %v2664 = vpop.f32.mrf.mxu0
    %v2665 = vadd.f32 0.0, %v2664
    %2666 = vmatmul.f32.gmra.mxu0 %v816
    %v2667 = vpop.f32.mrf.mxu0
    %v2668 = vadd.f32 0.0, %v2667
    %2669 = vmatmul.f32.gmra.mxu0 %v818
    %v2670 = vpop.f32.mrf.mxu0
    %v2671 = vadd.f32 0.0, %v2670
    %2672 = vmatmul.f32.gmra.mxu0 %v820
    %v2673 = vpop.f32.mrf.mxu0
    %v2674 = vadd.f32 0.0, %v2673
    %2675 = vmatmul.f32.gmra.mxu0 %v822
    %v2676 = vpop.f32.mrf.mxu0
    %v2677 = vadd.f32 0.0, %v2676
    %2678 = vmatmul.f32.gmra.mxu0 %v824
    %v2679 = vpop.f32.mrf.mxu0
    %v2680 = vadd.f32 0.0, %v2679
    %2681 = vmatmul.f32.gmra.mxu0 %v826
    %v2682 = vpop.f32.mrf.mxu0
    %v2683 = vadd.f32 0.0, %v2682
    %2684 = vmatmul.f32.gmra.mxu0 %v828
    %v2685 = vpop.f32.mrf.mxu0
    %v2686 = vadd.f32 0.0, %v2685
    %2687 = vmatmul.f32.gmra.mxu0 %v830
    %v2688 = vpop.f32.mrf.mxu0
    %v2689 = vadd.f32 0.0, %v2688
    %2690 = vmatmul.f32.gmra.mxu0 %v832
    %v2691 = vpop.f32.mrf.mxu0
    %v2692 = vadd.f32 0.0, %v2691
    %2693 = vmatmul.f32.gmra.mxu0 %v834
    %v2694 = vpop.f32.mrf.mxu0
    %v2695 = vadd.f32 0.0, %v2694
    %2696 = vmatmul.f32.gmra.mxu0 %v836
    %v2697 = vpop.f32.mrf.mxu0
    %v2698 = vadd.f32 0.0, %v2697
    %2699 = vmatmul.f32.gmra.mxu0 %v838
    %v2700 = vpop.f32.mrf.mxu0
    %v2701 = vadd.f32 0.0, %v2700
    %2702 = vmatmul.f32.gmra.mxu0 %v840
    %v2703 = vpop.f32.mrf.mxu0
    %v2704 = vadd.f32 0.0, %v2703
    %2705 = vmatmul.f32.gmra.mxu0 %v842
    %v2706 = vpop.f32.mrf.mxu0
    %v2707 = vadd.f32 0.0, %v2706
    %2708 = vmatmul.f32.gmra.mxu0 %v844
    %v2709 = vpop.f32.mrf.mxu0
    %v2710 = vadd.f32 0.0, %v2709
    %2711 = vmatmul.f32.gmra.mxu0 %v846
    %v2712 = vpop.f32.mrf.mxu0
    %v2713 = vadd.f32 0.0, %v2712
    %2714 = vmatmul.f32.gmra.mxu0 %v848
    %v2715 = vpop.f32.mrf.mxu0
    %v2716 = vadd.f32 0.0, %v2715
    %2717 = vmatmul.f32.gmra.mxu0 %v850
    %v2718 = vpop.f32.mrf.mxu0
    %v2719 = vadd.f32 0.0, %v2718
    %2720 = vmatmul.f32.gmra.mxu0 %v852
    %v2721 = vpop.f32.mrf.mxu0
    %v2722 = vadd.f32 0.0, %v2721
    %2723 = vmatmul.f32.gmra.mxu0 %v854
    %v2724 = vpop.f32.mrf.mxu0
    %v2725 = vadd.f32 0.0, %v2724
    %2726 = vmatmul.f32.gmra.mxu0 %v856
    %v2727 = vpop.f32.mrf.mxu0
    %v2728 = vadd.f32 0.0, %v2727
    %2729 = vmatmul.f32.gmra.mxu0 %v858
    %v2730 = vpop.f32.mrf.mxu0
    %v2731 = vadd.f32 0.0, %v2730
    %2732 = vmatmul.f32.gmra.mxu0 %v860
    %v2733 = vpop.f32.mrf.mxu0
    %v2734 = vadd.f32 0.0, %v2733
    %2735 = vmatmul.f32.gmra.mxu0 %v862
    %v2736 = vpop.f32.mrf.mxu0
    %v2737 = vadd.f32 0.0, %v2736
    %2738 = vmatmul.f32.gmra.mxu0 %v864
    %v2739 = vpop.f32.mrf.mxu0
    %v2740 = vadd.f32 0.0, %v2739
    %2741 = vmatmul.f32.gmra.mxu0 %v866
    %v2742 = vpop.f32.mrf.mxu0
    %v2743 = vadd.f32 0.0, %v2742
    %2744 = vmatmul.f32.gmra.mxu0 %v1656
    %v2745 = vpop.f32.mrf.mxu0
    %v2746 = vadd.f32 0.0, %v2745
    %2747 = vmatmul.f32.gmra.mxu0 %v1659
    %v2748 = vpop.f32.mrf.mxu0
    %v2749 = vadd.f32 0.0, %v2748
    %2750 = vmatmul.f32.gmra.mxu0 %v2540
    %v2751 = vpop.f32.mrf.mxu0
    %v2752 = vadd.f32 0.0, %v2751
    %2753 = vmatmul.f32.gmra.mxu0 %v2543
    %v2754 = vpop.f32.mrf.mxu0
    %v2755 = vadd.f32 0.0, %v2754
    %2756 = vdwg.mxu0
    %v2757 = vadd.f32 %v2467, %v2566
    %v2758 = vadd.f32 %v2468, %v2569
    %v2759 = vadd.f32 %v2469, %v2572
    %v2760 = vadd.f32 %v2470, %v2575
    %v2761 = vadd.f32 %v2471, %v2578
    %v2762 = vadd.f32 %v2472, %v2581
    %v2763 = vadd.f32 %v2473, %v2584
    %v2764 = vadd.f32 %v2474, %v2587
    %v2765 = vadd.f32 %v2475, %v2590
    %v2766 = vadd.f32 %v2476, %v2593
    %v2767 = vadd.f32 %v2477, %v2596
    %v2768 = vadd.f32 %v2478, %v2599
    %v2769 = vadd.f32 %v2479, %v2602
    %v2770 = vadd.f32 %v2480, %v2605
    %v2771 = vadd.f32 %v2481, %v2608
    %v2772 = vadd.f32 %v2482, %v2611
    %v2773 = vadd.f32 %v2483, %v2614
    %v2774 = vadd.f32 %v2484, %v2617
    %v2775 = vadd.f32 %v2485, %v2620
    %v2776 = vadd.f32 %v2486, %v2623
    %v2777 = vadd.f32 %v2487, %v2626
    %v2778 = vadd.f32 %v2488, %v2629
    %v2779 = vadd.f32 %v2489, %v2632
    %v2780 = vadd.f32 %v2490, %v2635
    %v2781 = vadd.f32 %v2491, %v2638
    %v2782 = vadd.f32 %v2492, %v2641
    %v2783 = vadd.f32 %v2493, %v2644
    %v2784 = vadd.f32 %v2494, %v2647
    %v2785 = vadd.f32 %v2495, %v2650
    %v2786 = vadd.f32 %v2496, %v2653
    %v2787 = vadd.f32 %v2497, %v2656
    %v2788 = vadd.f32 %v2498, %v2659
    %v2789 = vadd.f32 %v2499, %v2662
    %v2790 = vadd.f32 %v2500, %v2665
    %v2791 = vadd.f32 %v2501, %v2668
    %v2792 = vadd.f32 %v2502, %v2671
    %v2793 = vadd.f32 %v2503, %v2674
    %v2794 = vadd.f32 %v2504, %v2677
    %v2795 = vadd.f32 %v2505, %v2680
    %v2796 = vadd.f32 %v2506, %v2683
    %v2797 = vadd.f32 %v2507, %v2686
    %v2798 = vadd.f32 %v2508, %v2689
    %v2799 = vadd.f32 %v2509, %v2692
    %v2800 = vadd.f32 %v2510, %v2695
    %v2801 = vadd.f32 %v2511, %v2698
    %v2802 = vadd.f32 %v2512, %v2701
    %v2803 = vadd.f32 %v2513, %v2704
    %v2804 = vadd.f32 %v2514, %v2707
    %v2805 = vadd.f32 %v2515, %v2710
    %v2806 = vadd.f32 %v2516, %v2713
    %v2807 = vadd.f32 %v2517, %v2716
    %v2808 = vadd.f32 %v2518, %v2719
    %v2809 = vadd.f32 %v2519, %v2722
    %v2810 = vadd.f32 %v2520, %v2725
    %v2811 = vadd.f32 %v2521, %v2728
    %v2812 = vadd.f32 %v2522, %v2731
    %v2813 = vadd.f32 %v2523, %v2734
    %v2814 = vadd.f32 %v2524, %v2737
    %v2815 = vadd.f32 %v2525, %v2740
    %v2816 = vadd.f32 %v2526, %v2743
    %v2817 = vadd.f32 %v2527, %v2746
    %v2818 = vadd.f32 %v2528, %v2749
    %v2819 = vadd.f32 %v2529, %v2752
    %v2820 = vadd.f32 %v2530, %v2755
    %v2823 = vrot.slane %v81, 1
    %v2824 = vrot.slane %v82, 1
    %v2825 = vsel %vm235, %v2823, %v2824
    %v2826 = vrot.slane %v83, 1
    %v2827 = vsel %vm235, %v2824, %v2826
    %v2828 = vrot.slane %v135, 1
    %v2829 = vrot.slane %v136, 1
    %v2830 = vsel %vm235, %v2828, %v2829
    %v2831 = vrot.slane %v137, 1
    %v2832 = vsel %vm235, %v2829, %v2831
    %s2833 = scalar_lea.vmem %s1, 28
    %v2834 = vld [vmem:[%s2833] sm:$0xf]
    %v2835 = vsel %vm398, %v2825, 0
    %v2837 = vsel %vm398, %v2827, 0
    %v2839 = vsel %vm398, %v2830, 0
    %v2841 = vsel %vm398, %v2832, 0
    %v2844 = vsel %vm527, %v2834, 0
    %2846 = vmatpush.msra.mxu0 0.0
    %2847 = vmatpush.msra.mxu0 0.0
    %2848 = vmatpush.msra.mxu0 0.0
    %2849 = vmatpush.msra.mxu0 0.0
    %2850 = vmatpush.msra.mxu0 0.0
    %2851 = vmatpush.msra.mxu0 0.0
    %2852 = vmatpush.msra.mxu0 0.0
    %2853 = vmatpush.msra.mxu0 0.0
    %2854 = vmatpush.msra.mxu0 0.0
    %2855 = vmatpush.msra.mxu0 0.0
    %2856 = vmatpush.msra.mxu0 0.0
    %2857 = vmatpush.msra.mxu0 0.0
    %2858 = vmatpush.msra.mxu0 0.0
    %2859 = vmatpush.msra.mxu0 0.0
    %2860 = vmatpush.msra.mxu0 0.0
    %2861 = vmatpush.msra.mxu0 %v2844
    %2862 = vmatmul.f32.gmra.mxu0 %v407
    %v2863 = vpop.f32.mrf.mxu0
    %v2864 = vadd.f32 0.0, %v2863
    %2865 = vmatmul.f32.gmra.mxu0 %v409
    %v2866 = vpop.f32.mrf.mxu0
    %v2867 = vadd.f32 0.0, %v2866
    %2868 = vmatmul.f32.gmra.mxu0 %v411
    %v2869 = vpop.f32.mrf.mxu0
    %v2870 = vadd.f32 0.0, %v2869
    %2871 = vmatmul.f32.gmra.mxu0 %v413
    %v2872 = vpop.f32.mrf.mxu0
    %v2873 = vadd.f32 0.0, %v2872
    %2874 = vmatmul.f32.gmra.mxu0 %v415
    %v2875 = vpop.f32.mrf.mxu0
    %v2876 = vadd.f32 0.0, %v2875
    %2877 = vmatmul.f32.gmra.mxu0 %v417
    %v2878 = vpop.f32.mrf.mxu0
    %v2879 = vadd.f32 0.0, %v2878
    %2880 = vmatmul.f32.gmra.mxu0 %v419
    %v2881 = vpop.f32.mrf.mxu0
    %v2882 = vadd.f32 0.0, %v2881
    %2883 = vmatmul.f32.gmra.mxu0 %v421
    %v2884 = vpop.f32.mrf.mxu0
    %v2885 = vadd.f32 0.0, %v2884
    %2886 = vmatmul.f32.gmra.mxu0 %v423
    %v2887 = vpop.f32.mrf.mxu0
    %v2888 = vadd.f32 0.0, %v2887
    %2889 = vmatmul.f32.gmra.mxu0 %v425
    %v2890 = vpop.f32.mrf.mxu0
    %v2891 = vadd.f32 0.0, %v2890
    %2892 = vmatmul.f32.gmra.mxu0 %v427
    %v2893 = vpop.f32.mrf.mxu0
    %v2894 = vadd.f32 0.0, %v2893
    %2895 = vmatmul.f32.gmra.mxu0 %v429
    %v2896 = vpop.f32.mrf.mxu0
    %v2897 = vadd.f32 0.0, %v2896
    %2898 = vmatmul.f32.gmra.mxu0 %v431
    %v2899 = vpop.f32.mrf.mxu0
    %v2900 = vadd.f32 0.0, %v2899
    %2901 = vmatmul.f32.gmra.mxu0 %v433
    %v2902 = vpop.f32.mrf.mxu0
    %v2903 = vadd.f32 0.0, %v2902
    %2904 = vmatmul.f32.gmra.mxu0 %v435
    %v2905 = vpop.f32.mrf.mxu0
    %v2906 = vadd.f32 0.0, %v2905
    %2907 = vmatmul.f32.gmra.mxu0 %v437
    %v2908 = vpop.f32.mrf.mxu0
    %v2909 = vadd.f32 0.0, %v2908
    %2910 = vmatmul.f32.gmra.mxu0 %v439
    %v2911 = vpop.f32.mrf.mxu0
    %v2912 = vadd.f32 0.0, %v2911
    %2913 = vmatmul.f32.gmra.mxu0 %v441
    %v2914 = vpop.f32.mrf.mxu0
    %v2915 = vadd.f32 0.0, %v2914
    %2916 = vmatmul.f32.gmra.mxu0 %v443
    %v2917 = vpop.f32.mrf.mxu0
    %v2918 = vadd.f32 0.0, %v2917
    %2919 = vmatmul.f32.gmra.mxu0 %v445
    %v2920 = vpop.f32.mrf.mxu0
    %v2921 = vadd.f32 0.0, %v2920
    %2922 = vmatmul.f32.gmra.mxu0 %v447
    %v2923 = vpop.f32.mrf.mxu0
    %v2924 = vadd.f32 0.0, %v2923
    %2925 = vmatmul.f32.gmra.mxu0 %v449
    %v2926 = vpop.f32.mrf.mxu0
    %v2927 = vadd.f32 0.0, %v2926
    %2928 = vmatmul.f32.gmra.mxu0 %v451
    %v2929 = vpop.f32.mrf.mxu0
    %v2930 = vadd.f32 0.0, %v2929
    %2931 = vmatmul.f32.gmra.mxu0 %v453
    %v2932 = vpop.f32.mrf.mxu0
    %v2933 = vadd.f32 0.0, %v2932
    %2934 = vmatmul.f32.gmra.mxu0 %v455
    %v2935 = vpop.f32.mrf.mxu0
    %v2936 = vadd.f32 0.0, %v2935
    %2937 = vmatmul.f32.gmra.mxu0 %v457
    %v2938 = vpop.f32.mrf.mxu0
    %v2939 = vadd.f32 0.0, %v2938
    %2940 = vmatmul.f32.gmra.mxu0 %v459
    %v2941 = vpop.f32.mrf.mxu0
    %v2942 = vadd.f32 0.0, %v2941
    %2943 = vmatmul.f32.gmra.mxu0 %v461
    %v2944 = vpop.f32.mrf.mxu0
    %v2945 = vadd.f32 0.0, %v2944
    %2946 = vmatmul.f32.gmra.mxu0 %v1951
    %v2947 = vpop.f32.mrf.mxu0
    %v2948 = vadd.f32 0.0, %v2947
    %2949 = vmatmul.f32.gmra.mxu0 %v1953
    %v2950 = vpop.f32.mrf.mxu0
    %v2951 = vadd.f32 0.0, %v2950
    %2952 = vmatmul.f32.gmra.mxu0 %v2835
    %v2953 = vpop.f32.mrf.mxu0
    %v2954 = vadd.f32 0.0, %v2953
    %2955 = vmatmul.f32.gmra.mxu0 %v2837
    %v2956 = vpop.f32.mrf.mxu0
    %v2957 = vadd.f32 0.0, %v2956
    %2958 = vmatmul.f32.gmra.mxu0 %v471
    %v2959 = vpop.f32.mrf.mxu0
    %v2960 = vadd.f32 0.0, %v2959
    %2961 = vmatmul.f32.gmra.mxu0 %v473
    %v2962 = vpop.f32.mrf.mxu0
    %v2963 = vadd.f32 0.0, %v2962
    %2964 = vmatmul.f32.gmra.mxu0 %v475
    %v2965 = vpop.f32.mrf.mxu0
    %v2966 = vadd.f32 0.0, %v2965
    %2967 = vmatmul.f32.gmra.mxu0 %v477
    %v2968 = vpop.f32.mrf.mxu0
    %v2969 = vadd.f32 0.0, %v2968
    %2970 = vmatmul.f32.gmra.mxu0 %v479
    %v2971 = vpop.f32.mrf.mxu0
    %v2972 = vadd.f32 0.0, %v2971
    %2973 = vmatmul.f32.gmra.mxu0 %v481
    %v2974 = vpop.f32.mrf.mxu0
    %v2975 = vadd.f32 0.0, %v2974
    %2976 = vmatmul.f32.gmra.mxu0 %v483
    %v2977 = vpop.f32.mrf.mxu0
    %v2978 = vadd.f32 0.0, %v2977
    %2979 = vmatmul.f32.gmra.mxu0 %v485
    %v2980 = vpop.f32.mrf.mxu0
    %v2981 = vadd.f32 0.0, %v2980
    %2982 = vmatmul.f32.gmra.mxu0 %v487
    %v2983 = vpop.f32.mrf.mxu0
    %v2984 = vadd.f32 0.0, %v2983
    %2985 = vmatmul.f32.gmra.mxu0 %v489
    %v2986 = vpop.f32.mrf.mxu0
    %v2987 = vadd.f32 0.0, %v2986
    %2988 = vmatmul.f32.gmra.mxu0 %v491
    %v2989 = vpop.f32.mrf.mxu0
    %v2990 = vadd.f32 0.0, %v2989
    %2991 = vmatmul.f32.gmra.mxu0 %v493
    %v2992 = vpop.f32.mrf.mxu0
    %v2993 = vadd.f32 0.0, %v2992
    %2994 = vmatmul.f32.gmra.mxu0 %v495
    %v2995 = vpop.f32.mrf.mxu0
    %v2996 = vadd.f32 0.0, %v2995
    %2997 = vmatmul.f32.gmra.mxu0 %v497
    %v2998 = vpop.f32.mrf.mxu0
    %v2999 = vadd.f32 0.0, %v2998
    %3000 = vmatmul.f32.gmra.mxu0 %v499
    %v3001 = vpop.f32.mrf.mxu0
    %v3002 = vadd.f32 0.0, %v3001
    %3003 = vmatmul.f32.gmra.mxu0 %v501
    %v3004 = vpop.f32.mrf.mxu0
    %v3005 = vadd.f32 0.0, %v3004
    %3006 = vmatmul.f32.gmra.mxu0 %v503
    %v3007 = vpop.f32.mrf.mxu0
    %v3008 = vadd.f32 0.0, %v3007
    %3009 = vmatmul.f32.gmra.mxu0 %v505
    %v3010 = vpop.f32.mrf.mxu0
    %v3011 = vadd.f32 0.0, %v3010
    %3012 = vmatmul.f32.gmra.mxu0 %v507
    %v3013 = vpop.f32.mrf.mxu0
    %v3014 = vadd.f32 0.0, %v3013
    %3015 = vmatmul.f32.gmra.mxu0 %v509
    %v3016 = vpop.f32.mrf.mxu0
    %v3017 = vadd.f32 0.0, %v3016
    %3018 = vmatmul.f32.gmra.mxu0 %v511
    %v3019 = vpop.f32.mrf.mxu0
    %v3020 = vadd.f32 0.0, %v3019
    %3021 = vmatmul.f32.gmra.mxu0 %v513
    %v3022 = vpop.f32.mrf.mxu0
    %v3023 = vadd.f32 0.0, %v3022
    %3024 = vmatmul.f32.gmra.mxu0 %v515
    %v3025 = vpop.f32.mrf.mxu0
    %v3026 = vadd.f32 0.0, %v3025
    %3027 = vmatmul.f32.gmra.mxu0 %v517
    %v3028 = vpop.f32.mrf.mxu0
    %v3029 = vadd.f32 0.0, %v3028
    %3030 = vmatmul.f32.gmra.mxu0 %v519
    %v3031 = vpop.f32.mrf.mxu0
    %v3032 = vadd.f32 0.0, %v3031
    %3033 = vmatmul.f32.gmra.mxu0 %v521
    %v3034 = vpop.f32.mrf.mxu0
    %v3035 = vadd.f32 0.0, %v3034
    %3036 = vmatmul.f32.gmra.mxu0 %v523
    %v3037 = vpop.f32.mrf.mxu0
    %v3038 = vadd.f32 0.0, %v3037
    %3039 = vmatmul.f32.gmra.mxu0 %v525
    %v3040 = vpop.f32.mrf.mxu0
    %v3041 = vadd.f32 0.0, %v3040
    %3042 = vmatmul.f32.gmra.mxu0 %v1955
    %v3043 = vpop.f32.mrf.mxu0
    %v3044 = vadd.f32 0.0, %v3043
    %3045 = vmatmul.f32.gmra.mxu0 %v1957
    %v3046 = vpop.f32.mrf.mxu0
    %v3047 = vadd.f32 0.0, %v3046
    %3048 = vmatmul.f32.gmra.mxu0 %v2839
    %v3049 = vpop.f32.mrf.mxu0
    %v3050 = vadd.f32 0.0, %v3049
    %3051 = vmatmul.f32.gmra.mxu0 %v2841
    %v3052 = vpop.f32.mrf.mxu0
    %v3053 = vadd.f32 0.0, %v3052
    %3054 = vdwg.mxu0
    %v3055 = vadd.f32 %v2757, %v2864
    %v3056 = vadd.f32 %v2758, %v2867
    %v3057 = vadd.f32 %v2759, %v2870
    %v3058 = vadd.f32 %v2760, %v2873
    %v3059 = vadd.f32 %v2761, %v2876
    %v3060 = vadd.f32 %v2762, %v2879
    %v3061 = vadd.f32 %v2763, %v2882
    %v3062 = vadd.f32 %v2764, %v2885
    %v3063 = vadd.f32 %v2765, %v2888
    %v3064 = vadd.f32 %v2766, %v2891
    %v3065 = vadd.f32 %v2767, %v2894
    %v3066 = vadd.f32 %v2768, %v2897
    %v3067 = vadd.f32 %v2769, %v2900
    %v3068 = vadd.f32 %v2770, %v2903
    %v3069 = vadd.f32 %v2771, %v2906
    %v3070 = vadd.f32 %v2772, %v2909
    %v3071 = vadd.f32 %v2773, %v2912
    %v3072 = vadd.f32 %v2774, %v2915
    %v3073 = vadd.f32 %v2775, %v2918
    %v3074 = vadd.f32 %v2776, %v2921
    %v3075 = vadd.f32 %v2777, %v2924
    %v3076 = vadd.f32 %v2778, %v2927
    %v3077 = vadd.f32 %v2779, %v2930
    %v3078 = vadd.f32 %v2780, %v2933
    %v3079 = vadd.f32 %v2781, %v2936
    %v3080 = vadd.f32 %v2782, %v2939
    %v3081 = vadd.f32 %v2783, %v2942
    %v3082 = vadd.f32 %v2784, %v2945
    %v3083 = vadd.f32 %v2785, %v2948
    %v3084 = vadd.f32 %v2786, %v2951
    %v3085 = vadd.f32 %v2787, %v2954
    %v3086 = vadd.f32 %v2788, %v2957
    %v3087 = vadd.f32 %v2789, %v2960
    %v3088 = vadd.f32 %v2790, %v2963
    %v3089 = vadd.f32 %v2791, %v2966
    %v3090 = vadd.f32 %v2792, %v2969
    %v3091 = vadd.f32 %v2793, %v2972
    %v3092 = vadd.f32 %v2794, %v2975
    %v3093 = vadd.f32 %v2795, %v2978
    %v3094 = vadd.f32 %v2796, %v2981
    %v3095 = vadd.f32 %v2797, %v2984
    %v3096 = vadd.f32 %v2798, %v2987
    %v3097 = vadd.f32 %v2799, %v2990
    %v3098 = vadd.f32 %v2800, %v2993
    %v3099 = vadd.f32 %v2801, %v2996
    %v3100 = vadd.f32 %v2802, %v2999
    %v3101 = vadd.f32 %v2803, %v3002
    %v3102 = vadd.f32 %v2804, %v3005
    %v3103 = vadd.f32 %v2805, %v3008
    %v3104 = vadd.f32 %v2806, %v3011
    %v3105 = vadd.f32 %v2807, %v3014
    %v3106 = vadd.f32 %v2808, %v3017
    %v3107 = vadd.f32 %v2809, %v3020
    %v3108 = vadd.f32 %v2810, %v3023
    %v3109 = vadd.f32 %v2811, %v3026
    %v3110 = vadd.f32 %v2812, %v3029
    %v3111 = vadd.f32 %v2813, %v3032
    %v3112 = vadd.f32 %v2814, %v3035
    %v3113 = vadd.f32 %v2815, %v3038
    %v3114 = vadd.f32 %v2816, %v3041
    %v3115 = vadd.f32 %v2817, %v3044
    %v3116 = vadd.f32 %v2818, %v3047
    %v3117 = vadd.f32 %v2819, %v3050
    %v3118 = vadd.f32 %v2820, %v3053
    %v3119 = vrot.slane %v81, 2
    %v3120 = vrot.slane %v82, 2
    %v3121 = vsel %vm1080, %v3119, %v3120
    %v3122 = vrot.slane %v83, 2
    %v3123 = vsel %vm1080, %v3120, %v3122
    %v3124 = vrot.slane %v135, 2
    %v3125 = vrot.slane %v136, 2
    %v3126 = vsel %vm1080, %v3124, %v3125
    %v3127 = vrot.slane %v137, 2
    %v3128 = vsel %vm1080, %v3125, %v3127
    %s3129 = scalar_lea.vmem %s1, 32
    %v3130 = vld [vmem:[%s3129] sm:$0xf]
    %v3131 = vsel %vm398, %v3121, 0
    %v3133 = vsel %vm398, %v3123, 0
    %v3135 = vsel %vm398, %v3126, 0
    %v3137 = vsel %vm398, %v3128, 0
    %v3140 = vsel %vm527, %v3130, 0
    %3142 = vmatpush.msra.mxu0 0.0
    %3143 = vmatpush.msra.mxu0 0.0
    %3144 = vmatpush.msra.mxu0 0.0
    %3145 = vmatpush.msra.mxu0 0.0
    %3146 = vmatpush.msra.mxu0 0.0
    %3147 = vmatpush.msra.mxu0 0.0
    %3148 = vmatpush.msra.mxu0 0.0
    %3149 = vmatpush.msra.mxu0 0.0
    %3150 = vmatpush.msra.mxu0 0.0
    %3151 = vmatpush.msra.mxu0 0.0
    %3152 = vmatpush.msra.mxu0 0.0
    %3153 = vmatpush.msra.mxu0 0.0
    %3154 = vmatpush.msra.mxu0 0.0
    %3155 = vmatpush.msra.mxu0 0.0
    %3156 = vmatpush.msra.mxu0 0.0
    %3157 = vmatpush.msra.mxu0 %v3140
    %3158 = vmatmul.f32.gmra.mxu0 %v1251
    %v3159 = vpop.f32.mrf.mxu0
    %v3160 = vadd.f32 0.0, %v3159
    %3161 = vmatmul.f32.gmra.mxu0 %v1253
    %v3162 = vpop.f32.mrf.mxu0
    %v3163 = vadd.f32 0.0, %v3162
    %3164 = vmatmul.f32.gmra.mxu0 %v1255
    %v3165 = vpop.f32.mrf.mxu0
    %v3166 = vadd.f32 0.0, %v3165
    %3167 = vmatmul.f32.gmra.mxu0 %v1257
    %v3168 = vpop.f32.mrf.mxu0
    %v3169 = vadd.f32 0.0, %v3168
    %3170 = vmatmul.f32.gmra.mxu0 %v1259
    %v3171 = vpop.f32.mrf.mxu0
    %v3172 = vadd.f32 0.0, %v3171
    %3173 = vmatmul.f32.gmra.mxu0 %v1261
    %v3174 = vpop.f32.mrf.mxu0
    %v3175 = vadd.f32 0.0, %v3174
    %3176 = vmatmul.f32.gmra.mxu0 %v1263
    %v3177 = vpop.f32.mrf.mxu0
    %v3178 = vadd.f32 0.0, %v3177
    %3179 = vmatmul.f32.gmra.mxu0 %v1265
    %v3180 = vpop.f32.mrf.mxu0
    %v3181 = vadd.f32 0.0, %v3180
    %3182 = vmatmul.f32.gmra.mxu0 %v1267
    %v3183 = vpop.f32.mrf.mxu0
    %v3184 = vadd.f32 0.0, %v3183
    %3185 = vmatmul.f32.gmra.mxu0 %v1269
    %v3186 = vpop.f32.mrf.mxu0
    %v3187 = vadd.f32 0.0, %v3186
    %3188 = vmatmul.f32.gmra.mxu0 %v1271
    %v3189 = vpop.f32.mrf.mxu0
    %v3190 = vadd.f32 0.0, %v3189
    %3191 = vmatmul.f32.gmra.mxu0 %v1273
    %v3192 = vpop.f32.mrf.mxu0
    %v3193 = vadd.f32 0.0, %v3192
    %3194 = vmatmul.f32.gmra.mxu0 %v1275
    %v3195 = vpop.f32.mrf.mxu0
    %v3196 = vadd.f32 0.0, %v3195
    %3197 = vmatmul.f32.gmra.mxu0 %v1277
    %v3198 = vpop.f32.mrf.mxu0
    %v3199 = vadd.f32 0.0, %v3198
    %3200 = vmatmul.f32.gmra.mxu0 %v1279
    %v3201 = vpop.f32.mrf.mxu0
    %v3202 = vadd.f32 0.0, %v3201
    %3203 = vmatmul.f32.gmra.mxu0 %v1281
    %v3204 = vpop.f32.mrf.mxu0
    %v3205 = vadd.f32 0.0, %v3204
    %3206 = vmatmul.f32.gmra.mxu0 %v1283
    %v3207 = vpop.f32.mrf.mxu0
    %v3208 = vadd.f32 0.0, %v3207
    %3209 = vmatmul.f32.gmra.mxu0 %v1285
    %v3210 = vpop.f32.mrf.mxu0
    %v3211 = vadd.f32 0.0, %v3210
    %3212 = vmatmul.f32.gmra.mxu0 %v1287
    %v3213 = vpop.f32.mrf.mxu0
    %v3214 = vadd.f32 0.0, %v3213
    %3215 = vmatmul.f32.gmra.mxu0 %v1289
    %v3216 = vpop.f32.mrf.mxu0
    %v3217 = vadd.f32 0.0, %v3216
    %3218 = vmatmul.f32.gmra.mxu0 %v1291
    %v3219 = vpop.f32.mrf.mxu0
    %v3220 = vadd.f32 0.0, %v3219
    %3221 = vmatmul.f32.gmra.mxu0 %v1293
    %v3222 = vpop.f32.mrf.mxu0
    %v3223 = vadd.f32 0.0, %v3222
    %3224 = vmatmul.f32.gmra.mxu0 %v1295
    %v3225 = vpop.f32.mrf.mxu0
    %v3226 = vadd.f32 0.0, %v3225
    %3227 = vmatmul.f32.gmra.mxu0 %v1297
    %v3228 = vpop.f32.mrf.mxu0
    %v3229 = vadd.f32 0.0, %v3228
    %3230 = vmatmul.f32.gmra.mxu0 %v1299
    %v3231 = vpop.f32.mrf.mxu0
    %v3232 = vadd.f32 0.0, %v3231
    %3233 = vmatmul.f32.gmra.mxu0 %v1301
    %v3234 = vpop.f32.mrf.mxu0
    %v3235 = vadd.f32 0.0, %v3234
    %3236 = vmatmul.f32.gmra.mxu0 %v1303
    %v3237 = vpop.f32.mrf.mxu0
    %v3238 = vadd.f32 0.0, %v3237
    %3239 = vmatmul.f32.gmra.mxu0 %v1305
    %v3240 = vpop.f32.mrf.mxu0
    %v3241 = vadd.f32 0.0, %v3240
    %3242 = vmatmul.f32.gmra.mxu0 %v2247
    %v3243 = vpop.f32.mrf.mxu0
    %v3244 = vadd.f32 0.0, %v3243
    %3245 = vmatmul.f32.gmra.mxu0 %v2249
    %v3246 = vpop.f32.mrf.mxu0
    %v3247 = vadd.f32 0.0, %v3246
    %3248 = vmatmul.f32.gmra.mxu0 %v3131
    %v3249 = vpop.f32.mrf.mxu0
    %v3250 = vadd.f32 0.0, %v3249
    %3251 = vmatmul.f32.gmra.mxu0 %v3133
    %v3252 = vpop.f32.mrf.mxu0
    %v3253 = vadd.f32 0.0, %v3252
    %3254 = vmatmul.f32.gmra.mxu0 %v1315
    %v3255 = vpop.f32.mrf.mxu0
    %v3256 = vadd.f32 0.0, %v3255
    %3257 = vmatmul.f32.gmra.mxu0 %v1317
    %v3258 = vpop.f32.mrf.mxu0
    %v3259 = vadd.f32 0.0, %v3258
    %3260 = vmatmul.f32.gmra.mxu0 %v1319
    %v3261 = vpop.f32.mrf.mxu0
    %v3262 = vadd.f32 0.0, %v3261
    %3263 = vmatmul.f32.gmra.mxu0 %v1321
    %v3264 = vpop.f32.mrf.mxu0
    %v3265 = vadd.f32 0.0, %v3264
    %3266 = vmatmul.f32.gmra.mxu0 %v1323
    %v3267 = vpop.f32.mrf.mxu0
    %v3268 = vadd.f32 0.0, %v3267
    %3269 = vmatmul.f32.gmra.mxu0 %v1325
    %v3270 = vpop.f32.mrf.mxu0
    %v3271 = vadd.f32 0.0, %v3270
    %3272 = vmatmul.f32.gmra.mxu0 %v1327
    %v3273 = vpop.f32.mrf.mxu0
    %v3274 = vadd.f32 0.0, %v3273
    %3275 = vmatmul.f32.gmra.mxu0 %v1329
    %v3276 = vpop.f32.mrf.mxu0
    %v3277 = vadd.f32 0.0, %v3276
    %3278 = vmatmul.f32.gmra.mxu0 %v1331
    %v3279 = vpop.f32.mrf.mxu0
    %v3280 = vadd.f32 0.0, %v3279
    %3281 = vmatmul.f32.gmra.mxu0 %v1333
    %v3282 = vpop.f32.mrf.mxu0
    %v3283 = vadd.f32 0.0, %v3282
    %3284 = vmatmul.f32.gmra.mxu0 %v1335
    %v3285 = vpop.f32.mrf.mxu0
    %v3286 = vadd.f32 0.0, %v3285
    %3287 = vmatmul.f32.gmra.mxu0 %v1337
    %v3288 = vpop.f32.mrf.mxu0
    %v3289 = vadd.f32 0.0, %v3288
    %3290 = vmatmul.f32.gmra.mxu0 %v1339
    %v3291 = vpop.f32.mrf.mxu0
    %v3292 = vadd.f32 0.0, %v3291
    %3293 = vmatmul.f32.gmra.mxu0 %v1341
    %v3294 = vpop.f32.mrf.mxu0
    %v3295 = vadd.f32 0.0, %v3294
    %3296 = vmatmul.f32.gmra.mxu0 %v1343
    %v3297 = vpop.f32.mrf.mxu0
    %v3298 = vadd.f32 0.0, %v3297
    %3299 = vmatmul.f32.gmra.mxu0 %v1345
    %v3300 = vpop.f32.mrf.mxu0
    %v3301 = vadd.f32 0.0, %v3300
    %3302 = vmatmul.f32.gmra.mxu0 %v1347
    %v3303 = vpop.f32.mrf.mxu0
    %v3304 = vadd.f32 0.0, %v3303
    %3305 = vmatmul.f32.gmra.mxu0 %v1349
    %v3306 = vpop.f32.mrf.mxu0
    %v3307 = vadd.f32 0.0, %v3306
    %3308 = vmatmul.f32.gmra.mxu0 %v1351
    %v3309 = vpop.f32.mrf.mxu0
    %v3310 = vadd.f32 0.0, %v3309
    %3311 = vmatmul.f32.gmra.mxu0 %v1353
    %v3312 = vpop.f32.mrf.mxu0
    %v3313 = vadd.f32 0.0, %v3312
    %3314 = vmatmul.f32.gmra.mxu0 %v1355
    %v3315 = vpop.f32.mrf.mxu0
    %v3316 = vadd.f32 0.0, %v3315
    %3317 = vmatmul.f32.gmra.mxu0 %v1357
    %v3318 = vpop.f32.mrf.mxu0
    %v3319 = vadd.f32 0.0, %v3318
    %3320 = vmatmul.f32.gmra.mxu0 %v1359
    %v3321 = vpop.f32.mrf.mxu0
    %v3322 = vadd.f32 0.0, %v3321
    %3323 = vmatmul.f32.gmra.mxu0 %v1361
    %v3324 = vpop.f32.mrf.mxu0
    %v3325 = vadd.f32 0.0, %v3324
    %3326 = vmatmul.f32.gmra.mxu0 %v1363
    %v3327 = vpop.f32.mrf.mxu0
    %v3328 = vadd.f32 0.0, %v3327
    %3329 = vmatmul.f32.gmra.mxu0 %v1365
    %v3330 = vpop.f32.mrf.mxu0
    %v3331 = vadd.f32 0.0, %v3330
    %3332 = vmatmul.f32.gmra.mxu0 %v1367
    %v3333 = vpop.f32.mrf.mxu0
    %v3334 = vadd.f32 0.0, %v3333
    %3335 = vmatmul.f32.gmra.mxu0 %v1369
    %v3336 = vpop.f32.mrf.mxu0
    %v3337 = vadd.f32 0.0, %v3336
    %3338 = vmatmul.f32.gmra.mxu0 %v2251
    %v3339 = vpop.f32.mrf.mxu0
    %v3340 = vadd.f32 0.0, %v3339
    %3341 = vmatmul.f32.gmra.mxu0 %v2253
    %v3342 = vpop.f32.mrf.mxu0
    %v3343 = vadd.f32 0.0, %v3342
    %3344 = vmatmul.f32.gmra.mxu0 %v3135
    %v3345 = vpop.f32.mrf.mxu0
    %v3346 = vadd.f32 0.0, %v3345
    %3347 = vmatmul.f32.gmra.mxu0 %v3137
    %v3348 = vpop.f32.mrf.mxu0
    %v3349 = vadd.f32 0.0, %v3348
    %3350 = vdwg.mxu0
    %v3351 = vadd.f32 %v3055, %v3160
    %v3352 = vadd.f32 %v3056, %v3163
    %v3353 = vadd.f32 %v3057, %v3166
    %v3354 = vadd.f32 %v3058, %v3169
    %v3355 = vadd.f32 %v3059, %v3172
    %v3356 = vadd.f32 %v3060, %v3175
    %v3357 = vadd.f32 %v3061, %v3178
    %v3358 = vadd.f32 %v3062, %v3181
    %v3359 = vadd.f32 %v3063, %v3184
    %v3360 = vadd.f32 %v3064, %v3187
    %v3361 = vadd.f32 %v3065, %v3190
    %v3362 = vadd.f32 %v3066, %v3193
    %v3363 = vadd.f32 %v3067, %v3196
    %v3364 = vadd.f32 %v3068, %v3199
    %v3365 = vadd.f32 %v3069, %v3202
    %v3366 = vadd.f32 %v3070, %v3205
    %v3367 = vadd.f32 %v3071, %v3208
    %v3368 = vadd.f32 %v3072, %v3211
    %v3369 = vadd.f32 %v3073, %v3214
    %v3370 = vadd.f32 %v3074, %v3217
    %v3371 = vadd.f32 %v3075, %v3220
    %v3372 = vadd.f32 %v3076, %v3223
    %v3373 = vadd.f32 %v3077, %v3226
    %v3374 = vadd.f32 %v3078, %v3229
    %v3375 = vadd.f32 %v3079, %v3232
    %v3376 = vadd.f32 %v3080, %v3235
    %v3377 = vadd.f32 %v3081, %v3238
    %v3378 = vadd.f32 %v3082, %v3241
    %v3379 = vadd.f32 %v3083, %v3244
    %v3380 = vadd.f32 %v3084, %v3247
    %v3381 = vadd.f32 %v3085, %v3250
    %v3382 = vadd.f32 %v3086, %v3253
    %v3383 = vadd.f32 %v3087, %v3256
    %v3384 = vadd.f32 %v3088, %v3259
    %v3385 = vadd.f32 %v3089, %v3262
    %v3386 = vadd.f32 %v3090, %v3265
    %v3387 = vadd.f32 %v3091, %v3268
    %v3388 = vadd.f32 %v3092, %v3271
    %v3389 = vadd.f32 %v3093, %v3274
    %v3390 = vadd.f32 %v3094, %v3277
    %v3391 = vadd.f32 %v3095, %v3280
    %v3392 = vadd.f32 %v3096, %v3283
    %v3393 = vadd.f32 %v3097, %v3286
    %v3394 = vadd.f32 %v3098, %v3289
    %v3395 = vadd.f32 %v3099, %v3292
    %v3396 = vadd.f32 %v3100, %v3295
    %v3397 = vadd.f32 %v3101, %v3298
    %v3398 = vadd.f32 %v3102, %v3301
    %v3399 = vadd.f32 %v3103, %v3304
    %v3400 = vadd.f32 %v3104, %v3307
    %v3401 = vadd.f32 %v3105, %v3310
    %v3402 = vadd.f32 %v3106, %v3313
    %v3403 = vadd.f32 %v3107, %v3316
    %v3404 = vadd.f32 %v3108, %v3319
    %v3405 = vadd.f32 %v3109, %v3322
    %v3406 = vadd.f32 %v3110, %v3325
    %v3407 = vadd.f32 %v3111, %v3328
    %v3408 = vadd.f32 %v3112, %v3331
    %v3409 = vadd.f32 %v3113, %v3334
    %v3410 = vadd.f32 %v3114, %v3337
    %v3411 = vadd.f32 %v3115, %v3340
    %v3412 = vadd.f32 %v3116, %v3343
    %v3413 = vadd.f32 %v3117, %v3346
    %v3414 = vadd.f32 %v3118, %v3349
    %v3415 = vld [vmem:[%s2] sm:$0x1]
    %v3417 = vperm.slane %v3415, 0
    %v3419 = vadd.f32 %v3351, %v3417
    %v3420 = vadd.f32 %v3352, %v3417
    %v3421 = vadd.f32 %v3353, %v3417
    %v3422 = vadd.f32 %v3354, %v3417
    %v3423 = vadd.f32 %v3355, %v3417
    %v3424 = vadd.f32 %v3356, %v3417
    %v3425 = vadd.f32 %v3357, %v3417
    %v3426 = vadd.f32 %v3358, %v3417
    %v3427 = vadd.f32 %v3359, %v3417
    %v3428 = vadd.f32 %v3360, %v3417
    %v3429 = vadd.f32 %v3361, %v3417
    %v3430 = vadd.f32 %v3362, %v3417
    %v3431 = vadd.f32 %v3363, %v3417
    %v3432 = vadd.f32 %v3364, %v3417
    %v3433 = vadd.f32 %v3365, %v3417
    %v3434 = vadd.f32 %v3366, %v3417
    %v3435 = vadd.f32 %v3367, %v3417
    %v3436 = vadd.f32 %v3368, %v3417
    %v3437 = vadd.f32 %v3369, %v3417
    %v3438 = vadd.f32 %v3370, %v3417
    %v3439 = vadd.f32 %v3371, %v3417
    %v3440 = vadd.f32 %v3372, %v3417
    %v3441 = vadd.f32 %v3373, %v3417
    %v3442 = vadd.f32 %v3374, %v3417
    %v3443 = vadd.f32 %v3375, %v3417
    %v3444 = vadd.f32 %v3376, %v3417
    %v3445 = vadd.f32 %v3377, %v3417
    %v3446 = vadd.f32 %v3378, %v3417
    %v3447 = vadd.f32 %v3379, %v3417
    %v3448 = vadd.f32 %v3380, %v3417
    %v3449 = vadd.f32 %v3381, %v3417
    %v3450 = vadd.f32 %v3382, %v3417
    %v3451 = vadd.f32 %v3383, %v3417
    %v3452 = vadd.f32 %v3384, %v3417
    %v3453 = vadd.f32 %v3385, %v3417
    %v3454 = vadd.f32 %v3386, %v3417
    %v3455 = vadd.f32 %v3387, %v3417
    %v3456 = vadd.f32 %v3388, %v3417
    %v3457 = vadd.f32 %v3389, %v3417
    %v3458 = vadd.f32 %v3390, %v3417
    %v3459 = vadd.f32 %v3391, %v3417
    %v3460 = vadd.f32 %v3392, %v3417
    %v3461 = vadd.f32 %v3393, %v3417
    %v3462 = vadd.f32 %v3394, %v3417
    %v3463 = vadd.f32 %v3395, %v3417
    %v3464 = vadd.f32 %v3396, %v3417
    %v3465 = vadd.f32 %v3397, %v3417
    %v3466 = vadd.f32 %v3398, %v3417
    %v3467 = vadd.f32 %v3399, %v3417
    %v3468 = vadd.f32 %v3400, %v3417
    %v3469 = vadd.f32 %v3401, %v3417
    %v3470 = vadd.f32 %v3402, %v3417
    %v3471 = vadd.f32 %v3403, %v3417
    %v3472 = vadd.f32 %v3404, %v3417
    %v3473 = vadd.f32 %v3405, %v3417
    %v3474 = vadd.f32 %v3406, %v3417
    %v3475 = vadd.f32 %v3407, %v3417
    %v3476 = vadd.f32 %v3408, %v3417
    %v3477 = vadd.f32 %v3409, %v3417
    %v3478 = vadd.f32 %v3410, %v3417
    %v3479 = vadd.f32 %v3411, %v3417
    %v3480 = vadd.f32 %v3412, %v3417
    %v3481 = vadd.f32 %v3413, %v3417
    %v3482 = vadd.f32 %v3414, %v3417
    %v3483 = vmax.f32 %v3419, 0.0
    %v3484 = vmax.f32 %v3420, 0.0
    %v3485 = vmax.f32 %v3421, 0.0
    %v3486 = vmax.f32 %v3422, 0.0
    %v3487 = vmax.f32 %v3423, 0.0
    %v3488 = vmax.f32 %v3424, 0.0
    %v3489 = vmax.f32 %v3425, 0.0
    %v3490 = vmax.f32 %v3426, 0.0
    %v3491 = vmax.f32 %v3427, 0.0
    %v3492 = vmax.f32 %v3428, 0.0
    %v3493 = vmax.f32 %v3429, 0.0
    %v3494 = vmax.f32 %v3430, 0.0
    %v3495 = vmax.f32 %v3431, 0.0
    %v3496 = vmax.f32 %v3432, 0.0
    %v3497 = vmax.f32 %v3433, 0.0
    %v3498 = vmax.f32 %v3434, 0.0
    %v3499 = vmax.f32 %v3435, 0.0
    %v3500 = vmax.f32 %v3436, 0.0
    %v3501 = vmax.f32 %v3437, 0.0
    %v3502 = vmax.f32 %v3438, 0.0
    %v3503 = vmax.f32 %v3439, 0.0
    %v3504 = vmax.f32 %v3440, 0.0
    %v3505 = vmax.f32 %v3441, 0.0
    %v3506 = vmax.f32 %v3442, 0.0
    %v3507 = vmax.f32 %v3443, 0.0
    %v3508 = vmax.f32 %v3444, 0.0
    %v3509 = vmax.f32 %v3445, 0.0
    %v3510 = vmax.f32 %v3446, 0.0
    %v3511 = vmax.f32 %v3447, 0.0
    %v3512 = vmax.f32 %v3448, 0.0
    %v3513 = vmax.f32 %v3449, 0.0
    %v3514 = vmax.f32 %v3450, 0.0
    %v3515 = vmax.f32 %v3451, 0.0
    %v3516 = vmax.f32 %v3452, 0.0
    %v3517 = vmax.f32 %v3453, 0.0
    %v3518 = vmax.f32 %v3454, 0.0
    %v3519 = vmax.f32 %v3455, 0.0
    %v3520 = vmax.f32 %v3456, 0.0
    %v3521 = vmax.f32 %v3457, 0.0
    %v3522 = vmax.f32 %v3458, 0.0
    %v3523 = vmax.f32 %v3459, 0.0
    %v3524 = vmax.f32 %v3460, 0.0
    %v3525 = vmax.f32 %v3461, 0.0
    %v3526 = vmax.f32 %v3462, 0.0
    %v3527 = vmax.f32 %v3463, 0.0
    %v3528 = vmax.f32 %v3464, 0.0
    %v3529 = vmax.f32 %v3465, 0.0
    %v3530 = vmax.f32 %v3466, 0.0
    %v3531 = vmax.f32 %v3467, 0.0
    %v3532 = vmax.f32 %v3468, 0.0
    %v3533 = vmax.f32 %v3469, 0.0
    %v3534 = vmax.f32 %v3470, 0.0
    %v3535 = vmax.f32 %v3471, 0.0
    %v3536 = vmax.f32 %v3472, 0.0
    %v3537 = vmax.f32 %v3473, 0.0
    %v3538 = vmax.f32 %v3474, 0.0
    %v3539 = vmax.f32 %v3475, 0.0
    %v3540 = vmax.f32 %v3476, 0.0
    %v3541 = vmax.f32 %v3477, 0.0
    %v3542 = vmax.f32 %v3478, 0.0
    %v3543 = vmax.f32 %v3479, 0.0
    %v3544 = vmax.f32 %v3480, 0.0
    %v3545 = vmax.f32 %v3481, 0.0
    %v3546 = vmax.f32 %v3482, 0.0
    %v3547 = vld [vmem:[%s3] sm:$0xff]
    %3549 = vst [vmem:[#allocation1] ss:$4 sm:$0xff] %v3547
    %v3550 = vld.sshfl [vmem:[#allocation1] sm:$0xff pattern:$0x73625140]
    %v3551 = vld.sshfl [vmem:[#allocation1 + $0x8] sm:$0xff pattern:$0x73625140]
    %v3552 = vld.sshfl [vmem:[#allocation1 + $0x10] sm:$0xff pattern:$0x73625140]
    %v3553 = vld.sshfl [vmem:[#allocation1 + $0x18] sm:$0xff pattern:$0x73625140]
    %3558 = vmatpush.msra.mxu0 %v3498
    %3559 = vmatpush.msra.mxu0 %v3497
    %3560 = vmatpush.msra.mxu0 %v3496
    %3561 = vmatpush.msra.mxu0 %v3495
    %3562 = vmatpush.msra.mxu0 %v3494
    %3563 = vmatpush.msra.mxu0 %v3493
    %3564 = vmatpush.msra.mxu0 %v3492
    %3565 = vmatpush.msra.mxu0 %v3491
    %3566 = vmatpush.msra.mxu0 %v3490
    %3567 = vmatpush.msra.mxu0 %v3489
    %3568 = vmatpush.msra.mxu0 %v3488
    %3569 = vmatpush.msra.mxu0 %v3487
    %3570 = vmatpush.msra.mxu0 %v3486
    %3571 = vmatpush.msra.mxu0 %v3485
    %3572 = vmatpush.msra.mxu0 %v3484
    %3573 = vmatpush.msra.mxu0 %v3483
    %3574 = vmatmul.f32.gmra.mxu0 %v3550
    %v3575 = vpop.f32.mrf.mxu0
    %v3576 = vadd.f32 0.0, %v3575
    %3577 = vdwg.mxu0
    %3578 = vmatpush.msra.mxu0 %v3514
    %3579 = vmatpush.msra.mxu0 %v3513
    %3580 = vmatpush.msra.mxu0 %v3512
    %3581 = vmatpush.msra.mxu0 %v3511
    %3582 = vmatpush.msra.mxu0 %v3510
    %3583 = vmatpush.msra.mxu0 %v3509
    %3584 = vmatpush.msra.mxu0 %v3508
    %3585 = vmatpush.msra.mxu0 %v3507
    %3586 = vmatpush.msra.mxu0 %v3506
    %3587 = vmatpush.msra.mxu0 %v3505
    %3588 = vmatpush.msra.mxu0 %v3504
    %3589 = vmatpush.msra.mxu0 %v3503
    %3590 = vmatpush.msra.mxu0 %v3502
    %3591 = vmatpush.msra.mxu0 %v3501
    %3592 = vmatpush.msra.mxu0 %v3500
    %3593 = vmatpush.msra.mxu0 %v3499
    %3594 = vmatmul.f32.gmra.mxu0 %v3551
    %v3595 = vpop.f32.mrf.mxu0
    %v3596 = vadd.f32 %v3576, %v3595
    %3597 = vdwg.mxu0
    %3598 = vmatpush.msra.mxu0 %v3530
    %3599 = vmatpush.msra.mxu0 %v3529
    %3600 = vmatpush.msra.mxu0 %v3528
    %3601 = vmatpush.msra.mxu0 %v3527
    %3602 = vmatpush.msra.mxu0 %v3526
    %3603 = vmatpush.msra.mxu0 %v3525
    %3604 = vmatpush.msra.mxu0 %v3524
    %3605 = vmatpush.msra.mxu0 %v3523
    %3606 = vmatpush.msra.mxu0 %v3522
    %3607 = vmatpush.msra.mxu0 %v3521
    %3608 = vmatpush.msra.mxu0 %v3520
    %3609 = vmatpush.msra.mxu0 %v3519
    %3610 = vmatpush.msra.mxu0 %v3518
    %3611 = vmatpush.msra.mxu0 %v3517
    %3612 = vmatpush.msra.mxu0 %v3516
    %3613 = vmatpush.msra.mxu0 %v3515
    %3614 = vmatmul.f32.gmra.mxu0 %v3552
    %v3615 = vpop.f32.mrf.mxu0
    %v3616 = vadd.f32 %v3596, %v3615
    %3617 = vdwg.mxu0
    %3618 = vmatpush.msra.mxu0 %v3546
    %3619 = vmatpush.msra.mxu0 %v3545
    %3620 = vmatpush.msra.mxu0 %v3544
    %3621 = vmatpush.msra.mxu0 %v3543
    %3622 = vmatpush.msra.mxu0 %v3542
    %3623 = vmatpush.msra.mxu0 %v3541
    %3624 = vmatpush.msra.mxu0 %v3540
    %3625 = vmatpush.msra.mxu0 %v3539
    %3626 = vmatpush.msra.mxu0 %v3538
    %3627 = vmatpush.msra.mxu0 %v3537
    %3628 = vmatpush.msra.mxu0 %v3536
    %3629 = vmatpush.msra.mxu0 %v3535
    %3630 = vmatpush.msra.mxu0 %v3534
    %3631 = vmatpush.msra.mxu0 %v3533
    %3632 = vmatpush.msra.mxu0 %v3532
    %3633 = vmatpush.msra.mxu0 %v3531
    %3634 = vmatmul.f32.gmra.mxu0 %v3553
    %v3635 = vpop.f32.mrf.mxu0
    %v3636 = vadd.f32 %v3616, %v3635
    %3637 = vdwg.mxu0
    %v3638 = vld [vmem:[%s4] sm:$0xff]
    %v3639 = vld [vmem:[%s4 + $0x8] sm:$0xff]
    %v3640 = vld [vmem:[%s4 + $0x10] sm:$0xff]
    %v3641 = vld [vmem:[%s4 + $0x18] sm:$0xff]
    %v3642 = vld [vmem:[%s4 + $0x20] sm:$0xff]
    %v3643 = vld [vmem:[%s4 + $0x28] sm:$0xff]
    %v3644 = vld [vmem:[%s4 + $0x30] sm:$0xff]
    %v3645 = vld [vmem:[%s4 + $0x38] sm:$0xff]
    %v3646 = vld [vmem:[%s4 + $0x40] sm:$0xff]
    %v3647 = vld [vmem:[%s4 + $0x48] sm:$0xff]
    %v3648 = vld [vmem:[%s4 + $0x50] sm:$0xff]
    %v3649 = vld [vmem:[%s4 + $0x58] sm:$0xff]
    %v3650 = vld [vmem:[%s4 + $0x60] sm:$0xff]
    %v3651 = vld [vmem:[%s4 + $0x68] sm:$0xff]
    %v3652 = vld [vmem:[%s4 + $0x70] sm:$0xff]
    %v3653 = vld [vmem:[%s4 + $0x78] sm:$0xff]
    %v3654 = vld [vmem:[%s5] sm:$0x1]
    %v3656 = vperm.slane %v3654, 0
    %3658 = vmatpush.msra.mxu0 %v3653
    %3659 = vmatpush.msra.mxu0 %v3652
    %3660 = vmatpush.msra.mxu0 %v3651
    %3661 = vmatpush.msra.mxu0 %v3650
    %3662 = vmatpush.msra.mxu0 %v3649
    %3663 = vmatpush.msra.mxu0 %v3648
    %3664 = vmatpush.msra.mxu0 %v3647
    %3665 = vmatpush.msra.mxu0 %v3646
    %3666 = vmatpush.msra.mxu0 %v3645
    %3667 = vmatpush.msra.mxu0 %v3644
    %3668 = vmatpush.msra.mxu0 %v3643
    %3669 = vmatpush.msra.mxu0 %v3642
    %3670 = vmatpush.msra.mxu0 %v3641
    %3671 = vmatpush.msra.mxu0 %v3640
    %3672 = vmatpush.msra.mxu0 %v3639
    %3673 = vmatpush.msra.mxu0 %v3638
    %3674 = vmatmul.f32.gmra.mxu0 %v3636
    %v3675 = vpop.f32.mrf.mxu0
    %v3676 = vadd.f32 %v3656, %v3675
    %3677 = vdwg.mxu0
    %v3678 = vld [vmem:[%s6] sm:$0xff]
    %v3679 = vld [vmem:[%s6 + $0x8] sm:$0xff]
    %v3680 = vld [vmem:[%s6 + $0x10] sm:$0xff]
    %v3681 = vld [vmem:[%s6 + $0x18] sm:$0xff]
    %v3682 = vld [vmem:[%s6 + $0x20] sm:$0xff]
    %v3683 = vld [vmem:[%s6 + $0x28] sm:$0xff]
    %v3684 = vld [vmem:[%s6 + $0x30] sm:$0xff]
    %v3685 = vld [vmem:[%s6 + $0x38] sm:$0xff]
    %v3686 = vld [vmem:[%s6 + $0x40] sm:$0xff]
    %v3687 = vld [vmem:[%s6 + $0x48] sm:$0xff]
    %v3688 = vld [vmem:[%s6 + $0x50] sm:$0xff]
    %v3689 = vld [vmem:[%s6 + $0x58] sm:$0xff]
    %v3690 = vld [vmem:[%s6 + $0x60] sm:$0xff]
    %v3691 = vld [vmem:[%s6 + $0x68] sm:$0xff]
    %v3692 = vld [vmem:[%s6 + $0x70] sm:$0xff]
    %v3693 = vld [vmem:[%s6 + $0x78] sm:$0xff]
    %v3694 = vld [vmem:[%s7] sm:$0x1]
    %v3696 = vperm.slane %v3694, 0
    %3698 = vmatpush.msra.mxu0 %v3693
    %3699 = vmatpush.msra.mxu0 %v3692
    %3700 = vmatpush.msra.mxu0 %v3691
    %3701 = vmatpush.msra.mxu0 %v3690
    %3702 = vmatpush.msra.mxu0 %v3689
    %3703 = vmatpush.msra.mxu0 %v3688
    %3704 = vmatpush.msra.mxu0 %v3687
    %3705 = vmatpush.msra.mxu0 %v3686
    %3706 = vmatpush.msra.mxu0 %v3685
    %3707 = vmatpush.msra.mxu0 %v3684
    %3708 = vmatpush.msra.mxu0 %v3683
    %3709 = vmatpush.msra.mxu0 %v3682
    %3710 = vmatpush.msra.mxu0 %v3681
    %3711 = vmatpush.msra.mxu0 %v3680
    %3712 = vmatpush.msra.mxu0 %v3679
    %3713 = vmatpush.msra.mxu0 %v3678
    %3714 = vmatmul.f32.gmra.mxu0 %v3676
    %v3715 = vpop.f32.mrf.mxu0
    %v3716 = vadd.f32 %v3696, %v3715
    %3717 = vdwg.mxu0
    %3718 = vst [vmem:[#allocation2] sm:$0x3] %v3716
    // Predicated region
    $region34: #{unimodel_forward.1} parent=1 // pred_check
      _
    $region35: #{unimodel_forward.1} parent=1 // pred_check_branch
      %3720 = sbr.rel (0) target = $region37
    $region36: #{unimodel_forward.1} parent=1 // pred_region
      %3722 = vsyncadd [#allocation3], 0
      %s3724 = sshll.u32 [#allocation2], 4
      %s3725 = int_to_ptr.vmem [resolvable:$true] %s3724
      %s3726 = sshll.u32 %s8, 4
      %s3727 = int_to_ptr.hbm [resolvable:$true] %s3726
      %3729 = dma.vmem_to_hbm [thread:$0]  %s3725, 32, %s3727, [#allocation3]
    $region37: #{unimodel_forward.1} parent=1 // pred_fallthru
      _
    // Predicated region
    $region38: #{unimodel_forward.1} parent=1 // pred_check
      _
    $region39: #{unimodel_forward.1} parent=1 // pred_check_branch
      %3731 = sbr.rel (0) target = $region41
    $region40: #{unimodel_forward.1} parent=1 // pred_region
      %3733 = dma.done [#allocation3], 32
    $region41: #{unimodel_forward.1} parent=1 // pred_fallthru
      _
    %3734 = vsyncpa [#allocation3], 1

</llo_original>
